<compile_context>
chip_gen: v7x
topology: tpu7x:2x2x1
jax: 0.10.0
libtpu: 0.0.40
codegen_flags: <defaults>
</compile_context>

<pallas_src>
from functools import partial

import jax
import jax.numpy as jnp
from jax.experimental import pallas as pl
from jax.experimental.pallas import tpu as pltpu

CIN = 120           # module inchannel
CIN_PAD = 128       # padded to a full lane tile
COUT = 128          # module channels
EPS = 1e-5          # BatchNorm1d default eps
BRANCHES = (("k3", 3, 7), ("k5", 5, 5), ("k7", 7, 3))   # (name, K_conv1, K_conv2)
TOTAL_SHRINK = 8    # every branch shrinks the time axis by 8 (valid convs)

ROWS_BUDGET = 2048              # max flat rows per grid step (keeps working set in VMEM)
VMEM_LIMIT = 48 * 1024 * 1024   # scoped VMEM limit (headroom under v7x's 64 MiB)


# --------------------------------------------------------------------------------------
# Pallas kernel
# --------------------------------------------------------------------------------------
def encoder2_kernel(nb, stride, out_len,
                    x_ref, wg0_ref, wg1_ref, wg2_ref,
                    sc1_3, sh1_3, w2_3, sc2_3, sh2_3,
                    sc1_5, sh1_5, w2_5, sc2_5, sh2_5,
                    sc1_7, sh1_7, w2_7, sc2_7, sh2_7,
                    o_ref):
    """x_ref: (nb*stride, 128) bf16 flat rows (time minor within each item, channels on
    lanes).  o_ref: (nb, out_len, 384) f32."""
    rows = nb * stride
    m1 = rows - 6           # conv1 rows computed (shared across branches)
    m2 = rows - 12          # conv2 rows computed (shared across branches)

    x = x_ref[...]          # (rows, 128) bf16

    # ---- conv1: fused across branches (N) and tap groups (K) -> 3 MXU matmuls ----
    xg0 = jnp.concatenate([x[0:m1], x[1:1 + m1], x[2:2 + m1]], axis=-1)   # (m1, 384)
    r0 = jnp.dot(xg0, wg0_ref[...], preferred_element_type=jnp.float32)   # (m1, 384)
    xg1 = jnp.concatenate([x[3:3 + m1], x[4:4 + m1]], axis=-1)            # (m1, 256)
    r1 = jnp.dot(xg1, wg1_ref[...], preferred_element_type=jnp.float32)   # (m1, 256)
    xg2 = jnp.concatenate([x[5:5 + m1], x[6:6 + m1]], axis=-1)            # (m1, 256)
    r2 = jnp.dot(xg2, wg2_ref[...], preferred_element_type=jnp.float32)   # (m1, 128)

    acc1 = (
        r0[:, 0:COUT],                                          # k3: taps 0..2
        r0[:, COUT:2 * COUT] + r1[:, 0:COUT],                   # k5: taps 0..4
        r0[:, 2 * COUT:3 * COUT] + r1[:, COUT:2 * COUT] + r2,   # k7: taps 0..6
    )
    branch_params = (
        (sc1_3, sh1_3, w2_3, sc2_3, sh2_3, 7),
        (sc1_5, sh1_5, w2_5, sc2_5, sh2_5, 5),
        (sc1_7, sh1_7, w2_7, sc2_7, sh2_7, 3),
    )

    for b, (sc1, sh1, w2, sc2, sh2, k2) in enumerate(branch_params):
        # fused conv-bias + BatchNorm(eval) + ReLU, then bf16 for the second MXU pass
        y1 = jnp.maximum(acc1[b] * sc1[...] + sh1[...], 0.0).astype(jnp.bfloat16)
        # ---- conv2: taps stacked on the contraction dim -> single wide-K matmul ----
        yt = jnp.concatenate([y1[k:k + m2] for k in range(k2)], axis=-1)   # (m2, k2*128)
        a2 = jnp.dot(yt, w2[...], preferred_element_type=jnp.float32)      # (m2, 128)
        y2 = jnp.maximum(a2 * sc2[...] + sh2[...], 0.0)                    # (m2, 128) f32
        # store the valid rows of each item directly into this branch's lane slot
        for j in range(nb):
            o_ref[j, :, b * COUT:(b + 1) * COUT] = \
                y2[j * stride:j * stride + out_len, :]


# --------------------------------------------------------------------------------------
# Host-side parameter preparation (BN folding, tap stacking/fusion, channel padding)
# --------------------------------------------------------------------------------------
def _round_up(n, m):
    return (n + m - 1) // m * m


def _fold_bn(bias, bn):
    scale = (bn["gamma"] / jnp.sqrt(bn["var"] + EPS)).astype(jnp.float32)
    shift = ((bias - bn["mean"]) * scale + bn["beta"]).astype(jnp.float32)
    return scale.reshape(1, COUT), shift.reshape(1, COUT)


def _tap(w, k, cin_pad):
    # torch (Cout, Cin, K) conv weight, tap k -> (cin_pad, Cout) matmul weight
    m = jnp.transpose(w[:, :, k]).astype(jnp.float32)
    pad = cin_pad - m.shape[0]
    if pad:
        m = jnp.pad(m, ((0, pad), (0, 0)))
    return m


def prep_kernel_params(params):
    # conv1: block matrix [tap-row x branch-col], split into the 3 in-kernel tap groups
    def group(taps, names):
        rows = [jnp.concatenate([_tap(params[n]["w1"], k, CIN_PAD) for n in names],
                                axis=1) for k in taps]
        return jnp.concatenate(rows, axis=0).astype(jnp.bfloat16)

    wg0 = group((0, 1, 2), ("k3", "k5", "k7"))   # (384, 384)
    wg1 = group((3, 4), ("k5", "k7"))            # (256, 256)
    wg2 = group((5, 6), ("k7",))                 # (256, 128)

    flat = [wg0, wg1, wg2]
    for name, _, k2 in BRANCHES:
        p = params[name]
        s1, h1 = _fold_bn(p["b1"], p["bn1"])
        s2, h2 = _fold_bn(p["b2"], p["bn2"])
        w2s = jnp.concatenate([_tap(p["w2"], k, COUT) for k in range(k2)],
                              axis=0).astype(jnp.bfloat16)   # (k2*128, 128)
        flat += [s1, h1, w2s, s2, h2]
    return flat


def _pick_nb(batch, stride, rows_budget=ROWS_BUDGET):
    """Largest divisor of batch that fits the row budget while keeping >=2 grid steps."""
    divisors = [d for d in range(1, batch + 1) if batch % d == 0]
    fits = [d for d in divisors if d * stride <= rows_budget] or [1]
    multi_step = [d for d in fits if batch // d >= 2]
    return max(multi_step) if multi_step else max(fits)


# --------------------------------------------------------------------------------------
# Wrapper
# --------------------------------------------------------------------------------------
@partial(jax.jit, static_argnames=("nb",))
def encoder2_forward(x, params, nb=None):
    """x: (B, 120, L) float32 (torch layout). Returns (B, 384, L-8) float32."""
    B, cin, L = x.shape
    assert cin == CIN
    out_len = L - TOTAL_SHRINK
    assert out_len > 0, "need L > 8"

    # per-item row stride: multiple of 8 and >= L+4 so the branch-fused conv1 stays
    # inside the block and every in-kernel slice / store starts sublane-aligned.
    stride = _round_up(L + 4, 8)
    if nb is None:
        nb = _pick_nb(B, stride)
    assert B % nb == 0

    # (B, Cin, L) -> (B, stride, 128) bf16 -> flat rows (B*stride, 128)
    xt = jnp.transpose(x, (0, 2, 1)).astype(jnp.bfloat16)
    xt = jnp.pad(xt, ((0, 0), (0, stride - L), (0, CIN_PAD - CIN)))
    xflat = xt.reshape(B * stride, CIN_PAD)

    kparams = prep_kernel_params(params)

    in_specs = [pl.BlockSpec((nb * stride, CIN_PAD), lambda i: (i, 0))]
    for p in kparams:   # constant weights: constant index_map -> resident across steps
        in_specs.append(pl.BlockSpec(p.shape, lambda i: (0, 0)))

    out = pl.pallas_call(
        partial(encoder2_kernel, nb, stride, out_len),
        out_shape=jax.ShapeDtypeStruct((B, out_len, 3 * COUT), jnp.float32),
        grid_spec=pltpu.PrefetchScalarGridSpec(
            num_scalar_prefetch=0,
            grid=(B // nb,),
            in_specs=in_specs,
            out_specs=pl.BlockSpec((nb, out_len, 3 * COUT), lambda i: (i, 0, 0)),
        ),
        compiler_params=pltpu.CompilerParams(
            dimension_semantics=("parallel",),
            vmem_limit_bytes=VMEM_LIMIT,
        ),
    )(xflat, *kparams)

    # back to torch output layout (B, 384, L-8).
    # TODO(synk): downstream consumers that accept channels-last could skip this.
    return jnp.transpose(out, (0, 2, 1))


# --------------------------------------------------------------------------------------
# Pure-JAX references (independent of the kernel's flat-batch / fusion / BN-fold tricks)
# --------------------------------------------------------------------------------------
def _conv1d_ref(x, w, b, matmul_dtype):
    # x: (B, Cin, L), w: (Cout, Cin, K), b: (Cout,) -> (B, Cout, L-K+1); valid cross-corr
    K = w.shape[2]
    L_out = x.shape[2] - K + 1
    xc = x.astype(matmul_dtype)
    wc = w.astype(matmul_dtype)
    y = jnp.zeros((x.shape[0], w.shape[0], L_out), jnp.float32)
    for k in range(K):
        y = y + jnp.einsum("bcl,oc->bol", xc[:, :, k:k + L_out], wc[:, :, k],
                           preferred_element_type=jnp.float32)
    return y + b[None, :, None]


def _bn_eval_ref(y, bn):
    scale = bn["gamma"] / jnp.sqrt(bn["var"] + EPS)
    return (y - bn["mean"][None, :, None]) * scale[None, :, None] + bn["beta"][None, :, None]


def reference_forward(x, params, matmul_dtype=jnp.float32):
    def branch(xi, p):
        y = _conv1d_ref(xi, p["w1"], p["b1"], matmul_dtype)
        y = jnp.maximum(_bn_eval_ref(y, p["bn1"]), 0.0)
        y = _conv1d_ref(y, p["w2"], p["b2"], matmul_dtype)
        y = jnp.maximum(_bn_eval_ref(y, p["bn2"]), 0.0)
        return y
    x = x.astype(jnp.float32)
    return jnp.concatenate([branch(x, params[n]) for n, _, _ in BRANCHES], axis=1)


# --------------------------------------------------------------------------------------
# Synthetic parameter init (mirrors the PyTorch module structure)
# --------------------------------------------------------------------------------------
def init_params(key, inchannel=CIN, channels=COUT):
    f32 = jnp.float32
    params = {}
    bkeys = jax.random.split(key, len(BRANCHES))
    for (name, K1, K2), bk in zip(BRANCHES, bkeys):
        ks = jax.random.split(bk, 6)

        def bn(k):
            kg, kb, km, kv = jax.random.split(k, 4)
            return dict(
                gamma=1.0 + 0.1 * jax.random.normal(kg, (channels,), f32),
                beta=0.1 * jax.random.normal(kb, (channels,), f32),
                mean=0.1 * jax.random.normal(km, (channels,), f32),
                var=jax.random.uniform(kv, (channels,), f32, 0.5, 1.5),
            )

        params[name] = dict(
            w1=0.05 * jax.random.normal(ks[0], (channels, inchannel, K1), f32),
            b1=0.05 * jax.random.normal(ks[1], (channels,), f32),
            bn1=bn(ks[2]),
            w2=0.05 * jax.random.normal(ks[3], (channels, channels, K2), f32),
            b2=0.05 * jax.random.normal(ks[4], (channels,), f32),
            bn2=bn(ks[5]),
        )
    return params


if __name__ == "__main__":
    key = jax.random.PRNGKey(0)
    k_param, k_x = jax.random.split(key)
    params = init_params(k_param)

    B, L = 2, 32                                   # small test shapes; Cin fixed at 120
    x = jax.random.normal(k_x, (B, CIN, L), jnp.float32)

    out = jax.block_until_ready(encoder2_forward(x, params))
    assert out.shape == (B, 3 * COUT, L - TOTAL_SHRINK), out.shape

    # primary check: same-math reference (bf16 matmul operands, f32 accumulation)
    ref_bf16 = jax.block_until_ready(reference_forward(x, params, jnp.bfloat16))
    err_bf16 = float(jnp.max(jnp.abs(out - ref_bf16)))
    assert jnp.allclose(out, ref_bf16, atol=2e-2, rtol=2e-2), err_bf16

    # sanity check against the full-f32 reference (loose: covers bf16 operand rounding)
    ref_f32 = jax.block_until_ready(reference_forward(x, params, jnp.float32))
    err_f32 = float(jnp.max(jnp.abs(out - ref_f32)))
    assert jnp.allclose(out, ref_f32, atol=0.25, rtol=0.25), err_f32

    print("KERNEL_OK")
</pallas_src>

<mosaic_0001>
module attributes {stable_mosaic.version = 11 : i64} {
  func.func @encoder2_kernel(%arg0: i32, %arg1: memref<40x128xbf16, #tpu.memory_space<vmem>>, %arg2: memref<384x384xbf16, #tpu.memory_space<vmem>>, %arg3: memref<256x256xbf16, #tpu.memory_space<vmem>>, %arg4: memref<256x128xbf16, #tpu.memory_space<vmem>>, %arg5: memref<1x128xf32, #tpu.memory_space<vmem>>, %arg6: memref<1x128xf32, #tpu.memory_space<vmem>>, %arg7: memref<896x128xbf16, #tpu.memory_space<vmem>>, %arg8: memref<1x128xf32, #tpu.memory_space<vmem>>, %arg9: memref<1x128xf32, #tpu.memory_space<vmem>>, %arg10: memref<1x128xf32, #tpu.memory_space<vmem>>, %arg11: memref<1x128xf32, #tpu.memory_space<vmem>>, %arg12: memref<640x128xbf16, #tpu.memory_space<vmem>>, %arg13: memref<1x128xf32, #tpu.memory_space<vmem>>, %arg14: memref<1x128xf32, #tpu.memory_space<vmem>>, %arg15: memref<1x128xf32, #tpu.memory_space<vmem>>, %arg16: memref<1x128xf32, #tpu.memory_space<vmem>>, %arg17: memref<384x128xbf16, #tpu.memory_space<vmem>>, %arg18: memref<1x128xf32, #tpu.memory_space<vmem>>, %arg19: memref<1x128xf32, #tpu.memory_space<vmem>>, %arg20: memref<1x24x384xf32, #tpu.memory_space<vmem>>) attributes {dimension_semantics = [#tpu.dimension_semantics<parallel>], iteration_bounds = array<i64: 2>, scalar_prefetch = 0 : i64, scratch_operands = 0 : i64, tpu.core_type = #tpu.core_type<tc>, window_params = [{transform_indices = @transform_0, window_bounds = array<i64: 40, 128>}, {pipeline_mode = #tpu.pipeline_mode<synchronous>, transform_indices = @transform_1, window_bounds = array<i64: 384, 384>}, {pipeline_mode = #tpu.pipeline_mode<synchronous>, transform_indices = @transform_2, window_bounds = array<i64: 256, 256>}, {pipeline_mode = #tpu.pipeline_mode<synchronous>, transform_indices = @transform_3, window_bounds = array<i64: 256, 128>}, {pipeline_mode = #tpu.pipeline_mode<synchronous>, transform_indices = @transform_4, window_bounds = array<i64: 1, 128>}, {pipeline_mode = #tpu.pipeline_mode<synchronous>, transform_indices = @transform_5, window_bounds = array<i64: 1, 128>}, {pipeline_mode = #tpu.pipeline_mode<synchronous>, transform_indices = @transform_6, window_bounds = array<i64: 896, 128>}, {pipeline_mode = #tpu.pipeline_mode<synchronous>, transform_indices = @transform_7, window_bounds = array<i64: 1, 128>}, {pipeline_mode = #tpu.pipeline_mode<synchronous>, transform_indices = @transform_8, window_bounds = array<i64: 1, 128>}, {pipeline_mode = #tpu.pipeline_mode<synchronous>, transform_indices = @transform_9, window_bounds = array<i64: 1, 128>}, {pipeline_mode = #tpu.pipeline_mode<synchronous>, transform_indices = @transform_10, window_bounds = array<i64: 1, 128>}, {pipeline_mode = #tpu.pipeline_mode<synchronous>, transform_indices = @transform_11, window_bounds = array<i64: 640, 128>}, {pipeline_mode = #tpu.pipeline_mode<synchronous>, transform_indices = @transform_12, window_bounds = array<i64: 1, 128>}, {pipeline_mode = #tpu.pipeline_mode<synchronous>, transform_indices = @transform_13, window_bounds = array<i64: 1, 128>}, {pipeline_mode = #tpu.pipeline_mode<synchronous>, transform_indices = @transform_14, window_bounds = array<i64: 1, 128>}, {pipeline_mode = #tpu.pipeline_mode<synchronous>, transform_indices = @transform_15, window_bounds = array<i64: 1, 128>}, {pipeline_mode = #tpu.pipeline_mode<synchronous>, transform_indices = @transform_16, window_bounds = array<i64: 384, 128>}, {pipeline_mode = #tpu.pipeline_mode<synchronous>, transform_indices = @transform_17, window_bounds = array<i64: 1, 128>}, {pipeline_mode = #tpu.pipeline_mode<synchronous>, transform_indices = @transform_18, window_bounds = array<i64: 1, 128>}, {transform_indices = @transform_19, window_bounds = array<i64: 1, 24, 384>}]} {
    %c0 = arith.constant 0 : index
    %c0_0 = arith.constant 0 : index
    %0 = vector.load %arg1[%c0, %c0_0] : memref<40x128xbf16, #tpu.memory_space<vmem>>, vector<40x128xbf16>
    %1 = vector.extract_strided_slice %0 {offsets = [0, 0], sizes = [34, 128], strides = [1, 1]} : vector<40x128xbf16> to vector<34x128xbf16>
    %2 = vector.extract_strided_slice %0 {offsets = [1, 0], sizes = [34, 128], strides = [1, 1]} : vector<40x128xbf16> to vector<34x128xbf16>
    %3 = vector.extract_strided_slice %0 {offsets = [2, 0], sizes = [34, 128], strides = [1, 1]} : vector<40x128xbf16> to vector<34x128xbf16>
    %4 = tpu.concatenate %1, %2, %3 in 1 : vector<34x128xbf16>, vector<34x128xbf16>, vector<34x128xbf16> -> vector<34x384xbf16>
    %c0_1 = arith.constant 0 : index
    %c0_2 = arith.constant 0 : index
    %5 = vector.load %arg2[%c0_1, %c0_2] : memref<384x384xbf16, #tpu.memory_space<vmem>>, vector<384x384xbf16>
    %cst = arith.constant dense<0.000000e+00> : vector<34x384xf32>
    %6 = tpu.matmul %4, %5, %cst {dimension_numbers = #tpu.dot_dimension_numbers<[1], [0], [0], [1], [0, 0, 1, 1], [], []>} : vector<34x384xbf16>, vector<384x384xbf16>, vector<34x384xf32> -> vector<34x384xf32>
    %7 = vector.extract_strided_slice %0 {offsets = [3, 0], sizes = [34, 128], strides = [1, 1]} : vector<40x128xbf16> to vector<34x128xbf16>
    %8 = vector.extract_strided_slice %0 {offsets = [4, 0], sizes = [34, 128], strides = [1, 1]} : vector<40x128xbf16> to vector<34x128xbf16>
    %9 = tpu.concatenate %7, %8 in 1 : vector<34x128xbf16>, vector<34x128xbf16> -> vector<34x256xbf16>
    %c0_3 = arith.constant 0 : index
    %c0_4 = arith.constant 0 : index
    %10 = vector.load %arg3[%c0_3, %c0_4] : memref<256x256xbf16, #tpu.memory_space<vmem>>, vector<256x256xbf16>
    %cst_5 = arith.constant dense<0.000000e+00> : vector<34x256xf32>
    %11 = tpu.matmul %9, %10, %cst_5 {dimension_numbers = #tpu.dot_dimension_numbers<[1], [0], [0], [1], [0, 0, 1, 1], [], []>} : vector<34x256xbf16>, vector<256x256xbf16>, vector<34x256xf32> -> vector<34x256xf32>
    %12 = vector.extract_strided_slice %0 {offsets = [5, 0], sizes = [34, 128], strides = [1, 1]} : vector<40x128xbf16> to vector<34x128xbf16>
    %13 = vector.extract_strided_slice %0 {offsets = [6, 0], sizes = [34, 128], strides = [1, 1]} : vector<40x128xbf16> to vector<34x128xbf16>
    %14 = tpu.concatenate %12, %13 in 1 : vector<34x128xbf16>, vector<34x128xbf16> -> vector<34x256xbf16>
    %c0_6 = arith.constant 0 : index
    %c0_7 = arith.constant 0 : index
    %15 = vector.load %arg4[%c0_6, %c0_7] : memref<256x128xbf16, #tpu.memory_space<vmem>>, vector<256x128xbf16>
    %cst_8 = arith.constant dense<0.000000e+00> : vector<34x128xf32>
    %16 = tpu.matmul %14, %15, %cst_8 {dimension_numbers = #tpu.dot_dimension_numbers<[1], [0], [0], [1], [0, 0, 1, 1], [], []>} : vector<34x256xbf16>, vector<256x128xbf16>, vector<34x128xf32> -> vector<34x128xf32>
    %17 = vector.extract_strided_slice %6 {offsets = [0, 0], sizes = [34, 128], strides = [1, 1]} : vector<34x384xf32> to vector<34x128xf32>
    %18 = vector.extract_strided_slice %6 {offsets = [0, 128], sizes = [34, 128], strides = [1, 1]} : vector<34x384xf32> to vector<34x128xf32>
    %19 = vector.extract_strided_slice %11 {offsets = [0, 0], sizes = [34, 128], strides = [1, 1]} : vector<34x256xf32> to vector<34x128xf32>
    %20 = arith.addf %18, %19 : vector<34x128xf32>
    %21 = vector.extract_strided_slice %6 {offsets = [0, 256], sizes = [34, 128], strides = [1, 1]} : vector<34x384xf32> to vector<34x128xf32>
    %22 = vector.extract_strided_slice %11 {offsets = [0, 128], sizes = [34, 128], strides = [1, 1]} : vector<34x256xf32> to vector<34x128xf32>
    %23 = arith.addf %21, %22 : vector<34x128xf32>
    %24 = arith.addf %23, %16 : vector<34x128xf32>
    %c0_9 = arith.constant 0 : index
    %c0_10 = arith.constant 0 : index
    %25 = vector.load %arg5[%c0_9, %c0_10] : memref<1x128xf32, #tpu.memory_space<vmem>>, vector<1x128xf32>
    %26 = vector.broadcast %25 : vector<1x128xf32> to vector<34x128xf32>
    %27 = arith.mulf %17, %26 : vector<34x128xf32>
    %c0_11 = arith.constant 0 : index
    %c0_12 = arith.constant 0 : index
    %28 = vector.load %arg6[%c0_11, %c0_12] : memref<1x128xf32, #tpu.memory_space<vmem>>, vector<1x128xf32>
    %29 = vector.broadcast %28 : vector<1x128xf32> to vector<34x128xf32>
    %30 = arith.addf %27, %29 : vector<34x128xf32>
    %cst_13 = arith.constant 0.000000e+00 : f32
    %31 = vector.broadcast %cst_13 : f32 to vector<34x128xf32>
    %32 = arith.maximumf %30, %31 : vector<34x128xf32>
    %33 = arith.truncf %32 : vector<34x128xf32> to vector<34x128xbf16>
    %34 = vector.extract_strided_slice %33 {offsets = [0, 0], sizes = [28, 128], strides = [1, 1]} : vector<34x128xbf16> to vector<28x128xbf16>
    %35 = vector.extract_strided_slice %33 {offsets = [1, 0], sizes = [28, 128], strides = [1, 1]} : vector<34x128xbf16> to vector<28x128xbf16>
    %36 = vector.extract_strided_slice %33 {offsets = [2, 0], sizes = [28, 128], strides = [1, 1]} : vector<34x128xbf16> to vector<28x128xbf16>
    %37 = vector.extract_strided_slice %33 {offsets = [3, 0], sizes = [28, 128], strides = [1, 1]} : vector<34x128xbf16> to vector<28x128xbf16>
    %38 = vector.extract_strided_slice %33 {offsets = [4, 0], sizes = [28, 128], strides = [1, 1]} : vector<34x128xbf16> to vector<28x128xbf16>
    %39 = vector.extract_strided_slice %33 {offsets = [5, 0], sizes = [28, 128], strides = [1, 1]} : vector<34x128xbf16> to vector<28x128xbf16>
    %40 = vector.extract_strided_slice %33 {offsets = [6, 0], sizes = [28, 128], strides = [1, 1]} : vector<34x128xbf16> to vector<28x128xbf16>
    %41 = tpu.concatenate %34, %35, %36, %37, %38, %39, %40 in 1 : vector<28x128xbf16>, vector<28x128xbf16>, vector<28x128xbf16>, vector<28x128xbf16>, vector<28x128xbf16>, vector<28x128xbf16>, vector<28x128xbf16> -> vector<28x896xbf16>
    %c0_14 = arith.constant 0 : index
    %c0_15 = arith.constant 0 : index
    %42 = vector.load %arg7[%c0_14, %c0_15] : memref<896x128xbf16, #tpu.memory_space<vmem>>, vector<896x128xbf16>
    %cst_16 = arith.constant dense<0.000000e+00> : vector<28x128xf32>
    %43 = tpu.matmul %41, %42, %cst_16 {dimension_numbers = #tpu.dot_dimension_numbers<[1], [0], [0], [1], [0, 0, 1, 1], [], []>} : vector<28x896xbf16>, vector<896x128xbf16>, vector<28x128xf32> -> vector<28x128xf32>
    %c0_17 = arith.constant 0 : index
    %c0_18 = arith.constant 0 : index
    %44 = vector.load %arg8[%c0_17, %c0_18] : memref<1x128xf32, #tpu.memory_space<vmem>>, vector<1x128xf32>
    %45 = vector.broadcast %44 : vector<1x128xf32> to vector<28x128xf32>
    %46 = arith.mulf %43, %45 : vector<28x128xf32>
    %c0_19 = arith.constant 0 : index
    %c0_20 = arith.constant 0 : index
    %47 = vector.load %arg9[%c0_19, %c0_20] : memref<1x128xf32, #tpu.memory_space<vmem>>, vector<1x128xf32>
    %48 = vector.broadcast %47 : vector<1x128xf32> to vector<28x128xf32>
    %49 = arith.addf %46, %48 : vector<28x128xf32>
    %cst_21 = arith.constant 0.000000e+00 : f32
    %50 = vector.broadcast %cst_21 : f32 to vector<28x128xf32>
    %51 = arith.maximumf %49, %50 : vector<28x128xf32>
    %52 = vector.extract_strided_slice %51 {offsets = [0, 0], sizes = [24, 128], strides = [1, 1]} : vector<28x128xf32> to vector<24x128xf32>
    %c0_22 = arith.constant 0 : index
    %c0_23 = arith.constant 0 : index
    %c0_24 = arith.constant 0 : index
    %53 = vector.load %arg20[%c0_22, %c0_23, %c0_24] : memref<1x24x384xf32, #tpu.memory_space<vmem>>, vector<1x24x128xf32>
    %54 = vector.shape_cast %53 : vector<1x24x128xf32> to vector<24x128xf32>
    %55 = vector.shape_cast %52 : vector<24x128xf32> to vector<1x24x128xf32>
    tpu.vector_store %arg20[%c0_22, %c0_23, %c0_24], %55 {strides = array<i32>} : memref<1x24x384xf32, #tpu.memory_space<vmem>>, vector<1x24x128xf32>,
    %c0_25 = arith.constant 0 : index
    %c0_26 = arith.constant 0 : index
    %56 = vector.load %arg10[%c0_25, %c0_26] : memref<1x128xf32, #tpu.memory_space<vmem>>, vector<1x128xf32>
    %57 = vector.broadcast %56 : vector<1x128xf32> to vector<34x128xf32>
    %58 = arith.mulf %20, %57 : vector<34x128xf32>
    %c0_27 = arith.constant 0 : index
    %c0_28 = arith.constant 0 : index
    %59 = vector.load %arg11[%c0_27, %c0_28] : memref<1x128xf32, #tpu.memory_space<vmem>>, vector<1x128xf32>
    %60 = vector.broadcast %59 : vector<1x128xf32> to vector<34x128xf32>
    %61 = arith.addf %58, %60 : vector<34x128xf32>
    %cst_29 = arith.constant 0.000000e+00 : f32
    %62 = vector.broadcast %cst_29 : f32 to vector<34x128xf32>
    %63 = arith.maximumf %61, %62 : vector<34x128xf32>
    %64 = arith.truncf %63 : vector<34x128xf32> to vector<34x128xbf16>
    %65 = vector.extract_strided_slice %64 {offsets = [0, 0], sizes = [28, 128], strides = [1, 1]} : vector<34x128xbf16> to vector<28x128xbf16>
    %66 = vector.extract_strided_slice %64 {offsets = [1, 0], sizes = [28, 128], strides = [1, 1]} : vector<34x128xbf16> to vector<28x128xbf16>
    %67 = vector.extract_strided_slice %64 {offsets = [2, 0], sizes = [28, 128], strides = [1, 1]} : vector<34x128xbf16> to vector<28x128xbf16>
    %68 = vector.extract_strided_slice %64 {offsets = [3, 0], sizes = [28, 128], strides = [1, 1]} : vector<34x128xbf16> to vector<28x128xbf16>
    %69 = vector.extract_strided_slice %64 {offsets = [4, 0], sizes = [28, 128], strides = [1, 1]} : vector<34x128xbf16> to vector<28x128xbf16>
    %70 = tpu.concatenate %65, %66, %67, %68, %69 in 1 : vector<28x128xbf16>, vector<28x128xbf16>, vector<28x128xbf16>, vector<28x128xbf16>, vector<28x128xbf16> -> vector<28x640xbf16>
    %c0_30 = arith.constant 0 : index
    %c0_31 = arith.constant 0 : index
    %71 = vector.load %arg12[%c0_30, %c0_31] : memref<640x128xbf16, #tpu.memory_space<vmem>>, vector<640x128xbf16>
    %cst_32 = arith.constant dense<0.000000e+00> : vector<28x128xf32>
    %72 = tpu.matmul %70, %71, %cst_32 {dimension_numbers = #tpu.dot_dimension_numbers<[1], [0], [0], [1], [0, 0, 1, 1], [], []>} : vector<28x640xbf16>, vector<640x128xbf16>, vector<28x128xf32> -> vector<28x128xf32>
    %c0_33 = arith.constant 0 : index
    %c0_34 = arith.constant 0 : index
    %73 = vector.load %arg13[%c0_33, %c0_34] : memref<1x128xf32, #tpu.memory_space<vmem>>, vector<1x128xf32>
    %74 = vector.broadcast %73 : vector<1x128xf32> to vector<28x128xf32>
    %75 = arith.mulf %72, %74 : vector<28x128xf32>
    %c0_35 = arith.constant 0 : index
    %c0_36 = arith.constant 0 : index
    %76 = vector.load %arg14[%c0_35, %c0_36] : memref<1x128xf32, #tpu.memory_space<vmem>>, vector<1x128xf32>
    %77 = vector.broadcast %76 : vector<1x128xf32> to vector<28x128xf32>
    %78 = arith.addf %75, %77 : vector<28x128xf32>
    %cst_37 = arith.constant 0.000000e+00 : f32
    %79 = vector.broadcast %cst_37 : f32 to vector<28x128xf32>
    %80 = arith.maximumf %78, %79 : vector<28x128xf32>
    %81 = vector.extract_strided_slice %80 {offsets = [0, 0], sizes = [24, 128], strides = [1, 1]} : vector<28x128xf32> to vector<24x128xf32>
    %c0_38 = arith.constant 0 : index
    %c0_39 = arith.constant 0 : index
    %c128 = arith.constant 128 : index
    %82 = vector.load %arg20[%c0_38, %c0_39, %c128] : memref<1x24x384xf32, #tpu.memory_space<vmem>>, vector<1x24x128xf32>
    %83 = vector.shape_cast %82 : vector<1x24x128xf32> to vector<24x128xf32>
    %84 = vector.shape_cast %81 : vector<24x128xf32> to vector<1x24x128xf32>
    tpu.vector_store %arg20[%c0_38, %c0_39, %c128], %84 {strides = array<i32>} : memref<1x24x384xf32, #tpu.memory_space<vmem>>, vector<1x24x128xf32>,
    %c0_40 = arith.constant 0 : index
    %c0_41 = arith.constant 0 : index
    %85 = vector.load %arg15[%c0_40, %c0_41] : memref<1x128xf32, #tpu.memory_space<vmem>>, vector<1x128xf32>
    %86 = vector.broadcast %85 : vector<1x128xf32> to vector<34x128xf32>
    %87 = arith.mulf %24, %86 : vector<34x128xf32>
    %c0_42 = arith.constant 0 : index
    %c0_43 = arith.constant 0 : index
    %88 = vector.load %arg16[%c0_42, %c0_43] : memref<1x128xf32, #tpu.memory_space<vmem>>, vector<1x128xf32>
    %89 = vector.broadcast %88 : vector<1x128xf32> to vector<34x128xf32>
    %90 = arith.addf %87, %89 : vector<34x128xf32>
    %cst_44 = arith.constant 0.000000e+00 : f32
    %91 = vector.broadcast %cst_44 : f32 to vector<34x128xf32>
    %92 = arith.maximumf %90, %91 : vector<34x128xf32>
    %93 = arith.truncf %92 : vector<34x128xf32> to vector<34x128xbf16>
    %94 = vector.extract_strided_slice %93 {offsets = [0, 0], sizes = [28, 128], strides = [1, 1]} : vector<34x128xbf16> to vector<28x128xbf16>
    %95 = vector.extract_strided_slice %93 {offsets = [1, 0], sizes = [28, 128], strides = [1, 1]} : vector<34x128xbf16> to vector<28x128xbf16>
    %96 = vector.extract_strided_slice %93 {offsets = [2, 0], sizes = [28, 128], strides = [1, 1]} : vector<34x128xbf16> to vector<28x128xbf16>
    %97 = tpu.concatenate %94, %95, %96 in 1 : vector<28x128xbf16>, vector<28x128xbf16>, vector<28x128xbf16> -> vector<28x384xbf16>
    %c0_45 = arith.constant 0 : index
    %c0_46 = arith.constant 0 : index
    %98 = vector.load %arg17[%c0_45, %c0_46] : memref<384x128xbf16, #tpu.memory_space<vmem>>, vector<384x128xbf16>
    %cst_47 = arith.constant dense<0.000000e+00> : vector<28x128xf32>
    %99 = tpu.matmul %97, %98, %cst_47 {dimension_numbers = #tpu.dot_dimension_numbers<[1], [0], [0], [1], [0, 0, 1, 1], [], []>} : vector<28x384xbf16>, vector<384x128xbf16>, vector<28x128xf32> -> vector<28x128xf32>
    %c0_48 = arith.constant 0 : index
    %c0_49 = arith.constant 0 : index
    %100 = vector.load %arg18[%c0_48, %c0_49] : memref<1x128xf32, #tpu.memory_space<vmem>>, vector<1x128xf32>
    %101 = vector.broadcast %100 : vector<1x128xf32> to vector<28x128xf32>
    %102 = arith.mulf %99, %101 : vector<28x128xf32>
    %c0_50 = arith.constant 0 : index
    %c0_51 = arith.constant 0 : index
    %103 = vector.load %arg19[%c0_50, %c0_51] : memref<1x128xf32, #tpu.memory_space<vmem>>, vector<1x128xf32>
    %104 = vector.broadcast %103 : vector<1x128xf32> to vector<28x128xf32>
    %105 = arith.addf %102, %104 : vector<28x128xf32>
    %cst_52 = arith.constant 0.000000e+00 : f32
    %106 = vector.broadcast %cst_52 : f32 to vector<28x128xf32>
    %107 = arith.maximumf %105, %106 : vector<28x128xf32>
    %108 = vector.extract_strided_slice %107 {offsets = [0, 0], sizes = [24, 128], strides = [1, 1]} : vector<28x128xf32> to vector<24x128xf32>
    %c0_53 = arith.constant 0 : index
    %c0_54 = arith.constant 0 : index
    %c256 = arith.constant 256 : index
    %109 = vector.load %arg20[%c0_53, %c0_54, %c256] : memref<1x24x384xf32, #tpu.memory_space<vmem>>, vector<1x24x128xf32>
    %110 = vector.shape_cast %109 : vector<1x24x128xf32> to vector<24x128xf32>
    %111 = vector.shape_cast %108 : vector<24x128xf32> to vector<1x24x128xf32>
    tpu.vector_store %arg20[%c0_53, %c0_54, %c256], %111 {strides = array<i32>} : memref<1x24x384xf32, #tpu.memory_space<vmem>>, vector<1x24x128xf32>,
    return
  }
  func.func @transform_0(%arg0: i32) -> (i32, i32) {
    %c0_i32 = arith.constant 0 : i32
    %c0_i32_0 = arith.constant 0 : i32
    return %arg0, %c0_i32 : i32, i32
  }
  func.func @transform_1(%arg0: i32) -> (i32, i32) {
    %c0_i32 = arith.constant 0 : i32
    %c0_i32_0 = arith.constant 0 : i32
    %c0_i32_1 = arith.constant 0 : i32
    return %c0_i32, %c0_i32_0 : i32, i32
  }
  func.func @transform_2(%arg0: i32) -> (i32, i32) {
    %c0_i32 = arith.constant 0 : i32
    %c0_i32_0 = arith.constant 0 : i32
    %c0_i32_1 = arith.constant 0 : i32
    return %c0_i32, %c0_i32_0 : i32, i32
  }
  func.func @transform_3(%arg0: i32) -> (i32, i32) {
    %c0_i32 = arith.constant 0 : i32
    %c0_i32_0 = arith.constant 0 : i32
    %c0_i32_1 = arith.constant 0 : i32
    return %c0_i32, %c0_i32_0 : i32, i32
  }
  func.func @transform_4(%arg0: i32) -> (i32, i32) {
    %c0_i32 = arith.constant 0 : i32
    %c0_i32_0 = arith.constant 0 : i32
    %c0_i32_1 = arith.constant 0 : i32
    return %c0_i32, %c0_i32_0 : i32, i32
  }
  func.func @transform_5(%arg0: i32) -> (i32, i32) {
    %c0_i32 = arith.constant 0 : i32
    %c0_i32_0 = arith.constant 0 : i32
    %c0_i32_1 = arith.constant 0 : i32
    return %c0_i32, %c0_i32_0 : i32, i32
  }
  func.func @transform_6(%arg0: i32) -> (i32, i32) {
    %c0_i32 = arith.constant 0 : i32
    %c0_i32_0 = arith.constant 0 : i32
    %c0_i32_1 = arith.constant 0 : i32
    return %c0_i32, %c0_i32_0 : i32, i32
  }
  func.func @transform_7(%arg0: i32) -> (i32, i32) {
    %c0_i32 = arith.constant 0 : i32
    %c0_i32_0 = arith.constant 0 : i32
    %c0_i32_1 = arith.constant 0 : i32
    return %c0_i32, %c0_i32_0 : i32, i32
  }
  func.func @transform_8(%arg0: i32) -> (i32, i32) {
    %c0_i32 = arith.constant 0 : i32
    %c0_i32_0 = arith.constant 0 : i32
    %c0_i32_1 = arith.constant 0 : i32
    return %c0_i32, %c0_i32_0 : i32, i32
  }
  func.func @transform_9(%arg0: i32) -> (i32, i32) {
    %c0_i32 = arith.constant 0 : i32
    %c0_i32_0 = arith.constant 0 : i32
    %c0_i32_1 = arith.constant 0 : i32
    return %c0_i32, %c0_i32_0 : i32, i32
  }
  func.func @transform_10(%arg0: i32) -> (i32, i32) {
    %c0_i32 = arith.constant 0 : i32
    %c0_i32_0 = arith.constant 0 : i32
    %c0_i32_1 = arith.constant 0 : i32
    return %c0_i32, %c0_i32_0 : i32, i32
  }
  func.func @transform_11(%arg0: i32) -> (i32, i32) {
    %c0_i32 = arith.constant 0 : i32
    %c0_i32_0 = arith.constant 0 : i32
    %c0_i32_1 = arith.constant 0 : i32
    return %c0_i32, %c0_i32_0 : i32, i32
  }
  func.func @transform_12(%arg0: i32) -> (i32, i32) {
    %c0_i32 = arith.constant 0 : i32
    %c0_i32_0 = arith.constant 0 : i32
    %c0_i32_1 = arith.constant 0 : i32
    return %c0_i32, %c0_i32_0 : i32, i32
  }
  func.func @transform_13(%arg0: i32) -> (i32, i32) {
    %c0_i32 = arith.constant 0 : i32
    %c0_i32_0 = arith.constant 0 : i32
    %c0_i32_1 = arith.constant 0 : i32
    return %c0_i32, %c0_i32_0 : i32, i32
  }
  func.func @transform_14(%arg0: i32) -> (i32, i32) {
    %c0_i32 = arith.constant 0 : i32
    %c0_i32_0 = arith.constant 0 : i32
    %c0_i32_1 = arith.constant 0 : i32
    return %c0_i32, %c0_i32_0 : i32, i32
  }
  func.func @transform_15(%arg0: i32) -> (i32, i32) {
    %c0_i32 = arith.constant 0 : i32
    %c0_i32_0 = arith.constant 0 : i32
    %c0_i32_1 = arith.constant 0 : i32
    return %c0_i32, %c0_i32_0 : i32, i32
  }
  func.func @transform_16(%arg0: i32) -> (i32, i32) {
    %c0_i32 = arith.constant 0 : i32
    %c0_i32_0 = arith.constant 0 : i32
    %c0_i32_1 = arith.constant 0 : i32
    return %c0_i32, %c0_i32_0 : i32, i32
  }
  func.func @transform_17(%arg0: i32) -> (i32, i32) {
    %c0_i32 = arith.constant 0 : i32
    %c0_i32_0 = arith.constant 0 : i32
    %c0_i32_1 = arith.constant 0 : i32
    return %c0_i32, %c0_i32_0 : i32, i32
  }
  func.func @transform_18(%arg0: i32) -> (i32, i32) {
    %c0_i32 = arith.constant 0 : i32
    %c0_i32_0 = arith.constant 0 : i32
    %c0_i32_1 = arith.constant 0 : i32
    return %c0_i32, %c0_i32_0 : i32, i32
  }
  func.func @transform_19(%arg0: i32) -> (i32, i32, i32) {
    %c0_i32 = arith.constant 0 : i32
    %c0_i32_0 = arith.constant 0 : i32
    %c0_i32_1 = arith.constant 0 : i32
    return %arg0, %c0_i32, %c0_i32_0 : i32, i32, i32
  }
}

</mosaic_0001>

<llo_original>
// kernel: encoder2_forward.1
$region0: #{encoder2_forward.1}
  #allocation0 [shape = 'u32[]', space=smem, size = 0x4, offset = 0x4, fixed_abs, tag = 'smem constant byte address 0x4 - core index']
  #allocation1 [shape = 'u32[144,128]{1,0:T(1,128)}', space=vmem, size = 0x12000, scoped, tag = 'internal scratch']
  %s0 = inlined_call_operand.vmem [shape: bf16[80,128], index: 0, kind: input, shape index: {}]
  %s1 = inlined_call_operand.vmem [shape: bf16[384,384], index: 1, kind: input, shape index: {}]
  %s2 = inlined_call_operand.vmem [shape: bf16[256,256], index: 2, kind: input, shape index: {}]
  %s3 = inlined_call_operand.vmem [shape: bf16[256,128], index: 3, kind: input, shape index: {}]
  %s4 = inlined_call_operand.vmem [shape: f32[1,128], index: 4, kind: input, shape index: {}]
  %s5 = inlined_call_operand.vmem [shape: f32[1,128], index: 5, kind: input, shape index: {}]
  %s6 = inlined_call_operand.vmem [shape: bf16[896,128], index: 6, kind: input, shape index: {}]
  %s7 = inlined_call_operand.vmem [shape: f32[1,128], index: 7, kind: input, shape index: {}]
  %s8 = inlined_call_operand.vmem [shape: f32[1,128], index: 8, kind: input, shape index: {}]
  %s9 = inlined_call_operand.vmem [shape: f32[1,128], index: 9, kind: input, shape index: {}]
  %s10 = inlined_call_operand.vmem [shape: f32[1,128], index: 10, kind: input, shape index: {}]
  %s11 = inlined_call_operand.vmem [shape: bf16[640,128], index: 11, kind: input, shape index: {}]
  %s12 = inlined_call_operand.vmem [shape: f32[1,128], index: 12, kind: input, shape index: {}]
  %s13 = inlined_call_operand.vmem [shape: f32[1,128], index: 13, kind: input, shape index: {}]
  %s14 = inlined_call_operand.vmem [shape: f32[1,128], index: 14, kind: input, shape index: {}]
  %s15 = inlined_call_operand.vmem [shape: f32[1,128], index: 15, kind: input, shape index: {}]
  %s16 = inlined_call_operand.vmem [shape: bf16[384,128], index: 16, kind: input, shape index: {}]
  %s17 = inlined_call_operand.vmem [shape: f32[1,128], index: 17, kind: input, shape index: {}]
  %s18 = inlined_call_operand.vmem [shape: f32[1,128], index: 18, kind: input, shape index: {}]
  %s19 = inlined_call_operand.hbm [shape: f32[2,24,384], index: 19, kind: output, shape index: {}]
  %s20 = sld [smem:[#allocation0]]
  $region109: #{encoder2_forward.1} parent=0
    _
  %s22 = ssub.s32 1, %s20
  %s23 = scalar_select 0, %s22, %s20
  $region1: #{encoder2_forward.1} parent=0
    #allocation2 [shape = 'u8[73728]{0}', space=vmem, size = 0x12000, scoped, tag = 'output window, operand 0']
    #allocation3 [shape = 's32[2]{0}', space=sflag, size = 0x8, scoped, tag = 'scoped memory for encoder2_forward.1']
    %24 = vsyncpa [#allocation3], 0
    %s25 = scalar_lea.sflag [#allocation3], 1
    %26 = vsyncpa %s25, 0
    loop: start=0, step=1, limit=4
    $region2: #{encoder2_forward.1} parent=1 // loop_pre_header
      _
    $region3: #{encoder2_forward.1} parent=1 // loop_header
      %s28 = sphi 0, %s32
      %p29 = scmp.ge.s32.totalorder %s28, 4
      %s38 = sphi 0, %s40
      %s41 = sphi 0, %s38
      %s42 = sphi 0, %s41
      %s58 = sphi 0, %s42
      %s62 = sphi 0, %s62
      %s64 = sphi 0, %s62
      %s65 = sphi 0, %s64
      %s79 = sphi 0, %s65
      %s83 = sphi 0, %s83
      %s85 = sphi 0, %s83
      %s86 = sphi 0, %s85
      %s100 = sphi 0, %s86
      %s104 = sphi 0, %s104
      %s106 = sphi 0, %s104
      %s107 = sphi 0, %s106
      %s121 = sphi 0, %s107
      %s125 = sphi 0, %s125
      %s127 = sphi 0, %s125
      %s128 = sphi 0, %s127
      %s142 = sphi 0, %s128
      %s146 = sphi 0, %s146
      %s148 = sphi 0, %s146
      %s149 = sphi 0, %s148
      %s163 = sphi 0, %s149
      %s167 = sphi 0, %s167
      %s169 = sphi 0, %s167
      %s170 = sphi 0, %s169
      %s184 = sphi 0, %s170
      %s188 = sphi 0, %s188
      %s190 = sphi 0, %s188
      %s191 = sphi 0, %s190
      %s205 = sphi 0, %s191
      %s209 = sphi 0, %s209
      %s211 = sphi 0, %s209
      %s212 = sphi 0, %s211
      %s226 = sphi 0, %s212
      %s230 = sphi 0, %s230
      %s232 = sphi 0, %s230
      %s233 = sphi 0, %s232
      %s247 = sphi 0, %s233
      %s251 = sphi 0, %s251
      %s253 = sphi 0, %s251
      %s254 = sphi 0, %s253
      %s268 = sphi 0, %s254
      %s272 = sphi 0, %s272
      %s274 = sphi 0, %s272
      %s275 = sphi 0, %s274
      %s289 = sphi 0, %s275
      %s293 = sphi 0, %s293
      %s295 = sphi 0, %s293
      %s296 = sphi 0, %s295
      %s310 = sphi 0, %s296
      %s314 = sphi 0, %s314
      %s316 = sphi 0, %s314
      %s317 = sphi 0, %s316
      %s331 = sphi 0, %s317
      %s335 = sphi 0, %s335
      %s337 = sphi 0, %s335
      %s338 = sphi 0, %s337
      %s352 = sphi 0, %s338
      %s356 = sphi 0, %s356
      %s358 = sphi 0, %s356
      %s359 = sphi 0, %s358
      %s373 = sphi 0, %s359
      %s377 = sphi 0, %s377
      %s379 = sphi 0, %s377
      %s380 = sphi 0, %s379
      %s394 = sphi 0, %s380
      %s398 = sphi 0, %s398
      %s400 = sphi 0, %s398
      %s401 = sphi 0, %s400
      %s415 = sphi 0, %s401
      %s419 = sphi 0, %s419
      %s421 = sphi 0, %s419
      %s422 = sphi 0, %s421
      %s436 = sphi 0, %s422
      %s442 = sphi 0, %s444
      %s445 = sphi 0, %s442
      %s446 = sphi 0, %s445
      %s462 = sphi 0, %s446
    $region4: #{encoder2_forward.1} parent=1 // loop_header_branch
      %31 = sbr.rel (%p29) target = $region8
    $region5: #{encoder2_forward.1} parent=1 // loop_body
      %s33 = ssub.s32 %s28, 1
      %s34 = ssub.s32 %s28, 2
      %s35 = sadd.s32 %s28, 1
      %s36 = ssub.s32 %s28, %s35
      %p37 = scmp.eq.s32.totalorder %s36, 0
      %s39 = sadd.s32 %s38, 1
      %s40 = scalar_select %p37, %s38, %s39
      %p43 = pneg %p37
      %p44 = scmp.eq.s32.totalorder %s28, 1
      %p45 = por %p43, %p44
      %p46 = scmp.ne.s32.totalorder %s38, %s41
      %p47 = scmp.eq.s32.totalorder %s28, 0
      %p48 = por %p46, %p47
      %p49 = scmp.ne.s32.totalorder %s38, %s41
      %p50 = scmp.eq.s32.totalorder %s33, 1
      %p51 = por %p49, %p50
      %p52 = scmp.ne.s32.totalorder %s41, %s42
      %p53 = scmp.eq.s32.totalorder %s33, 0
      %p54 = por %p52, %p53
      %p55 = scmp.ne.s32.totalorder %s41, %s42
      %p56 = scmp.eq.s32.totalorder %s34, 1
      %p57 = por %p55, %p56
      %p59 = scmp.ne.s32.totalorder %s42, %s58
      %p60 = scmp.eq.s32.totalorder %s34, 0
      %p61 = por %p59, %p60
      %s63 = sadd.s32 %s62, 1
      %p66 = scmp.eq.s32.totalorder %s28, 1
      %p67 = scmp.ne.s32.totalorder %s62, %s64
      %p68 = scmp.eq.s32.totalorder %s28, 0
      %p69 = por %p67, %p68
      %p70 = scmp.ne.s32.totalorder %s62, %s64
      %p71 = scmp.eq.s32.totalorder %s33, 1
      %p72 = por %p70, %p71
      %p73 = scmp.ne.s32.totalorder %s64, %s65
      %p74 = scmp.eq.s32.totalorder %s33, 0
      %p75 = por %p73, %p74
      %p76 = scmp.ne.s32.totalorder %s64, %s65
      %p77 = scmp.eq.s32.totalorder %s34, 1
      %p78 = por %p76, %p77
      %p80 = scmp.ne.s32.totalorder %s65, %s79
      %p81 = scmp.eq.s32.totalorder %s34, 0
      %p82 = por %p80, %p81
      %s84 = sadd.s32 %s83, 1
      %p87 = scmp.eq.s32.totalorder %s28, 1
      %p88 = scmp.ne.s32.totalorder %s83, %s85
      %p89 = scmp.eq.s32.totalorder %s28, 0
      %p90 = por %p88, %p89
      %p91 = scmp.ne.s32.totalorder %s83, %s85
      %p92 = scmp.eq.s32.totalorder %s33, 1
      %p93 = por %p91, %p92
      %p94 = scmp.ne.s32.totalorder %s85, %s86
      %p95 = scmp.eq.s32.totalorder %s33, 0
      %p96 = por %p94, %p95
      %p97 = scmp.ne.s32.totalorder %s85, %s86
      %p98 = scmp.eq.s32.totalorder %s34, 1
      %p99 = por %p97, %p98
      %p101 = scmp.ne.s32.totalorder %s86, %s100
      %p102 = scmp.eq.s32.totalorder %s34, 0
      %p103 = por %p101, %p102
      %s105 = sadd.s32 %s104, 1
      %p108 = scmp.eq.s32.totalorder %s28, 1
      %p109 = scmp.ne.s32.totalorder %s104, %s106
      %p110 = scmp.eq.s32.totalorder %s28, 0
      %p111 = por %p109, %p110
      %p112 = scmp.ne.s32.totalorder %s104, %s106
      %p113 = scmp.eq.s32.totalorder %s33, 1
      %p114 = por %p112, %p113
      %p115 = scmp.ne.s32.totalorder %s106, %s107
      %p116 = scmp.eq.s32.totalorder %s33, 0
      %p117 = por %p115, %p116
      %p118 = scmp.ne.s32.totalorder %s106, %s107
      %p119 = scmp.eq.s32.totalorder %s34, 1
      %p120 = por %p118, %p119
      %p122 = scmp.ne.s32.totalorder %s107, %s121
      %p123 = scmp.eq.s32.totalorder %s34, 0
      %p124 = por %p122, %p123
      %s126 = sadd.s32 %s125, 1
      %p129 = scmp.eq.s32.totalorder %s28, 1
      %p130 = scmp.ne.s32.totalorder %s125, %s127
      %p131 = scmp.eq.s32.totalorder %s28, 0
      %p132 = por %p130, %p131
      %p133 = scmp.ne.s32.totalorder %s125, %s127
      %p134 = scmp.eq.s32.totalorder %s33, 1
      %p135 = por %p133, %p134
      %p136 = scmp.ne.s32.totalorder %s127, %s128
      %p137 = scmp.eq.s32.totalorder %s33, 0
      %p138 = por %p136, %p137
      %p139 = scmp.ne.s32.totalorder %s127, %s128
      %p140 = scmp.eq.s32.totalorder %s34, 1
      %p141 = por %p139, %p140
      %p143 = scmp.ne.s32.totalorder %s128, %s142
      %p144 = scmp.eq.s32.totalorder %s34, 0
      %p145 = por %p143, %p144
      %s147 = sadd.s32 %s146, 1
      %p150 = scmp.eq.s32.totalorder %s28, 1
      %p151 = scmp.ne.s32.totalorder %s146, %s148
      %p152 = scmp.eq.s32.totalorder %s28, 0
      %p153 = por %p151, %p152
      %p154 = scmp.ne.s32.totalorder %s146, %s148
      %p155 = scmp.eq.s32.totalorder %s33, 1
      %p156 = por %p154, %p155
      %p157 = scmp.ne.s32.totalorder %s148, %s149
      %p158 = scmp.eq.s32.totalorder %s33, 0
      %p159 = por %p157, %p158
      %p160 = scmp.ne.s32.totalorder %s148, %s149
      %p161 = scmp.eq.s32.totalorder %s34, 1
      %p162 = por %p160, %p161
      %p164 = scmp.ne.s32.totalorder %s149, %s163
      %p165 = scmp.eq.s32.totalorder %s34, 0
      %p166 = por %p164, %p165
      %s168 = sadd.s32 %s167, 1
      %p171 = scmp.eq.s32.totalorder %s28, 1
      %p172 = scmp.ne.s32.totalorder %s167, %s169
      %p173 = scmp.eq.s32.totalorder %s28, 0
      %p174 = por %p172, %p173
      %p175 = scmp.ne.s32.totalorder %s167, %s169
      %p176 = scmp.eq.s32.totalorder %s33, 1
      %p177 = por %p175, %p176
      %p178 = scmp.ne.s32.totalorder %s169, %s170
      %p179 = scmp.eq.s32.totalorder %s33, 0
      %p180 = por %p178, %p179
      %p181 = scmp.ne.s32.totalorder %s169, %s170
      %p182 = scmp.eq.s32.totalorder %s34, 1
      %p183 = por %p181, %p182
      %p185 = scmp.ne.s32.totalorder %s170, %s184
      %p186 = scmp.eq.s32.totalorder %s34, 0
      %p187 = por %p185, %p186
      %s189 = sadd.s32 %s188, 1
      %p192 = scmp.eq.s32.totalorder %s28, 1
      %p193 = scmp.ne.s32.totalorder %s188, %s190
      %p194 = scmp.eq.s32.totalorder %s28, 0
      %p195 = por %p193, %p194
      %p196 = scmp.ne.s32.totalorder %s188, %s190
      %p197 = scmp.eq.s32.totalorder %s33, 1
      %p198 = por %p196, %p197
      %p199 = scmp.ne.s32.totalorder %s190, %s191
      %p200 = scmp.eq.s32.totalorder %s33, 0
      %p201 = por %p199, %p200
      %p202 = scmp.ne.s32.totalorder %s190, %s191
      %p203 = scmp.eq.s32.totalorder %s34, 1
      %p204 = por %p202, %p203
      %p206 = scmp.ne.s32.totalorder %s191, %s205
      %p207 = scmp.eq.s32.totalorder %s34, 0
      %p208 = por %p206, %p207
      %s210 = sadd.s32 %s209, 1
      %p213 = scmp.eq.s32.totalorder %s28, 1
      %p214 = scmp.ne.s32.totalorder %s209, %s211
      %p215 = scmp.eq.s32.totalorder %s28, 0
      %p216 = por %p214, %p215
      %p217 = scmp.ne.s32.totalorder %s209, %s211
      %p218 = scmp.eq.s32.totalorder %s33, 1
      %p219 = por %p217, %p218
      %p220 = scmp.ne.s32.totalorder %s211, %s212
      %p221 = scmp.eq.s32.totalorder %s33, 0
      %p222 = por %p220, %p221
      %p223 = scmp.ne.s32.totalorder %s211, %s212
      %p224 = scmp.eq.s32.totalorder %s34, 1
      %p225 = por %p223, %p224
      %p227 = scmp.ne.s32.totalorder %s212, %s226
      %p228 = scmp.eq.s32.totalorder %s34, 0
      %p229 = por %p227, %p228
      %s231 = sadd.s32 %s230, 1
      %p234 = scmp.eq.s32.totalorder %s28, 1
      %p235 = scmp.ne.s32.totalorder %s230, %s232
      %p236 = scmp.eq.s32.totalorder %s28, 0
      %p237 = por %p235, %p236
      %p238 = scmp.ne.s32.totalorder %s230, %s232
      %p239 = scmp.eq.s32.totalorder %s33, 1
      %p240 = por %p238, %p239
      %p241 = scmp.ne.s32.totalorder %s232, %s233
      %p242 = scmp.eq.s32.totalorder %s33, 0
      %p243 = por %p241, %p242
      %p244 = scmp.ne.s32.totalorder %s232, %s233
      %p245 = scmp.eq.s32.totalorder %s34, 1
      %p246 = por %p244, %p245
      %p248 = scmp.ne.s32.totalorder %s233, %s247
      %p249 = scmp.eq.s32.totalorder %s34, 0
      %p250 = por %p248, %p249
      %s252 = sadd.s32 %s251, 1
      %p255 = scmp.eq.s32.totalorder %s28, 1
      %p256 = scmp.ne.s32.totalorder %s251, %s253
      %p257 = scmp.eq.s32.totalorder %s28, 0
      %p258 = por %p256, %p257
      %p259 = scmp.ne.s32.totalorder %s251, %s253
      %p260 = scmp.eq.s32.totalorder %s33, 1
      %p261 = por %p259, %p260
      %p262 = scmp.ne.s32.totalorder %s253, %s254
      %p263 = scmp.eq.s32.totalorder %s33, 0
      %p264 = por %p262, %p263
      %p265 = scmp.ne.s32.totalorder %s253, %s254
      %p266 = scmp.eq.s32.totalorder %s34, 1
      %p267 = por %p265, %p266
      %p269 = scmp.ne.s32.totalorder %s254, %s268
      %p270 = scmp.eq.s32.totalorder %s34, 0
      %p271 = por %p269, %p270
      %s273 = sadd.s32 %s272, 1
      %p276 = scmp.eq.s32.totalorder %s28, 1
      %p277 = scmp.ne.s32.totalorder %s272, %s274
      %p278 = scmp.eq.s32.totalorder %s28, 0
      %p279 = por %p277, %p278
      %p280 = scmp.ne.s32.totalorder %s272, %s274
      %p281 = scmp.eq.s32.totalorder %s33, 1
      %p282 = por %p280, %p281
      %p283 = scmp.ne.s32.totalorder %s274, %s275
      %p284 = scmp.eq.s32.totalorder %s33, 0
      %p285 = por %p283, %p284
      %p286 = scmp.ne.s32.totalorder %s274, %s275
      %p287 = scmp.eq.s32.totalorder %s34, 1
      %p288 = por %p286, %p287
      %p290 = scmp.ne.s32.totalorder %s275, %s289
      %p291 = scmp.eq.s32.totalorder %s34, 0
      %p292 = por %p290, %p291
      %s294 = sadd.s32 %s293, 1
      %p297 = scmp.eq.s32.totalorder %s28, 1
      %p298 = scmp.ne.s32.totalorder %s293, %s295
      %p299 = scmp.eq.s32.totalorder %s28, 0
      %p300 = por %p298, %p299
      %p301 = scmp.ne.s32.totalorder %s293, %s295
      %p302 = scmp.eq.s32.totalorder %s33, 1
      %p303 = por %p301, %p302
      %p304 = scmp.ne.s32.totalorder %s295, %s296
      %p305 = scmp.eq.s32.totalorder %s33, 0
      %p306 = por %p304, %p305
      %p307 = scmp.ne.s32.totalorder %s295, %s296
      %p308 = scmp.eq.s32.totalorder %s34, 1
      %p309 = por %p307, %p308
      %p311 = scmp.ne.s32.totalorder %s296, %s310
      %p312 = scmp.eq.s32.totalorder %s34, 0
      %p313 = por %p311, %p312
      %s315 = sadd.s32 %s314, 1
      %p318 = scmp.eq.s32.totalorder %s28, 1
      %p319 = scmp.ne.s32.totalorder %s314, %s316
      %p320 = scmp.eq.s32.totalorder %s28, 0
      %p321 = por %p319, %p320
      %p322 = scmp.ne.s32.totalorder %s314, %s316
      %p323 = scmp.eq.s32.totalorder %s33, 1
      %p324 = por %p322, %p323
      %p325 = scmp.ne.s32.totalorder %s316, %s317
      %p326 = scmp.eq.s32.totalorder %s33, 0
      %p327 = por %p325, %p326
      %p328 = scmp.ne.s32.totalorder %s316, %s317
      %p329 = scmp.eq.s32.totalorder %s34, 1
      %p330 = por %p328, %p329
      %p332 = scmp.ne.s32.totalorder %s317, %s331
      %p333 = scmp.eq.s32.totalorder %s34, 0
      %p334 = por %p332, %p333
      %s336 = sadd.s32 %s335, 1
      %p339 = scmp.eq.s32.totalorder %s28, 1
      %p340 = scmp.ne.s32.totalorder %s335, %s337
      %p341 = scmp.eq.s32.totalorder %s28, 0
      %p342 = por %p340, %p341
      %p343 = scmp.ne.s32.totalorder %s335, %s337
      %p344 = scmp.eq.s32.totalorder %s33, 1
      %p345 = por %p343, %p344
      %p346 = scmp.ne.s32.totalorder %s337, %s338
      %p347 = scmp.eq.s32.totalorder %s33, 0
      %p348 = por %p346, %p347
      %p349 = scmp.ne.s32.totalorder %s337, %s338
      %p350 = scmp.eq.s32.totalorder %s34, 1
      %p351 = por %p349, %p350
      %p353 = scmp.ne.s32.totalorder %s338, %s352
      %p354 = scmp.eq.s32.totalorder %s34, 0
      %p355 = por %p353, %p354
      %s357 = sadd.s32 %s356, 1
      %p360 = scmp.eq.s32.totalorder %s28, 1
      %p361 = scmp.ne.s32.totalorder %s356, %s358
      %p362 = scmp.eq.s32.totalorder %s28, 0
      %p363 = por %p361, %p362
      %p364 = scmp.ne.s32.totalorder %s356, %s358
      %p365 = scmp.eq.s32.totalorder %s33, 1
      %p366 = por %p364, %p365
      %p367 = scmp.ne.s32.totalorder %s358, %s359
      %p368 = scmp.eq.s32.totalorder %s33, 0
      %p369 = por %p367, %p368
      %p370 = scmp.ne.s32.totalorder %s358, %s359
      %p371 = scmp.eq.s32.totalorder %s34, 1
      %p372 = por %p370, %p371
      %p374 = scmp.ne.s32.totalorder %s359, %s373
      %p375 = scmp.eq.s32.totalorder %s34, 0
      %p376 = por %p374, %p375
      %s378 = sadd.s32 %s377, 1
      %p381 = scmp.eq.s32.totalorder %s28, 1
      %p382 = scmp.ne.s32.totalorder %s377, %s379
      %p383 = scmp.eq.s32.totalorder %s28, 0
      %p384 = por %p382, %p383
      %p385 = scmp.ne.s32.totalorder %s377, %s379
      %p386 = scmp.eq.s32.totalorder %s33, 1
      %p387 = por %p385, %p386
      %p388 = scmp.ne.s32.totalorder %s379, %s380
      %p389 = scmp.eq.s32.totalorder %s33, 0
      %p390 = por %p388, %p389
      %p391 = scmp.ne.s32.totalorder %s379, %s380
      %p392 = scmp.eq.s32.totalorder %s34, 1
      %p393 = por %p391, %p392
      %p395 = scmp.ne.s32.totalorder %s380, %s394
      %p396 = scmp.eq.s32.totalorder %s34, 0
      %p397 = por %p395, %p396
      %s399 = sadd.s32 %s398, 1
      %p402 = scmp.eq.s32.totalorder %s28, 1
      %p403 = scmp.ne.s32.totalorder %s398, %s400
      %p404 = scmp.eq.s32.totalorder %s28, 0
      %p405 = por %p403, %p404
      %p406 = scmp.ne.s32.totalorder %s398, %s400
      %p407 = scmp.eq.s32.totalorder %s33, 1
      %p408 = por %p406, %p407
      %p409 = scmp.ne.s32.totalorder %s400, %s401
      %p410 = scmp.eq.s32.totalorder %s33, 0
      %p411 = por %p409, %p410
      %p412 = scmp.ne.s32.totalorder %s400, %s401
      %p413 = scmp.eq.s32.totalorder %s34, 1
      %p414 = por %p412, %p413
      %p416 = scmp.ne.s32.totalorder %s401, %s415
      %p417 = scmp.eq.s32.totalorder %s34, 0
      %p418 = por %p416, %p417
      %s420 = sadd.s32 %s419, 1
      %p423 = scmp.eq.s32.totalorder %s28, 1
      %p424 = scmp.ne.s32.totalorder %s419, %s421
      %p425 = scmp.eq.s32.totalorder %s28, 0
      %p426 = por %p424, %p425
      %p427 = scmp.ne.s32.totalorder %s419, %s421
      %p428 = scmp.eq.s32.totalorder %s33, 1
      %p429 = por %p427, %p428
      %p430 = scmp.ne.s32.totalorder %s421, %s422
      %p431 = scmp.eq.s32.totalorder %s33, 0
      %p432 = por %p430, %p431
      %p433 = scmp.ne.s32.totalorder %s421, %s422
      %p434 = scmp.eq.s32.totalorder %s34, 1
      %p435 = por %p433, %p434
      %p437 = scmp.ne.s32.totalorder %s422, %s436
      %p438 = scmp.eq.s32.totalorder %s34, 0
      %p439 = por %p437, %p438
      %s440 = ssub.s32 %s28, %s35
      %p441 = scmp.eq.s32.totalorder %s440, 0
      %s443 = sadd.s32 %s442, 1
      %s444 = scalar_select %p441, %s442, %s443
      %p447 = pneg %p441
      %p448 = scmp.eq.s32.totalorder %s28, 1
      %p449 = por %p447, %p448
      %p450 = scmp.ne.s32.totalorder %s442, %s445
      %p451 = scmp.eq.s32.totalorder %s28, 0
      %p452 = por %p450, %p451
      %p453 = scmp.ne.s32.totalorder %s442, %s445
      %p454 = scmp.eq.s32.totalorder %s33, 1
      %p455 = por %p453, %p454
      %p456 = scmp.ne.s32.totalorder %s445, %s446
      %p457 = scmp.eq.s32.totalorder %s33, 0
      %p458 = por %p456, %p457
      %p459 = scmp.ne.s32.totalorder %s445, %s446
      %p460 = scmp.eq.s32.totalorder %s34, 1
      %p461 = por %p459, %p460
      %p463 = scmp.ne.s32.totalorder %s446, %s462
      %p464 = scmp.eq.s32.totalorder %s34, 0
      %p465 = por %p463, %p464
      %p466 = scmp.le.s32.totalorder 1, %s28
      %p467 = scmp.lt.s32.totalorder %s28, 3
      %p468 = pnand %p466, %p467
      %p469 = pneg %p468
      // Predicated region
      $region9: #{encoder2_forward.1} parent=5 // pred_check
        _
      $region10: #{encoder2_forward.1} parent=5 // pred_check_branch
        %471 = sbr.rel (%p468) target = $region12
      $region11: #{encoder2_forward.1} parent=5 // pred_region
        %s472 = ssub.s32 %s28, 1
        // Predicated region
        $region13: #{encoder2_forward.1} parent=11 // pred_check
          %p473 = pneg %p75
        $region14: #{encoder2_forward.1} parent=11 // pred_check_branch
          %475 = sbr.rel (%p473) target = $region16
        $region15: #{encoder2_forward.1} parent=11 // pred_region
          _
        $region16: #{encoder2_forward.1} parent=11 // pred_fallthru
          _
        // Predicated region
        $region17: #{encoder2_forward.1} parent=11 // pred_check
          %p476 = pneg %p96
        $region18: #{encoder2_forward.1} parent=11 // pred_check_branch
          %478 = sbr.rel (%p476) target = $region20
        $region19: #{encoder2_forward.1} parent=11 // pred_region
          _
        $region20: #{encoder2_forward.1} parent=11 // pred_fallthru
          _
        // Predicated region
        $region21: #{encoder2_forward.1} parent=11 // pred_check
          %p479 = pneg %p117
        $region22: #{encoder2_forward.1} parent=11 // pred_check_branch
          %481 = sbr.rel (%p479) target = $region24
        $region23: #{encoder2_forward.1} parent=11 // pred_region
          _
        $region24: #{encoder2_forward.1} parent=11 // pred_fallthru
          _
        // Predicated region
        $region25: #{encoder2_forward.1} parent=11 // pred_check
          %p482 = pneg %p138
        $region26: #{encoder2_forward.1} parent=11 // pred_check_branch
          %484 = sbr.rel (%p482) target = $region28
        $region27: #{encoder2_forward.1} parent=11 // pred_region
          _
        $region28: #{encoder2_forward.1} parent=11 // pred_fallthru
          _
        // Predicated region
        $region29: #{encoder2_forward.1} parent=11 // pred_check
          %p485 = pneg %p159
        $region30: #{encoder2_forward.1} parent=11 // pred_check_branch
          %487 = sbr.rel (%p485) target = $region32
        $region31: #{encoder2_forward.1} parent=11 // pred_region
          _
        $region32: #{encoder2_forward.1} parent=11 // pred_fallthru
          _
        // Predicated region
        $region33: #{encoder2_forward.1} parent=11 // pred_check
          %p488 = pneg %p180
        $region34: #{encoder2_forward.1} parent=11 // pred_check_branch
          %490 = sbr.rel (%p488) target = $region36
        $region35: #{encoder2_forward.1} parent=11 // pred_region
          _
        $region36: #{encoder2_forward.1} parent=11 // pred_fallthru
          _
        // Predicated region
        $region37: #{encoder2_forward.1} parent=11 // pred_check
          %p491 = pneg %p201
        $region38: #{encoder2_forward.1} parent=11 // pred_check_branch
          %493 = sbr.rel (%p491) target = $region40
        $region39: #{encoder2_forward.1} parent=11 // pred_region
          _
        $region40: #{encoder2_forward.1} parent=11 // pred_fallthru
          _
        // Predicated region
        $region41: #{encoder2_forward.1} parent=11 // pred_check
          %p494 = pneg %p222
        $region42: #{encoder2_forward.1} parent=11 // pred_check_branch
          %496 = sbr.rel (%p494) target = $region44
        $region43: #{encoder2_forward.1} parent=11 // pred_region
          _
        $region44: #{encoder2_forward.1} parent=11 // pred_fallthru
          _
        // Predicated region
        $region45: #{encoder2_forward.1} parent=11 // pred_check
          %p497 = pneg %p243
        $region46: #{encoder2_forward.1} parent=11 // pred_check_branch
          %499 = sbr.rel (%p497) target = $region48
        $region47: #{encoder2_forward.1} parent=11 // pred_region
          _
        $region48: #{encoder2_forward.1} parent=11 // pred_fallthru
          _
        // Predicated region
        $region49: #{encoder2_forward.1} parent=11 // pred_check
          %p500 = pneg %p264
        $region50: #{encoder2_forward.1} parent=11 // pred_check_branch
          %502 = sbr.rel (%p500) target = $region52
        $region51: #{encoder2_forward.1} parent=11 // pred_region
          _
        $region52: #{encoder2_forward.1} parent=11 // pred_fallthru
          _
        // Predicated region
        $region53: #{encoder2_forward.1} parent=11 // pred_check
          %p503 = pneg %p285
        $region54: #{encoder2_forward.1} parent=11 // pred_check_branch
          %505 = sbr.rel (%p503) target = $region56
        $region55: #{encoder2_forward.1} parent=11 // pred_region
          _
        $region56: #{encoder2_forward.1} parent=11 // pred_fallthru
          _
        // Predicated region
        $region57: #{encoder2_forward.1} parent=11 // pred_check
          %p506 = pneg %p306
        $region58: #{encoder2_forward.1} parent=11 // pred_check_branch
          %508 = sbr.rel (%p506) target = $region60
        $region59: #{encoder2_forward.1} parent=11 // pred_region
          _
        $region60: #{encoder2_forward.1} parent=11 // pred_fallthru
          _
        // Predicated region
        $region61: #{encoder2_forward.1} parent=11 // pred_check
          %p509 = pneg %p327
        $region62: #{encoder2_forward.1} parent=11 // pred_check_branch
          %511 = sbr.rel (%p509) target = $region64
        $region63: #{encoder2_forward.1} parent=11 // pred_region
          _
        $region64: #{encoder2_forward.1} parent=11 // pred_fallthru
          _
        // Predicated region
        $region65: #{encoder2_forward.1} parent=11 // pred_check
          %p512 = pneg %p348
        $region66: #{encoder2_forward.1} parent=11 // pred_check_branch
          %514 = sbr.rel (%p512) target = $region68
        $region67: #{encoder2_forward.1} parent=11 // pred_region
          _
        $region68: #{encoder2_forward.1} parent=11 // pred_fallthru
          _
        // Predicated region
        $region69: #{encoder2_forward.1} parent=11 // pred_check
          %p515 = pneg %p369
        $region70: #{encoder2_forward.1} parent=11 // pred_check_branch
          %517 = sbr.rel (%p515) target = $region72
        $region71: #{encoder2_forward.1} parent=11 // pred_region
          _
        $region72: #{encoder2_forward.1} parent=11 // pred_fallthru
          _
        // Predicated region
        $region73: #{encoder2_forward.1} parent=11 // pred_check
          %p518 = pneg %p390
        $region74: #{encoder2_forward.1} parent=11 // pred_check_branch
          %520 = sbr.rel (%p518) target = $region76
        $region75: #{encoder2_forward.1} parent=11 // pred_region
          _
        $region76: #{encoder2_forward.1} parent=11 // pred_fallthru
          _
        // Predicated region
        $region77: #{encoder2_forward.1} parent=11 // pred_check
          %p521 = pneg %p411
        $region78: #{encoder2_forward.1} parent=11 // pred_check_branch
          %523 = sbr.rel (%p521) target = $region80
        $region79: #{encoder2_forward.1} parent=11 // pred_region
          _
        $region80: #{encoder2_forward.1} parent=11 // pred_fallthru
          _
        // Predicated region
        $region81: #{encoder2_forward.1} parent=11 // pred_check
          %p524 = pneg %p432
        $region82: #{encoder2_forward.1} parent=11 // pred_check_branch
          %526 = sbr.rel (%p524) target = $region84
        $region83: #{encoder2_forward.1} parent=11 // pred_region
          _
        $region84: #{encoder2_forward.1} parent=11 // pred_fallthru
          _
      $region12: #{encoder2_forward.1} parent=5 // pred_fallthru
        _
      %p527 = scmp.lt.s32.totalorder %s28, 2
      // Predicated region
      $region85: #{encoder2_forward.1} parent=5 // pred_check
        %p528 = pneg %p527
      $region86: #{encoder2_forward.1} parent=5 // pred_check_branch
        %530 = sbr.rel (%p528) target = $region88
      $region87: #{encoder2_forward.1} parent=5 // pred_region
        // Predicated region
        $region89: #{encoder2_forward.1} parent=87 // pred_check
          %p531 = pneg %p48
        $region90: #{encoder2_forward.1} parent=87 // pred_check_branch
          %533 = sbr.rel (%p531) target = $region92
        $region91: #{encoder2_forward.1} parent=87 // pred_region
          %s534 = smul.u32 5, %s28
          %p535 = scmp.lt.s32.totalorder %s534, 9
          %s536 = scalar_select %p535, %s534, 9
          %s537 = smul.addr %s536, 4
          %s538 = scalar_lea.vmem %s0, %s537
          %s539 = smul.u32 5, %s28
        $region92: #{encoder2_forward.1} parent=87 // pred_fallthru
          _
      $region88: #{encoder2_forward.1} parent=5 // pred_fallthru
        _
      %p540 = scmp.le.s32.totalorder 1, %s28
      %p541 = scmp.lt.s32.totalorder %s28, 3
      %p542 = pnand %p540, %p541
      %p543 = pneg %p542
      // Predicated region
      $region93: #{encoder2_forward.1} parent=5 // pred_check
        _
      $region94: #{encoder2_forward.1} parent=5 // pred_check_branch
        %545 = sbr.rel (%p542) target = $region96
      $region95: #{encoder2_forward.1} parent=5 // pred_region
        %s546 = ssub.s32 %s28, 1
        %s547 = smul.u32 5, %s33
        %p548 = scmp.lt.s32.totalorder %s547, 9
        %s549 = scalar_select %p548, %s547, 9
        %s550 = smul.addr %s549, 4
        %s551 = scalar_lea.vmem %s0, %s550
        %p552 = pneg %p54
        %p553 = pneg %p51
        %p554 = pneg %p75
        %p555 = pneg %p72
        %p556 = pneg %p96
        %p557 = pneg %p93
        %p558 = pneg %p117
        %p559 = pneg %p114
        %p560 = pneg %p138
        %p561 = pneg %p135
        %p562 = pneg %p159
        %p563 = pneg %p156
        %p564 = pneg %p180
        %p565 = pneg %p177
        %p566 = pneg %p201
        %p567 = pneg %p198
        %p568 = pneg %p222
        %p569 = pneg %p219
        %p570 = pneg %p243
        %p571 = pneg %p240
        %p572 = pneg %p264
        %p573 = pneg %p261
        %p574 = pneg %p285
        %p575 = pneg %p282
        %p576 = pneg %p306
        %p577 = pneg %p303
        %p578 = pneg %p327
        %p579 = pneg %p324
        %p580 = pneg %p348
        %p581 = pneg %p345
        %p582 = pneg %p369
        %p583 = pneg %p366
        %p584 = pneg %p390
        %p585 = pneg %p387
        %p586 = pneg %p411
        %p587 = pneg %p408
        %p588 = pneg %p432
        %p589 = pneg %p429
        %p590 = pneg %p458
        %p591 = pneg %p455
        %s592 = sand.u32 %s445, 1
        %s593 = scalar_lea.sflag [#allocation3], %s592
        %s594 = sand.u32 %s445, 1
        %s595 = smul.addr %s594, 72
        %s596 = scalar_lea.vmem [#allocation2], %s595
        %s597 = smul.u32 5, %s33
        %p598 = scmp.lt.s32.totalorder %s597, 9
        %s599 = scalar_select %p598, %s597, 9
        %s600 = smul.addr %s599, 4
        %s601 = scalar_lea.vmem %s0, %s600
        %s602 = smul.u32 5, %s33
        %v604 = vld [vmem:[%s601] sm:$0xf]
        %v605 = vld [vmem:[%s601 + $0x4] sm:$0xf]
        %v606 = vld [vmem:[%s601 + $0x8] sm:$0xf]
        %v607 = vld [vmem:[%s601 + $0xc] sm:$0xf]
        %v608 = vld [vmem:[%s601 + $0x10] sm:$0xf]
        %v614 = vunpack.c.l.b16 %v604
        %v615 = vunpack.c.l.b16 %v605
        %v616 = vunpack.c.l.b16 %v606
        %v617 = vunpack.c.l.b16 %v607
        %v618 = vunpack.c.l.b16 %v608
        %v619 = vpack.c.b16 %v615, %v614
        %v620 = vpack.c.b16 %v617, %v616
        %v621 = vpack.c.b16 %v618, %v618
        %vm625 = vsmask.f32 7424
        %v627 = vshrl.u32 %v619, 16
        %v629 = vshll.u32 %v619, 16
        %v631 = vrot.slane %v629, 1
        %v632 = vor.u32 %v627, %v631
        %v634 = vshll.u32 %v620, 16
        %v636 = vrot.slane %v634, 1
        %v637 = vsel %vm625, %v632, %v636
        %v638 = vshrl.u32 %v620, 16
        %v640 = vor.u32 %v638, %v636
        %v642 = vshll.u32 %v621, 16
        %v644 = vrot.slane %v642, 1
        %v645 = vsel %vm625, %v640, %v644
        %v646 = vshrl.u32 %v621, 16
        %v648 = vor.u32 %v646, %v644
        %vm652 = vcmask 1046528
        %v653 = vrot.slane %v619, 1
        %v654 = vrot.slane %v620, 1
        %v655 = vsel %vm652, %v653, %v654
        %v656 = vrot.slane %v621, 1
        %v657 = vsel %vm652, %v654, %v656
        %v661 = vld [vmem:[%s1] sm:$0xff]
        %v662 = vld [vmem:[%s1 + $0x8] sm:$0xf]
        %v663 = vld [vmem:[%s1 + $0xc] sm:$0xff]
        %v664 = vld [vmem:[%s1 + $0x14] sm:$0xf]
        %v665 = vld [vmem:[%s1 + $0x18] sm:$0xff]
        %v666 = vld [vmem:[%s1 + $0x20] sm:$0xf]
        %v667 = vld [vmem:[%s1 + $0x24] sm:$0xff]
        %v668 = vld [vmem:[%s1 + $0x2c] sm:$0xf]
        %v669 = vld [vmem:[%s1 + $0x30] sm:$0xff]
        %v670 = vld [vmem:[%s1 + $0x38] sm:$0xf]
        %v671 = vld [vmem:[%s1 + $0x3c] sm:$0xff]
        %v672 = vld [vmem:[%s1 + $0x44] sm:$0xf]
        %v673 = vld [vmem:[%s1 + $0x48] sm:$0xff]
        %v674 = vld [vmem:[%s1 + $0x50] sm:$0xf]
        %v675 = vld [vmem:[%s1 + $0x54] sm:$0xff]
        %v676 = vld [vmem:[%s1 + $0x5c] sm:$0xf]
        %v677 = vld [vmem:[%s1 + $0x60] sm:$0xff]
        %v678 = vld [vmem:[%s1 + $0x68] sm:$0xf]
        %v679 = vld [vmem:[%s1 + $0x6c] sm:$0xff]
        %v680 = vld [vmem:[%s1 + $0x74] sm:$0xf]
        %v681 = vld [vmem:[%s1 + $0x78] sm:$0xff]
        %v682 = vld [vmem:[%s1 + $0x80] sm:$0xf]
        %v683 = vld [vmem:[%s1 + $0x84] sm:$0xff]
        %v684 = vld [vmem:[%s1 + $0x8c] sm:$0xf]
        %v685 = vld [vmem:[%s1 + $0x90] sm:$0xff]
        %v686 = vld [vmem:[%s1 + $0x98] sm:$0xf]
        %v687 = vld [vmem:[%s1 + $0x9c] sm:$0xff]
        %v688 = vld [vmem:[%s1 + $0xa4] sm:$0xf]
        %v689 = vld [vmem:[%s1 + $0xa8] sm:$0xff]
        %v690 = vld [vmem:[%s1 + $0xb0] sm:$0xf]
        %v691 = vld [vmem:[%s1 + $0xb4] sm:$0xff]
        %v692 = vld [vmem:[%s1 + $0xbc] sm:$0xf]
        %v693 = vld [vmem:[%s1 + $0xc0] sm:$0xff]
        %v694 = vld [vmem:[%s1 + $0xc8] sm:$0xf]
        %v695 = vld [vmem:[%s1 + $0xcc] sm:$0xff]
        %v696 = vld [vmem:[%s1 + $0xd4] sm:$0xf]
        %v697 = vld [vmem:[%s1 + $0xd8] sm:$0xff]
        %v698 = vld [vmem:[%s1 + $0xe0] sm:$0xf]
        %v699 = vld [vmem:[%s1 + $0xe4] sm:$0xff]
        %v700 = vld [vmem:[%s1 + $0xec] sm:$0xf]
        %v701 = vld [vmem:[%s1 + $0xf0] sm:$0xff]
        %v702 = vld [vmem:[%s1 + $0xf8] sm:$0xf]
        %v703 = vld [vmem:[%s1 + $0xfc] sm:$0xff]
        %v704 = vld [vmem:[%s1 + $0x104] sm:$0xf]
        %v705 = vld [vmem:[%s1 + $0x108] sm:$0xff]
        %v706 = vld [vmem:[%s1 + $0x110] sm:$0xf]
        %v707 = vld [vmem:[%s1 + $0x114] sm:$0xff]
        %v708 = vld [vmem:[%s1 + $0x11c] sm:$0xf]
        %v709 = vld [vmem:[%s1 + $0x120] sm:$0xff]
        %v710 = vld [vmem:[%s1 + $0x128] sm:$0xf]
        %v711 = vld [vmem:[%s1 + $0x12c] sm:$0xff]
        %v712 = vld [vmem:[%s1 + $0x134] sm:$0xf]
        %v713 = vld [vmem:[%s1 + $0x138] sm:$0xff]
        %v714 = vld [vmem:[%s1 + $0x140] sm:$0xf]
        %v715 = vld [vmem:[%s1 + $0x144] sm:$0xff]
        %v716 = vld [vmem:[%s1 + $0x14c] sm:$0xf]
        %v717 = vld [vmem:[%s1 + $0x150] sm:$0xff]
        %v718 = vld [vmem:[%s1 + $0x158] sm:$0xf]
        %v719 = vld [vmem:[%s1 + $0x15c] sm:$0xff]
        %v720 = vld [vmem:[%s1 + $0x164] sm:$0xf]
        %v721 = vld [vmem:[%s1 + $0x168] sm:$0xff]
        %v722 = vld [vmem:[%s1 + $0x170] sm:$0xf]
        %v723 = vld [vmem:[%s1 + $0x174] sm:$0xff]
        %v724 = vld [vmem:[%s1 + $0x17c] sm:$0xf]
        %v725 = vld [vmem:[%s1 + $0x180] sm:$0xff]
        %v726 = vld [vmem:[%s1 + $0x188] sm:$0xf]
        %v727 = vld [vmem:[%s1 + $0x18c] sm:$0xff]
        %v728 = vld [vmem:[%s1 + $0x194] sm:$0xf]
        %v729 = vld [vmem:[%s1 + $0x198] sm:$0xff]
        %v730 = vld [vmem:[%s1 + $0x1a0] sm:$0xf]
        %v731 = vld [vmem:[%s1 + $0x1a4] sm:$0xff]
        %v732 = vld [vmem:[%s1 + $0x1ac] sm:$0xf]
        %v733 = vld [vmem:[%s1 + $0x1b0] sm:$0xff]
        %v734 = vld [vmem:[%s1 + $0x1b8] sm:$0xf]
        %v735 = vld [vmem:[%s1 + $0x1bc] sm:$0xff]
        %v736 = vld [vmem:[%s1 + $0x1c4] sm:$0xf]
        %v737 = vld [vmem:[%s1 + $0x1c8] sm:$0xff]
        %v738 = vld [vmem:[%s1 + $0x1d0] sm:$0xf]
        %v739 = vld [vmem:[%s1 + $0x1d4] sm:$0xff]
        %v740 = vld [vmem:[%s1 + $0x1dc] sm:$0xf]
        %v741 = vld [vmem:[%s1 + $0x1e0] sm:$0xff]
        %v742 = vld [vmem:[%s1 + $0x1e8] sm:$0xf]
        %v743 = vld [vmem:[%s1 + $0x1ec] sm:$0xff]
        %v744 = vld [vmem:[%s1 + $0x1f4] sm:$0xf]
        %v745 = vld [vmem:[%s1 + $0x1f8] sm:$0xff]
        %v746 = vld [vmem:[%s1 + $0x200] sm:$0xf]
        %v747 = vld [vmem:[%s1 + $0x204] sm:$0xff]
        %v748 = vld [vmem:[%s1 + $0x20c] sm:$0xf]
        %v749 = vld [vmem:[%s1 + $0x210] sm:$0xff]
        %v750 = vld [vmem:[%s1 + $0x218] sm:$0xf]
        %v751 = vld [vmem:[%s1 + $0x21c] sm:$0xff]
        %v752 = vld [vmem:[%s1 + $0x224] sm:$0xf]
        %v753 = vld [vmem:[%s1 + $0x228] sm:$0xff]
        %v754 = vld [vmem:[%s1 + $0x230] sm:$0xf]
        %v755 = vld [vmem:[%s1 + $0x234] sm:$0xff]
        %v756 = vld [vmem:[%s1 + $0x23c] sm:$0xf]
        %v853 = vunpack.c.l.b16 %v661
        %v854 = vunpack.c.h.b16 %v661
        %v855 = vunpack.c.l.b16 %v662
        %v856 = vunpack.c.l.b16 %v663
        %v857 = vunpack.c.h.b16 %v663
        %v858 = vunpack.c.l.b16 %v664
        %v859 = vunpack.c.l.b16 %v665
        %v860 = vunpack.c.h.b16 %v665
        %v861 = vunpack.c.l.b16 %v666
        %v862 = vunpack.c.l.b16 %v667
        %v863 = vunpack.c.h.b16 %v667
        %v864 = vunpack.c.l.b16 %v668
        %v865 = vunpack.c.l.b16 %v669
        %v866 = vunpack.c.h.b16 %v669
        %v867 = vunpack.c.l.b16 %v670
        %v868 = vunpack.c.l.b16 %v671
        %v869 = vunpack.c.h.b16 %v671
        %v870 = vunpack.c.l.b16 %v672
        %v871 = vunpack.c.l.b16 %v673
        %v872 = vunpack.c.h.b16 %v673
        %v873 = vunpack.c.l.b16 %v674
        %v874 = vunpack.c.l.b16 %v675
        %v875 = vunpack.c.h.b16 %v675
        %v876 = vunpack.c.l.b16 %v676
        %v877 = vunpack.c.l.b16 %v677
        %v878 = vunpack.c.h.b16 %v677
        %v879 = vunpack.c.l.b16 %v678
        %v880 = vunpack.c.l.b16 %v679
        %v881 = vunpack.c.h.b16 %v679
        %v882 = vunpack.c.l.b16 %v680
        %v883 = vunpack.c.l.b16 %v681
        %v884 = vunpack.c.h.b16 %v681
        %v885 = vunpack.c.l.b16 %v682
        %v886 = vunpack.c.l.b16 %v683
        %v887 = vunpack.c.h.b16 %v683
        %v888 = vunpack.c.l.b16 %v684
        %v889 = vunpack.c.l.b16 %v685
        %v890 = vunpack.c.h.b16 %v685
        %v891 = vunpack.c.l.b16 %v686
        %v892 = vunpack.c.l.b16 %v687
        %v893 = vunpack.c.h.b16 %v687
        %v894 = vunpack.c.l.b16 %v688
        %v895 = vunpack.c.l.b16 %v689
        %v896 = vunpack.c.h.b16 %v689
        %v897 = vunpack.c.l.b16 %v690
        %v898 = vunpack.c.l.b16 %v691
        %v899 = vunpack.c.h.b16 %v691
        %v900 = vunpack.c.l.b16 %v692
        %v901 = vunpack.c.l.b16 %v693
        %v902 = vunpack.c.h.b16 %v693
        %v903 = vunpack.c.l.b16 %v694
        %v904 = vunpack.c.l.b16 %v695
        %v905 = vunpack.c.h.b16 %v695
        %v906 = vunpack.c.l.b16 %v696
        %v907 = vunpack.c.l.b16 %v697
        %v908 = vunpack.c.h.b16 %v697
        %v909 = vunpack.c.l.b16 %v698
        %v910 = vunpack.c.l.b16 %v699
        %v911 = vunpack.c.h.b16 %v699
        %v912 = vunpack.c.l.b16 %v700
        %v913 = vunpack.c.l.b16 %v701
        %v914 = vunpack.c.h.b16 %v701
        %v915 = vunpack.c.l.b16 %v702
        %v916 = vunpack.c.l.b16 %v703
        %v917 = vunpack.c.h.b16 %v703
        %v918 = vunpack.c.l.b16 %v704
        %v919 = vunpack.c.l.b16 %v705
        %v920 = vunpack.c.h.b16 %v705
        %v921 = vunpack.c.l.b16 %v706
        %v922 = vunpack.c.l.b16 %v707
        %v923 = vunpack.c.h.b16 %v707
        %v924 = vunpack.c.l.b16 %v708
        %v925 = vunpack.c.l.b16 %v709
        %v926 = vunpack.c.h.b16 %v709
        %v927 = vunpack.c.l.b16 %v710
        %v928 = vunpack.c.l.b16 %v711
        %v929 = vunpack.c.h.b16 %v711
        %v930 = vunpack.c.l.b16 %v712
        %v931 = vunpack.c.l.b16 %v713
        %v932 = vunpack.c.h.b16 %v713
        %v933 = vunpack.c.l.b16 %v714
        %v934 = vunpack.c.l.b16 %v715
        %v935 = vunpack.c.h.b16 %v715
        %v936 = vunpack.c.l.b16 %v716
        %v937 = vunpack.c.l.b16 %v717
        %v938 = vunpack.c.h.b16 %v717
        %v939 = vunpack.c.l.b16 %v718
        %v940 = vunpack.c.l.b16 %v719
        %v941 = vunpack.c.h.b16 %v719
        %v942 = vunpack.c.l.b16 %v720
        %v943 = vunpack.c.l.b16 %v721
        %v944 = vunpack.c.h.b16 %v721
        %v945 = vunpack.c.l.b16 %v722
        %v946 = vunpack.c.l.b16 %v723
        %v947 = vunpack.c.h.b16 %v723
        %v948 = vunpack.c.l.b16 %v724
        %v949 = vunpack.c.l.b16 %v725
        %v950 = vunpack.c.h.b16 %v725
        %v951 = vunpack.c.l.b16 %v726
        %v952 = vunpack.c.l.b16 %v727
        %v953 = vunpack.c.h.b16 %v727
        %v954 = vunpack.c.l.b16 %v728
        %v955 = vunpack.c.l.b16 %v729
        %v956 = vunpack.c.h.b16 %v729
        %v957 = vunpack.c.l.b16 %v730
        %v958 = vunpack.c.l.b16 %v731
        %v959 = vunpack.c.h.b16 %v731
        %v960 = vunpack.c.l.b16 %v732
        %v961 = vunpack.c.l.b16 %v733
        %v962 = vunpack.c.h.b16 %v733
        %v963 = vunpack.c.l.b16 %v734
        %v964 = vunpack.c.l.b16 %v735
        %v965 = vunpack.c.h.b16 %v735
        %v966 = vunpack.c.l.b16 %v736
        %v967 = vunpack.c.l.b16 %v737
        %v968 = vunpack.c.h.b16 %v737
        %v969 = vunpack.c.l.b16 %v738
        %v970 = vunpack.c.l.b16 %v739
        %v971 = vunpack.c.h.b16 %v739
        %v972 = vunpack.c.l.b16 %v740
        %v973 = vunpack.c.l.b16 %v741
        %v974 = vunpack.c.h.b16 %v741
        %v975 = vunpack.c.l.b16 %v742
        %v976 = vunpack.c.l.b16 %v743
        %v977 = vunpack.c.h.b16 %v743
        %v978 = vunpack.c.l.b16 %v744
        %v979 = vunpack.c.l.b16 %v745
        %v980 = vunpack.c.h.b16 %v745
        %v981 = vunpack.c.l.b16 %v746
        %v982 = vunpack.c.l.b16 %v747
        %v983 = vunpack.c.h.b16 %v747
        %v984 = vunpack.c.l.b16 %v748
        %v985 = vunpack.c.l.b16 %v749
        %v986 = vunpack.c.h.b16 %v749
        %v987 = vunpack.c.l.b16 %v750
        %v988 = vunpack.c.l.b16 %v751
        %v989 = vunpack.c.h.b16 %v751
        %v990 = vunpack.c.l.b16 %v752
        %v991 = vunpack.c.l.b16 %v753
        %v992 = vunpack.c.h.b16 %v753
        %v993 = vunpack.c.l.b16 %v754
        %v994 = vunpack.c.l.b16 %v755
        %v995 = vunpack.c.h.b16 %v755
        %v996 = vunpack.c.l.b16 %v756
        %v997 = vpack.c.b16 %v856, %v853
        %v998 = vpack.c.b16 %v857, %v854
        %v999 = vpack.c.b16 %v858, %v855
        %v1000 = vpack.c.b16 %v862, %v859
        %v1001 = vpack.c.b16 %v863, %v860
        %v1002 = vpack.c.b16 %v864, %v861
        %v1003 = vpack.c.b16 %v868, %v865
        %v1004 = vpack.c.b16 %v869, %v866
        %v1005 = vpack.c.b16 %v870, %v867
        %v1006 = vpack.c.b16 %v874, %v871
        %v1007 = vpack.c.b16 %v875, %v872
        %v1008 = vpack.c.b16 %v876, %v873
        %v1009 = vpack.c.b16 %v880, %v877
        %v1010 = vpack.c.b16 %v881, %v878
        %v1011 = vpack.c.b16 %v882, %v879
        %v1012 = vpack.c.b16 %v886, %v883
        %v1013 = vpack.c.b16 %v887, %v884
        %v1014 = vpack.c.b16 %v888, %v885
        %v1015 = vpack.c.b16 %v892, %v889
        %v1016 = vpack.c.b16 %v893, %v890
        %v1017 = vpack.c.b16 %v894, %v891
        %v1018 = vpack.c.b16 %v898, %v895
        %v1019 = vpack.c.b16 %v899, %v896
        %v1020 = vpack.c.b16 %v900, %v897
        %v1021 = vpack.c.b16 %v904, %v901
        %v1022 = vpack.c.b16 %v905, %v902
        %v1023 = vpack.c.b16 %v906, %v903
        %v1024 = vpack.c.b16 %v910, %v907
        %v1025 = vpack.c.b16 %v911, %v908
        %v1026 = vpack.c.b16 %v912, %v909
        %v1027 = vpack.c.b16 %v916, %v913
        %v1028 = vpack.c.b16 %v917, %v914
        %v1029 = vpack.c.b16 %v918, %v915
        %v1030 = vpack.c.b16 %v922, %v919
        %v1031 = vpack.c.b16 %v923, %v920
        %v1032 = vpack.c.b16 %v924, %v921
        %v1033 = vpack.c.b16 %v928, %v925
        %v1034 = vpack.c.b16 %v929, %v926
        %v1035 = vpack.c.b16 %v930, %v927
        %v1036 = vpack.c.b16 %v934, %v931
        %v1037 = vpack.c.b16 %v935, %v932
        %v1038 = vpack.c.b16 %v936, %v933
        %v1039 = vpack.c.b16 %v940, %v937
        %v1040 = vpack.c.b16 %v941, %v938
        %v1041 = vpack.c.b16 %v942, %v939
        %v1042 = vpack.c.b16 %v946, %v943
        %v1043 = vpack.c.b16 %v947, %v944
        %v1044 = vpack.c.b16 %v948, %v945
        %v1045 = vpack.c.b16 %v952, %v949
        %v1046 = vpack.c.b16 %v953, %v950
        %v1047 = vpack.c.b16 %v954, %v951
        %v1048 = vpack.c.b16 %v958, %v955
        %v1049 = vpack.c.b16 %v959, %v956
        %v1050 = vpack.c.b16 %v960, %v957
        %v1051 = vpack.c.b16 %v964, %v961
        %v1052 = vpack.c.b16 %v965, %v962
        %v1053 = vpack.c.b16 %v966, %v963
        %v1054 = vpack.c.b16 %v970, %v967
        %v1055 = vpack.c.b16 %v971, %v968
        %v1056 = vpack.c.b16 %v972, %v969
        %v1057 = vpack.c.b16 %v976, %v973
        %v1058 = vpack.c.b16 %v977, %v974
        %v1059 = vpack.c.b16 %v978, %v975
        %v1060 = vpack.c.b16 %v982, %v979
        %v1061 = vpack.c.b16 %v983, %v980
        %v1062 = vpack.c.b16 %v984, %v981
        %v1063 = vpack.c.b16 %v988, %v985
        %v1064 = vpack.c.b16 %v989, %v986
        %v1065 = vpack.c.b16 %v990, %v987
        %v1066 = vpack.c.b16 %v994, %v991
        %v1067 = vpack.c.b16 %v995, %v992
        %v1068 = vpack.c.b16 %v996, %v993
        %1141 = vmatprep.subr.bf16.mxu0 %v998
        %1142 = vmatpush1.bf16.msra.mxu0 %v997
        %1143 = vmatprep.subr.bf16.mxu0 %v1001
        %1144 = vmatpush1.bf16.msra.mxu0 %v1000
        %1145 = vmatprep.subr.bf16.mxu0 %v1004
        %1146 = vmatpush1.bf16.msra.mxu0 %v1003
        %1147 = vmatprep.subr.bf16.mxu0 %v1007
        %1148 = vmatpush1.bf16.msra.mxu0 %v1006
        %1149 = vmatprep.subr.bf16.mxu0 %v1010
        %1150 = vmatpush1.bf16.msra.mxu0 %v1009
        %1151 = vmatprep.subr.bf16.mxu0 %v1013
        %1152 = vmatpush1.bf16.msra.mxu0 %v1012
        %1153 = vmatprep.subr.bf16.mxu0 %v1016
        %1154 = vmatpush1.bf16.msra.mxu0 %v1015
        %1155 = vmatprep.subr.bf16.mxu0 %v1019
        %1156 = vmatpush1.bf16.msra.mxu0 %v1018
        %1157 = vmatprep.subr.bf16.mxu0 %v1022
        %1158 = vmatpush1.bf16.msra.mxu0 %v1021
        %1159 = vmatprep.subr.bf16.mxu0 %v1025
        %1160 = vmatpush1.bf16.msra.mxu0 %v1024
        %1161 = vmatprep.subr.bf16.mxu0 %v1028
        %1162 = vmatpush1.bf16.msra.mxu0 %v1027
        %1163 = vmatprep.subr.bf16.mxu0 %v1031
        %1164 = vmatpush1.bf16.msra.mxu0 %v1030
        %1165 = vmatprep.subr.bf16.mxu0 %v1034
        %1166 = vmatpush1.bf16.msra.mxu0 %v1033
        %1167 = vmatprep.subr.bf16.mxu0 %v1037
        %1168 = vmatpush1.bf16.msra.mxu0 %v1036
        %1169 = vmatprep.subr.bf16.mxu0 %v1040
        %1170 = vmatpush1.bf16.msra.mxu0 %v1039
        %1171 = vmatprep.subr.bf16.mxu0 %v1043
        %1172 = vmatpush1.bf16.msra.mxu0 %v1042
        %1173 = vmatprep.mubr.bf16.mxu0 %v637
        %1174 = vmatmul.mubr.bf16.gmra.mrb[0].mxu0 %v619
        %v1175 = vpop.f32.mrb[0].mxu0
        %v1176 = vadd.f32 0.0, %v1175
        %v1177 = vpop.f32.mrb[0].mxu0
        %v1178 = vadd.f32 0.0, %v1177
        %v1179 = vpop.f32.mrb[0].mxu0
        %v1180 = vadd.f32 0.0, %v1179
        %v1181 = vpop.f32.mrb[0].mxu0
        %v1182 = vadd.f32 0.0, %v1181
        %1183 = vmatprep.mubr.bf16.mxu0 %v645
        %1184 = vmatmul.mubr.bf16.gmra.mrb[0].mxu0 %v620
        %v1185 = vpop.f32.mrb[0].mxu0
        %v1186 = vadd.f32 0.0, %v1185
        %v1187 = vpop.f32.mrb[0].mxu0
        %v1188 = vadd.f32 0.0, %v1187
        %v1189 = vpop.f32.mrb[0].mxu0
        %v1190 = vadd.f32 0.0, %v1189
        %v1191 = vpop.f32.mrb[0].mxu0
        %v1192 = vadd.f32 0.0, %v1191
        %1193 = vmatprep.mubr.bf16.mxu0 %v648
        %1194 = vmatmul.mubr.bf16.gmra.mrb[0].mxu0 %v621
        %v1195 = vpop.f32.mrb[0].mxu0
        %v1196 = vadd.f32 0.0, %v1195
        %v1197 = vpop.f32.mrb[0].mxu0
        %v1198 = vpop.f32.mrb[0].mxu0
        %v1199 = vpop.f32.mrb[0].mxu0
        %1200 = vdwg.mxu0
        %1201 = vmatprep.subr.bf16.mxu0 %v1046
        %1202 = vmatpush1.bf16.msra.mxu0 %v1045
        %1203 = vmatprep.subr.bf16.mxu0 %v1049
        %1204 = vmatpush1.bf16.msra.mxu0 %v1048
        %1205 = vmatprep.subr.bf16.mxu0 %v1052
        %1206 = vmatpush1.bf16.msra.mxu0 %v1051
        %1207 = vmatprep.subr.bf16.mxu0 %v1055
        %1208 = vmatpush1.bf16.msra.mxu0 %v1054
        %1209 = vmatprep.subr.bf16.mxu0 %v1058
        %1210 = vmatpush1.bf16.msra.mxu0 %v1057
        %1211 = vmatprep.subr.bf16.mxu0 %v1061
        %1212 = vmatpush1.bf16.msra.mxu0 %v1060
        %1213 = vmatprep.subr.bf16.mxu0 %v1064
        %1214 = vmatpush1.bf16.msra.mxu0 %v1063
        %1215 = vmatprep.subr.bf16.mxu0 %v1067
        %1216 = vmatpush1.bf16.msra.mxu0 %v1066
        %1217 = vmatprep.subr.bf16.mxu0 0
        %1218 = vmatpush1.bf16.msra.mxu0 0
        %1219 = vmatprep.subr.bf16.mxu0 0
        %1220 = vmatpush1.bf16.msra.mxu0 0
        %1221 = vmatprep.subr.bf16.mxu0 0
        %1222 = vmatpush1.bf16.msra.mxu0 0
        %1223 = vmatprep.subr.bf16.mxu0 0
        %1224 = vmatpush1.bf16.msra.mxu0 0
        %1225 = vmatprep.subr.bf16.mxu0 0
        %1226 = vmatpush1.bf16.msra.mxu0 0
        %1227 = vmatprep.subr.bf16.mxu0 0
        %1228 = vmatpush1.bf16.msra.mxu0 0
        %1229 = vmatprep.subr.bf16.mxu0 0
        %1230 = vmatpush1.bf16.msra.mxu0 0
        %1231 = vmatprep.subr.bf16.mxu0 0
        %1232 = vmatpush1.bf16.msra.mxu0 0
        %1233 = vmatprep.mubr.bf16.mxu0 0
        %1234 = vmatmul.mubr.bf16.gmra.mrb[0].mxu0 %v655
        %v1235 = vpop.f32.mrb[0].mxu0
        %v1236 = vadd.f32 %v1176, %v1235
        %v1237 = vpop.f32.mrb[0].mxu0
        %v1238 = vadd.f32 %v1178, %v1237
        %v1239 = vpop.f32.mrb[0].mxu0
        %v1240 = vadd.f32 %v1180, %v1239
        %v1241 = vpop.f32.mrb[0].mxu0
        %v1242 = vadd.f32 %v1182, %v1241
        %1243 = vmatprep.mubr.bf16.mxu0 0
        %1244 = vmatmul.mubr.bf16.gmra.mrb[0].mxu0 %v657
        %v1245 = vpop.f32.mrb[0].mxu0
        %v1246 = vadd.f32 %v1186, %v1245
        %v1247 = vpop.f32.mrb[0].mxu0
        %v1248 = vadd.f32 %v1188, %v1247
        %v1249 = vpop.f32.mrb[0].mxu0
        %v1250 = vadd.f32 %v1190, %v1249
        %v1251 = vpop.f32.mrb[0].mxu0
        %v1252 = vadd.f32 %v1192, %v1251
        %1253 = vmatprep.mubr.bf16.mxu0 0
        %1254 = vmatmul.mubr.bf16.gmra.mrb[0].mxu0 %v656
        %v1255 = vpop.f32.mrb[0].mxu0
        %v1256 = vadd.f32 %v1196, %v1255
        %v1257 = vpop.f32.mrb[0].mxu0
        %v1258 = vpop.f32.mrb[0].mxu0
        %v1259 = vpop.f32.mrb[0].mxu0
        %1260 = vdwg.mxu0
        %1261 = vmatprep.subr.bf16.mxu0 0
        %1262 = vmatpush1.bf16.msra.mxu0 %v999
        %1263 = vmatprep.subr.bf16.mxu0 0
        %1264 = vmatpush1.bf16.msra.mxu0 %v1002
        %1265 = vmatprep.subr.bf16.mxu0 0
        %1266 = vmatpush1.bf16.msra.mxu0 %v1005
        %1267 = vmatprep.subr.bf16.mxu0 0
        %1268 = vmatpush1.bf16.msra.mxu0 %v1008
        %1269 = vmatprep.subr.bf16.mxu0 0
        %1270 = vmatpush1.bf16.msra.mxu0 %v1011
        %1271 = vmatprep.subr.bf16.mxu0 0
        %1272 = vmatpush1.bf16.msra.mxu0 %v1014
        %1273 = vmatprep.subr.bf16.mxu0 0
        %1274 = vmatpush1.bf16.msra.mxu0 %v1017
        %1275 = vmatprep.subr.bf16.mxu0 0
        %1276 = vmatpush1.bf16.msra.mxu0 %v1020
        %1277 = vmatprep.subr.bf16.mxu0 0
        %1278 = vmatpush1.bf16.msra.mxu0 %v1023
        %1279 = vmatprep.subr.bf16.mxu0 0
        %1280 = vmatpush1.bf16.msra.mxu0 %v1026
        %1281 = vmatprep.subr.bf16.mxu0 0
        %1282 = vmatpush1.bf16.msra.mxu0 %v1029
        %1283 = vmatprep.subr.bf16.mxu0 0
        %1284 = vmatpush1.bf16.msra.mxu0 %v1032
        %1285 = vmatprep.subr.bf16.mxu0 0
        %1286 = vmatpush1.bf16.msra.mxu0 %v1035
        %1287 = vmatprep.subr.bf16.mxu0 0
        %1288 = vmatpush1.bf16.msra.mxu0 %v1038
        %1289 = vmatprep.subr.bf16.mxu0 0
        %1290 = vmatpush1.bf16.msra.mxu0 %v1041
        %1291 = vmatprep.subr.bf16.mxu0 0
        %1292 = vmatpush1.bf16.msra.mxu0 %v1044
        %1293 = vmatprep.mubr.bf16.mxu0 %v637
        %1294 = vmatmul.mubr.bf16.gmra.mrb[0].mxu0 %v619
        %v1295 = vpop.f32.mrb[0].mxu0
        %v1296 = vadd.f32 0.0, %v1295
        %v1297 = vpop.f32.mrb[0].mxu0
        %v1298 = vpop.f32.mrb[0].mxu0
        %v1299 = vadd.f32 0.0, %v1298
        %v1300 = vpop.f32.mrb[0].mxu0
        %1301 = vmatprep.mubr.bf16.mxu0 %v645
        %1302 = vmatmul.mubr.bf16.gmra.mrb[0].mxu0 %v620
        %v1303 = vpop.f32.mrb[0].mxu0
        %v1304 = vadd.f32 0.0, %v1303
        %v1305 = vpop.f32.mrb[0].mxu0
        %v1306 = vpop.f32.mrb[0].mxu0
        %v1307 = vadd.f32 0.0, %v1306
        %v1308 = vpop.f32.mrb[0].mxu0
        %1309 = vmatprep.mubr.bf16.mxu0 %v648
        %1310 = vmatmul.mubr.bf16.gmra.mrb[0].mxu0 %v621
        %v1311 = vpop.f32.mrb[0].mxu0
        %v1312 = vpop.f32.mrb[0].mxu0
        %v1313 = vpop.f32.mrb[0].mxu0
        %v1314 = vpop.f32.mrb[0].mxu0
        %1315 = vdwg.mxu0
        %1316 = vmatprep.subr.bf16.mxu0 0
        %1317 = vmatpush1.bf16.msra.mxu0 %v1047
        %1318 = vmatprep.subr.bf16.mxu0 0
        %1319 = vmatpush1.bf16.msra.mxu0 %v1050
        %1320 = vmatprep.subr.bf16.mxu0 0
        %1321 = vmatpush1.bf16.msra.mxu0 %v1053
        %1322 = vmatprep.subr.bf16.mxu0 0
        %1323 = vmatpush1.bf16.msra.mxu0 %v1056
        %1324 = vmatprep.subr.bf16.mxu0 0
        %1325 = vmatpush1.bf16.msra.mxu0 %v1059
        %1326 = vmatprep.subr.bf16.mxu0 0
        %1327 = vmatpush1.bf16.msra.mxu0 %v1062
        %1328 = vmatprep.subr.bf16.mxu0 0
        %1329 = vmatpush1.bf16.msra.mxu0 %v1065
        %1330 = vmatprep.subr.bf16.mxu0 0
        %1331 = vmatpush1.bf16.msra.mxu0 %v1068
        %1332 = vmatprep.subr.bf16.mxu0 0
        %1333 = vmatpush1.bf16.msra.mxu0 0
        %1334 = vmatprep.subr.bf16.mxu0 0
        %1335 = vmatpush1.bf16.msra.mxu0 0
        %1336 = vmatprep.subr.bf16.mxu0 0
        %1337 = vmatpush1.bf16.msra.mxu0 0
        %1338 = vmatprep.subr.bf16.mxu0 0
        %1339 = vmatpush1.bf16.msra.mxu0 0
        %1340 = vmatprep.subr.bf16.mxu0 0
        %1341 = vmatpush1.bf16.msra.mxu0 0
        %1342 = vmatprep.subr.bf16.mxu0 0
        %1343 = vmatpush1.bf16.msra.mxu0 0
        %1344 = vmatprep.subr.bf16.mxu0 0
        %1345 = vmatpush1.bf16.msra.mxu0 0
        %1346 = vmatprep.subr.bf16.mxu0 0
        %1347 = vmatpush1.bf16.msra.mxu0 0
        %1348 = vmatprep.mubr.bf16.mxu0 0
        %1349 = vmatmul.mubr.bf16.gmra.mrb[0].mxu0 %v655
        %v1350 = vpop.f32.mrb[0].mxu0
        %v1351 = vadd.f32 %v1296, %v1350
        %v1352 = vpop.f32.mrb[0].mxu0
        %v1353 = vpop.f32.mrb[0].mxu0
        %v1354 = vadd.f32 %v1299, %v1353
        %v1355 = vpop.f32.mrb[0].mxu0
        %1356 = vmatprep.mubr.bf16.mxu0 0
        %1357 = vmatmul.mubr.bf16.gmra.mrb[0].mxu0 %v657
        %v1358 = vpop.f32.mrb[0].mxu0
        %v1359 = vadd.f32 %v1304, %v1358
        %v1360 = vpop.f32.mrb[0].mxu0
        %v1361 = vpop.f32.mrb[0].mxu0
        %v1362 = vadd.f32 %v1307, %v1361
        %v1363 = vpop.f32.mrb[0].mxu0
        %1364 = vmatprep.mubr.bf16.mxu0 0
        %1365 = vmatmul.mubr.bf16.gmra.mrb[0].mxu0 %v656
        %v1366 = vpop.f32.mrb[0].mxu0
        %v1367 = vpop.f32.mrb[0].mxu0
        %v1368 = vpop.f32.mrb[0].mxu0
        %v1369 = vpop.f32.mrb[0].mxu0
        %1370 = vdwg.mxu0
        %v1371 = vld [vmem:[%s2] sm:$0xff]
        %v1372 = vld [vmem:[%s2 + $0x8] sm:$0xff]
        %v1373 = vld [vmem:[%s2 + $0x10] sm:$0xff]
        %v1374 = vld [vmem:[%s2 + $0x18] sm:$0xff]
        %v1375 = vld [vmem:[%s2 + $0x20] sm:$0xff]
        %v1376 = vld [vmem:[%s2 + $0x28] sm:$0xff]
        %v1377 = vld [vmem:[%s2 + $0x30] sm:$0xff]
        %v1378 = vld [vmem:[%s2 + $0x38] sm:$0xff]
        %v1379 = vld [vmem:[%s2 + $0x40] sm:$0xff]
        %v1380 = vld [vmem:[%s2 + $0x48] sm:$0xff]
        %v1381 = vld [vmem:[%s2 + $0x50] sm:$0xff]
        %v1382 = vld [vmem:[%s2 + $0x58] sm:$0xff]
        %v1383 = vld [vmem:[%s2 + $0x60] sm:$0xff]
        %v1384 = vld [vmem:[%s2 + $0x68] sm:$0xff]
        %v1385 = vld [vmem:[%s2 + $0x70] sm:$0xff]
        %v1386 = vld [vmem:[%s2 + $0x78] sm:$0xff]
        %v1387 = vld [vmem:[%s2 + $0x80] sm:$0xff]
        %v1388 = vld [vmem:[%s2 + $0x88] sm:$0xff]
        %v1389 = vld [vmem:[%s2 + $0x90] sm:$0xff]
        %v1390 = vld [vmem:[%s2 + $0x98] sm:$0xff]
        %v1391 = vld [vmem:[%s2 + $0xa0] sm:$0xff]
        %v1392 = vld [vmem:[%s2 + $0xa8] sm:$0xff]
        %v1393 = vld [vmem:[%s2 + $0xb0] sm:$0xff]
        %v1394 = vld [vmem:[%s2 + $0xb8] sm:$0xff]
        %v1395 = vld [vmem:[%s2 + $0xc0] sm:$0xff]
        %v1396 = vld [vmem:[%s2 + $0xc8] sm:$0xff]
        %v1397 = vld [vmem:[%s2 + $0xd0] sm:$0xff]
        %v1398 = vld [vmem:[%s2 + $0xd8] sm:$0xff]
        %v1399 = vld [vmem:[%s2 + $0xe0] sm:$0xff]
        %v1400 = vld [vmem:[%s2 + $0xe8] sm:$0xff]
        %v1401 = vld [vmem:[%s2 + $0xf0] sm:$0xff]
        %v1402 = vld [vmem:[%s2 + $0xf8] sm:$0xff]
        %vm1403 = vsmask.f32 6400
        %v1404 = vrot.slane %v627, 1
        %v1405 = vrot.slane %v629, 2
        %v1406 = vor.u32 %v1404, %v1405
        %v1407 = vrot.slane %v638, 1
        %v1408 = vrot.slane %v634, 2
        %v1409 = vor.u32 %v1407, %v1408
        %v1410 = vsel %vm1403, %v1406, %v1409
        %v1412 = vshrl.u32 %v637, 16
        %v1414 = vrot.slane %v1412, 1
        %v1415 = vshll.u32 %v637, 16
        %v1417 = vrot.slane %v1415, 2
        %v1418 = vor.u32 %v1414, %v1417
        %v1420 = vshrl.u32 %v645, 16
        %v1422 = vrot.slane %v1420, 1
        %v1423 = vshll.u32 %v645, 16
        %v1425 = vrot.slane %v1423, 2
        %v1426 = vor.u32 %v1422, %v1425
        %v1427 = vsel %vm1403, %v1418, %v1426
        %v1428 = vrot.slane %v646, 1
        %v1429 = vrot.slane %v642, 2
        %v1430 = vor.u32 %v1428, %v1429
        %v1431 = vsel %vm1403, %v1409, %v1430
        %v1433 = vshrl.u32 %v648, 16
        %v1435 = vrot.slane %v1433, 1
        %v1436 = vshll.u32 %v648, 16
        %v1438 = vrot.slane %v1436, 2
        %v1439 = vor.u32 %v1435, %v1438
        %v1440 = vsel %vm1403, %v1426, %v1439
        %v1479 = vunpack.c.l.b16 %v1371
        %v1480 = vunpack.c.h.b16 %v1371
        %v1481 = vunpack.c.l.b16 %v1372
        %v1482 = vunpack.c.h.b16 %v1372
        %v1483 = vunpack.c.l.b16 %v1373
        %v1484 = vunpack.c.h.b16 %v1373
        %v1485 = vunpack.c.l.b16 %v1374
        %v1486 = vunpack.c.h.b16 %v1374
        %v1487 = vunpack.c.l.b16 %v1375
        %v1488 = vunpack.c.h.b16 %v1375
        %v1489 = vunpack.c.l.b16 %v1376
        %v1490 = vunpack.c.h.b16 %v1376
        %v1491 = vunpack.c.l.b16 %v1377
        %v1492 = vunpack.c.h.b16 %v1377
        %v1493 = vunpack.c.l.b16 %v1378
        %v1494 = vunpack.c.h.b16 %v1378
        %v1495 = vunpack.c.l.b16 %v1379
        %v1496 = vunpack.c.h.b16 %v1379
        %v1497 = vunpack.c.l.b16 %v1380
        %v1498 = vunpack.c.h.b16 %v1380
        %v1499 = vunpack.c.l.b16 %v1381
        %v1500 = vunpack.c.h.b16 %v1381
        %v1501 = vunpack.c.l.b16 %v1382
        %v1502 = vunpack.c.h.b16 %v1382
        %v1503 = vunpack.c.l.b16 %v1383
        %v1504 = vunpack.c.h.b16 %v1383
        %v1505 = vunpack.c.l.b16 %v1384
        %v1506 = vunpack.c.h.b16 %v1384
        %v1507 = vunpack.c.l.b16 %v1385
        %v1508 = vunpack.c.h.b16 %v1385
        %v1509 = vunpack.c.l.b16 %v1386
        %v1510 = vunpack.c.h.b16 %v1386
        %v1511 = vunpack.c.l.b16 %v1387
        %v1512 = vunpack.c.h.b16 %v1387
        %v1513 = vunpack.c.l.b16 %v1388
        %v1514 = vunpack.c.h.b16 %v1388
        %v1515 = vunpack.c.l.b16 %v1389
        %v1516 = vunpack.c.h.b16 %v1389
        %v1517 = vunpack.c.l.b16 %v1390
        %v1518 = vunpack.c.h.b16 %v1390
        %v1519 = vunpack.c.l.b16 %v1391
        %v1520 = vunpack.c.h.b16 %v1391
        %v1521 = vunpack.c.l.b16 %v1392
        %v1522 = vunpack.c.h.b16 %v1392
        %v1523 = vunpack.c.l.b16 %v1393
        %v1524 = vunpack.c.h.b16 %v1393
        %v1525 = vunpack.c.l.b16 %v1394
        %v1526 = vunpack.c.h.b16 %v1394
        %v1527 = vunpack.c.l.b16 %v1395
        %v1528 = vunpack.c.h.b16 %v1395
        %v1529 = vunpack.c.l.b16 %v1396
        %v1530 = vunpack.c.h.b16 %v1396
        %v1531 = vunpack.c.l.b16 %v1397
        %v1532 = vunpack.c.h.b16 %v1397
        %v1533 = vunpack.c.l.b16 %v1398
        %v1534 = vunpack.c.h.b16 %v1398
        %v1535 = vunpack.c.l.b16 %v1399
        %v1536 = vunpack.c.h.b16 %v1399
        %v1537 = vunpack.c.l.b16 %v1400
        %v1538 = vunpack.c.h.b16 %v1400
        %v1539 = vunpack.c.l.b16 %v1401
        %v1540 = vunpack.c.h.b16 %v1401
        %v1541 = vunpack.c.l.b16 %v1402
        %v1542 = vunpack.c.h.b16 %v1402
        %v1543 = vpack.c.b16 %v1481, %v1479
        %v1544 = vpack.c.b16 %v1482, %v1480
        %v1545 = vpack.c.b16 %v1485, %v1483
        %v1546 = vpack.c.b16 %v1486, %v1484
        %v1547 = vpack.c.b16 %v1489, %v1487
        %v1548 = vpack.c.b16 %v1490, %v1488
        %v1549 = vpack.c.b16 %v1493, %v1491
        %v1550 = vpack.c.b16 %v1494, %v1492
        %v1551 = vpack.c.b16 %v1497, %v1495
        %v1552 = vpack.c.b16 %v1498, %v1496
        %v1553 = vpack.c.b16 %v1501, %v1499
        %v1554 = vpack.c.b16 %v1502, %v1500
        %v1555 = vpack.c.b16 %v1505, %v1503
        %v1556 = vpack.c.b16 %v1506, %v1504
        %v1557 = vpack.c.b16 %v1509, %v1507
        %v1558 = vpack.c.b16 %v1510, %v1508
        %v1559 = vpack.c.b16 %v1513, %v1511
        %v1560 = vpack.c.b16 %v1514, %v1512
        %v1561 = vpack.c.b16 %v1517, %v1515
        %v1562 = vpack.c.b16 %v1518, %v1516
        %v1563 = vpack.c.b16 %v1521, %v1519
        %v1564 = vpack.c.b16 %v1522, %v1520
        %v1565 = vpack.c.b16 %v1525, %v1523
        %v1566 = vpack.c.b16 %v1526, %v1524
        %v1567 = vpack.c.b16 %v1529, %v1527
        %v1568 = vpack.c.b16 %v1530, %v1528
        %v1569 = vpack.c.b16 %v1533, %v1531
        %v1570 = vpack.c.b16 %v1534, %v1532
        %v1571 = vpack.c.b16 %v1537, %v1535
        %v1572 = vpack.c.b16 %v1538, %v1536
        %v1573 = vpack.c.b16 %v1541, %v1539
        %v1574 = vpack.c.b16 %v1542, %v1540
        %1607 = vmatprep.subr.bf16.mxu0 %v1544
        %1608 = vmatpush1.bf16.msra.mxu0 %v1543
        %1609 = vmatprep.subr.bf16.mxu0 %v1546
        %1610 = vmatpush1.bf16.msra.mxu0 %v1545
        %1611 = vmatprep.subr.bf16.mxu0 %v1548
        %1612 = vmatpush1.bf16.msra.mxu0 %v1547
        %1613 = vmatprep.subr.bf16.mxu0 %v1550
        %1614 = vmatpush1.bf16.msra.mxu0 %v1549
        %1615 = vmatprep.subr.bf16.mxu0 %v1552
        %1616 = vmatpush1.bf16.msra.mxu0 %v1551
        %1617 = vmatprep.subr.bf16.mxu0 %v1554
        %1618 = vmatpush1.bf16.msra.mxu0 %v1553
        %1619 = vmatprep.subr.bf16.mxu0 %v1556
        %1620 = vmatpush1.bf16.msra.mxu0 %v1555
        %1621 = vmatprep.subr.bf16.mxu0 %v1558
        %1622 = vmatpush1.bf16.msra.mxu0 %v1557
        %1623 = vmatprep.subr.bf16.mxu0 %v1560
        %1624 = vmatpush1.bf16.msra.mxu0 %v1559
        %1625 = vmatprep.subr.bf16.mxu0 %v1562
        %1626 = vmatpush1.bf16.msra.mxu0 %v1561
        %1627 = vmatprep.subr.bf16.mxu0 %v1564
        %1628 = vmatpush1.bf16.msra.mxu0 %v1563
        %1629 = vmatprep.subr.bf16.mxu0 %v1566
        %1630 = vmatpush1.bf16.msra.mxu0 %v1565
        %1631 = vmatprep.subr.bf16.mxu0 %v1568
        %1632 = vmatpush1.bf16.msra.mxu0 %v1567
        %1633 = vmatprep.subr.bf16.mxu0 %v1570
        %1634 = vmatpush1.bf16.msra.mxu0 %v1569
        %1635 = vmatprep.subr.bf16.mxu0 %v1572
        %1636 = vmatpush1.bf16.msra.mxu0 %v1571
        %1637 = vmatprep.subr.bf16.mxu0 %v1574
        %1638 = vmatpush1.bf16.msra.mxu0 %v1573
        %1639 = vmatprep.mubr.bf16.mxu0 %v1427
        %1640 = vmatmul.mubr.bf16.gmra.mrb[0].mxu0 %v1410
        %v1641 = vpop.f32.mrb[0].mxu0
        %v1642 = vadd.f32 0.0, %v1641
        %v1643 = vpop.f32.mrb[0].mxu0
        %v1644 = vadd.f32 0.0, %v1643
        %v1645 = vpop.f32.mrb[0].mxu0
        %v1646 = vadd.f32 0.0, %v1645
        %v1647 = vpop.f32.mrb[0].mxu0
        %v1648 = vadd.f32 0.0, %v1647
        %1649 = vmatprep.mubr.bf16.mxu0 %v1440
        %1650 = vmatmul.mubr.bf16.gmra.mrb[0].mxu0 %v1431
        %v1651 = vpop.f32.mrb[0].mxu0
        %v1652 = vadd.f32 0.0, %v1651
        %v1653 = vpop.f32.mrb[0].mxu0
        %v1654 = vadd.f32 0.0, %v1653
        %v1655 = vpop.f32.mrb[0].mxu0
        %v1656 = vadd.f32 0.0, %v1655
        %v1657 = vpop.f32.mrb[0].mxu0
        %v1658 = vadd.f32 0.0, %v1657
        %1659 = vmatprep.mubr.bf16.mxu0 %v1439
        %1660 = vmatmul.mubr.bf16.gmra.mrb[0].mxu0 %v1430
        %v1661 = vpop.f32.mrb[0].mxu0
        %v1662 = vpop.f32.mrb[0].mxu0
        %v1663 = vpop.f32.mrb[0].mxu0
        %v1664 = vpop.f32.mrb[0].mxu0
        %1665 = vdwg.mxu0
        %v1666 = vld [vmem:[%s3] sm:$0xf]
        %v1667 = vld [vmem:[%s3 + $0x4] sm:$0xf]
        %v1668 = vld [vmem:[%s3 + $0x8] sm:$0xf]
        %v1669 = vld [vmem:[%s3 + $0xc] sm:$0xf]
        %v1670 = vld [vmem:[%s3 + $0x10] sm:$0xf]
        %v1671 = vld [vmem:[%s3 + $0x14] sm:$0xf]
        %v1672 = vld [vmem:[%s3 + $0x18] sm:$0xf]
        %v1673 = vld [vmem:[%s3 + $0x1c] sm:$0xf]
        %v1674 = vld [vmem:[%s3 + $0x20] sm:$0xf]
        %v1675 = vld [vmem:[%s3 + $0x24] sm:$0xf]
        %v1676 = vld [vmem:[%s3 + $0x28] sm:$0xf]
        %v1677 = vld [vmem:[%s3 + $0x2c] sm:$0xf]
        %v1678 = vld [vmem:[%s3 + $0x30] sm:$0xf]
        %v1679 = vld [vmem:[%s3 + $0x34] sm:$0xf]
        %v1680 = vld [vmem:[%s3 + $0x38] sm:$0xf]
        %v1681 = vld [vmem:[%s3 + $0x3c] sm:$0xf]
        %v1682 = vld [vmem:[%s3 + $0x40] sm:$0xf]
        %v1683 = vld [vmem:[%s3 + $0x44] sm:$0xf]
        %v1684 = vld [vmem:[%s3 + $0x48] sm:$0xf]
        %v1685 = vld [vmem:[%s3 + $0x4c] sm:$0xf]
        %v1686 = vld [vmem:[%s3 + $0x50] sm:$0xf]
        %v1687 = vld [vmem:[%s3 + $0x54] sm:$0xf]
        %v1688 = vld [vmem:[%s3 + $0x58] sm:$0xf]
        %v1689 = vld [vmem:[%s3 + $0x5c] sm:$0xf]
        %v1690 = vld [vmem:[%s3 + $0x60] sm:$0xf]
        %v1691 = vld [vmem:[%s3 + $0x64] sm:$0xf]
        %v1692 = vld [vmem:[%s3 + $0x68] sm:$0xf]
        %v1693 = vld [vmem:[%s3 + $0x6c] sm:$0xf]
        %v1694 = vld [vmem:[%s3 + $0x70] sm:$0xf]
        %v1695 = vld [vmem:[%s3 + $0x74] sm:$0xf]
        %v1696 = vld [vmem:[%s3 + $0x78] sm:$0xf]
        %v1697 = vld [vmem:[%s3 + $0x7c] sm:$0xf]
        %vm1698 = vsmask.f32 5376
        %v1699 = vrot.slane %v627, 2
        %v1700 = vrot.slane %v629, 3
        %v1701 = vor.u32 %v1699, %v1700
        %v1702 = vrot.slane %v638, 2
        %v1703 = vrot.slane %v634, 3
        %v1704 = vor.u32 %v1702, %v1703
        %v1705 = vsel %vm1698, %v1701, %v1704
        %v1706 = vrot.slane %v1412, 2
        %v1707 = vrot.slane %v1415, 3
        %v1708 = vor.u32 %v1706, %v1707
        %v1709 = vrot.slane %v1420, 2
        %v1710 = vrot.slane %v1423, 3
        %v1711 = vor.u32 %v1709, %v1710
        %v1712 = vsel %vm1698, %v1708, %v1711
        %v1713 = vrot.slane %v646, 2
        %v1714 = vrot.slane %v642, 3
        %v1715 = vor.u32 %v1713, %v1714
        %v1716 = vsel %vm1698, %v1704, %v1715
        %v1717 = vrot.slane %v1433, 2
        %v1718 = vrot.slane %v1436, 3
        %v1719 = vor.u32 %v1717, %v1718
        %v1720 = vsel %vm1698, %v1711, %v1719
        %v1759 = vunpack.c.l.b16 %v1666
        %v1760 = vunpack.c.l.b16 %v1667
        %v1761 = vunpack.c.l.b16 %v1668
        %v1762 = vunpack.c.l.b16 %v1669
        %v1763 = vunpack.c.l.b16 %v1670
        %v1764 = vunpack.c.l.b16 %v1671
        %v1765 = vunpack.c.l.b16 %v1672
        %v1766 = vunpack.c.l.b16 %v1673
        %v1767 = vunpack.c.l.b16 %v1674
        %v1768 = vunpack.c.l.b16 %v1675
        %v1769 = vunpack.c.l.b16 %v1676
        %v1770 = vunpack.c.l.b16 %v1677
        %v1771 = vunpack.c.l.b16 %v1678
        %v1772 = vunpack.c.l.b16 %v1679
        %v1773 = vunpack.c.l.b16 %v1680
        %v1774 = vunpack.c.l.b16 %v1681
        %v1775 = vunpack.c.l.b16 %v1682
        %v1776 = vunpack.c.l.b16 %v1683
        %v1777 = vunpack.c.l.b16 %v1684
        %v1778 = vunpack.c.l.b16 %v1685
        %v1779 = vunpack.c.l.b16 %v1686
        %v1780 = vunpack.c.l.b16 %v1687
        %v1781 = vunpack.c.l.b16 %v1688
        %v1782 = vunpack.c.l.b16 %v1689
        %v1783 = vunpack.c.l.b16 %v1690
        %v1784 = vunpack.c.l.b16 %v1691
        %v1785 = vunpack.c.l.b16 %v1692
        %v1786 = vunpack.c.l.b16 %v1693
        %v1787 = vunpack.c.l.b16 %v1694
        %v1788 = vunpack.c.l.b16 %v1695
        %v1789 = vunpack.c.l.b16 %v1696
        %v1790 = vunpack.c.l.b16 %v1697
        %v1791 = vpack.c.b16 %v1760, %v1759
        %v1792 = vpack.c.b16 %v1762, %v1761
        %v1793 = vpack.c.b16 %v1764, %v1763
        %v1794 = vpack.c.b16 %v1766, %v1765
        %v1795 = vpack.c.b16 %v1768, %v1767
        %v1796 = vpack.c.b16 %v1770, %v1769
        %v1797 = vpack.c.b16 %v1772, %v1771
        %v1798 = vpack.c.b16 %v1774, %v1773
        %v1799 = vpack.c.b16 %v1776, %v1775
        %v1800 = vpack.c.b16 %v1778, %v1777
        %v1801 = vpack.c.b16 %v1780, %v1779
        %v1802 = vpack.c.b16 %v1782, %v1781
        %v1803 = vpack.c.b16 %v1784, %v1783
        %v1804 = vpack.c.b16 %v1786, %v1785
        %v1805 = vpack.c.b16 %v1788, %v1787
        %v1806 = vpack.c.b16 %v1790, %v1789
        %1823 = vmatprep.subr.bf16.mxu0 0
        %1824 = vmatpush1.bf16.msra.mxu0 %v1791
        %1825 = vmatprep.subr.bf16.mxu0 0
        %1826 = vmatpush1.bf16.msra.mxu0 %v1792
        %1827 = vmatprep.subr.bf16.mxu0 0
        %1828 = vmatpush1.bf16.msra.mxu0 %v1793
        %1829 = vmatprep.subr.bf16.mxu0 0
        %1830 = vmatpush1.bf16.msra.mxu0 %v1794
        %1831 = vmatprep.subr.bf16.mxu0 0
        %1832 = vmatpush1.bf16.msra.mxu0 %v1795
        %1833 = vmatprep.subr.bf16.mxu0 0
        %1834 = vmatpush1.bf16.msra.mxu0 %v1796
        %1835 = vmatprep.subr.bf16.mxu0 0
        %1836 = vmatpush1.bf16.msra.mxu0 %v1797
        %1837 = vmatprep.subr.bf16.mxu0 0
        %1838 = vmatpush1.bf16.msra.mxu0 %v1798
        %1839 = vmatprep.subr.bf16.mxu0 0
        %1840 = vmatpush1.bf16.msra.mxu0 %v1799
        %1841 = vmatprep.subr.bf16.mxu0 0
        %1842 = vmatpush1.bf16.msra.mxu0 %v1800
        %1843 = vmatprep.subr.bf16.mxu0 0
        %1844 = vmatpush1.bf16.msra.mxu0 %v1801
        %1845 = vmatprep.subr.bf16.mxu0 0
        %1846 = vmatpush1.bf16.msra.mxu0 %v1802
        %1847 = vmatprep.subr.bf16.mxu0 0
        %1848 = vmatpush1.bf16.msra.mxu0 %v1803
        %1849 = vmatprep.subr.bf16.mxu0 0
        %1850 = vmatpush1.bf16.msra.mxu0 %v1804
        %1851 = vmatprep.subr.bf16.mxu0 0
        %1852 = vmatpush1.bf16.msra.mxu0 %v1805
        %1853 = vmatprep.subr.bf16.mxu0 0
        %1854 = vmatpush1.bf16.msra.mxu0 %v1806
        %1855 = vmatprep.mubr.bf16.mxu0 %v1712
        %1856 = vmatmul.mubr.bf16.gmra.mrb[0].mxu0 %v1705
        %v1857 = vpop.f32.mrb[0].mxu0
        %v1858 = vadd.f32 0.0, %v1857
        %v1859 = vpop.f32.mrb[0].mxu0
        %v1860 = vpop.f32.mrb[0].mxu0
        %v1861 = vadd.f32 0.0, %v1860
        %v1862 = vpop.f32.mrb[0].mxu0
        %1863 = vmatprep.mubr.bf16.mxu0 %v1720
        %1864 = vmatmul.mubr.bf16.gmra.mrb[0].mxu0 %v1716
        %v1865 = vpop.f32.mrb[0].mxu0
        %v1866 = vadd.f32 0.0, %v1865
        %v1867 = vpop.f32.mrb[0].mxu0
        %v1868 = vpop.f32.mrb[0].mxu0
        %v1869 = vadd.f32 0.0, %v1868
        %v1870 = vpop.f32.mrb[0].mxu0
        %1871 = vmatprep.mubr.bf16.mxu0 %v1719
        %1872 = vmatmul.mubr.bf16.gmra.mrb[0].mxu0 %v1715
        %v1873 = vpop.f32.mrb[0].mxu0
        %v1874 = vpop.f32.mrb[0].mxu0
        %v1875 = vpop.f32.mrb[0].mxu0
        %v1876 = vpop.f32.mrb[0].mxu0
        %1877 = vdwg.mxu0
        %v1878 = vadd.f32 %v1238, %v1642
        %v1879 = vadd.f32 %v1242, %v1646
        %v1880 = vadd.f32 %v1248, %v1652
        %v1881 = vadd.f32 %v1252, %v1656
        %v1882 = vadd.f32 %v1351, %v1644
        %v1883 = vadd.f32 %v1354, %v1648
        %v1884 = vadd.f32 %v1359, %v1654
        %v1885 = vadd.f32 %v1362, %v1658
        %v1886 = vadd.f32 %v1882, %v1858
        %v1887 = vadd.f32 %v1883, %v1861
        %v1888 = vadd.f32 %v1884, %v1866
        %v1889 = vadd.f32 %v1885, %v1869
        %v1890 = vld [vmem:[%s4] sm:$0x1]
        %v1892 = vlaneseq
        %v1893 = vshrl.u32 %v1892, 7
        %v1894 = vsub.s32 0, %v1893
        %v1895 = vrot.slane %v1890, %v1894
        %v1897 = vmul.f32 %v1236, %v1895
        %v1898 = vmul.f32 %v1240, %v1895
        %v1899 = vmul.f32 %v1246, %v1895
        %v1900 = vmul.f32 %v1250, %v1895
        %v1901 = vmul.f32 %v1256, %v1895
        %v1902 = vld [vmem:[%s5] sm:$0x1]
        %v1904 = vlaneseq
        %v1905 = vshrl.u32 %v1904, 7
        %v1906 = vsub.s32 0, %v1905
        %v1907 = vrot.slane %v1902, %v1906
        %v1909 = vadd.f32 %v1897, %v1907
        %v1910 = vadd.f32 %v1898, %v1907
        %v1911 = vadd.f32 %v1899, %v1907
        %v1912 = vadd.f32 %v1900, %v1907
        %v1913 = vadd.f32 %v1901, %v1907
        %v1914 = vmax.f32 %v1909, 0.0
        %v1915 = vmax.f32 %v1910, 0.0
        %v1916 = vmax.f32 %v1911, 0.0
        %v1917 = vmax.f32 %v1912, 0.0
        %v1918 = vmax.f32 %v1913, 0.0
        %v1919 = vpack.c.bf16 %v1915, %v1914
        %v1920 = vpack.c.bf16 %v1917, %v1916
        %v1921 = vpack.c.bf16 %v1918, %v1918
        %v1923 = vshrl.u32 %v1919, 16
        %v1925 = vshll.u32 %v1919, 16
        %v1927 = vrot.slane %v1925, 1
        %v1928 = vor.u32 %v1923, %v1927
        %v1930 = vshll.u32 %v1920, 16
        %v1932 = vrot.slane %v1930, 1
        %v1933 = vsel %vm625, %v1928, %v1932
        %v1934 = vshrl.u32 %v1920, 16
        %v1936 = vor.u32 %v1934, %v1932
        %v1941 = vrot.slane %v1919, 1
        %v1942 = vrot.slane %v1920, 1
        %v1943 = vsel %vm652, %v1941, %v1942
        %v1946 = vrot.slane %v1923, 1
        %v1947 = vrot.slane %v1925, 2
        %v1948 = vor.u32 %v1946, %v1947
        %v1949 = vrot.slane %v1934, 1
        %v1950 = vrot.slane %v1930, 2
        %v1951 = vor.u32 %v1949, %v1950
        %v1952 = vsel %vm1403, %v1948, %v1951
        %vm1955 = vcmask 1045504
        %v1956 = vrot.slane %v1919, 2
        %v1957 = vrot.slane %v1920, 2
        %v1958 = vsel %vm1955, %v1956, %v1957
        %v1961 = vrot.slane %v1923, 2
        %v1962 = vrot.slane %v1925, 3
        %v1963 = vor.u32 %v1961, %v1962
        %v1964 = vrot.slane %v1934, 2
        %v1965 = vrot.slane %v1930, 3
        %v1966 = vor.u32 %v1964, %v1965
        %v1967 = vsel %vm1698, %v1963, %v1966
        %v1969 = vshll.u32 %v1921, 16
        %v1971 = vrot.slane %v1969, 3
        %v1972 = vsel %vm1698, %v1966, %v1971
        %vm1976 = vcmask 1044480
        %v1977 = vrot.slane %v1919, 3
        %v1978 = vrot.slane %v1920, 3
        %v1979 = vsel %vm1976, %v1977, %v1978
        %v1980 = vrot.slane %v1921, 3
        %v1981 = vsel %vm1976, %v1978, %v1980
        %v1984 = vld [vmem:[%s6] sm:$0xf]
        %v1985 = vld [vmem:[%s6 + $0x4] sm:$0xf]
        %v1986 = vld [vmem:[%s6 + $0x8] sm:$0xf]
        %v1987 = vld [vmem:[%s6 + $0xc] sm:$0xf]
        %v1988 = vld [vmem:[%s6 + $0x10] sm:$0xf]
        %v1989 = vld [vmem:[%s6 + $0x14] sm:$0xf]
        %v1990 = vld [vmem:[%s6 + $0x18] sm:$0xf]
        %v1991 = vld [vmem:[%s6 + $0x1c] sm:$0xf]
        %v1992 = vld [vmem:[%s6 + $0x20] sm:$0xf]
        %v1993 = vld [vmem:[%s6 + $0x24] sm:$0xf]
        %v1994 = vld [vmem:[%s6 + $0x28] sm:$0xf]
        %v1995 = vld [vmem:[%s6 + $0x2c] sm:$0xf]
        %v1996 = vld [vmem:[%s6 + $0x30] sm:$0xf]
        %v1997 = vld [vmem:[%s6 + $0x34] sm:$0xf]
        %v1998 = vld [vmem:[%s6 + $0x38] sm:$0xf]
        %v1999 = vld [vmem:[%s6 + $0x3c] sm:$0xf]
        %v2000 = vld [vmem:[%s6 + $0x40] sm:$0xf]
        %v2001 = vld [vmem:[%s6 + $0x44] sm:$0xf]
        %v2002 = vld [vmem:[%s6 + $0x48] sm:$0xf]
        %v2003 = vld [vmem:[%s6 + $0x4c] sm:$0xf]
        %v2004 = vld [vmem:[%s6 + $0x50] sm:$0xf]
        %v2005 = vld [vmem:[%s6 + $0x54] sm:$0xf]
        %v2006 = vld [vmem:[%s6 + $0x58] sm:$0xf]
        %v2007 = vld [vmem:[%s6 + $0x5c] sm:$0xf]
        %v2008 = vld [vmem:[%s6 + $0x60] sm:$0xf]
        %v2009 = vld [vmem:[%s6 + $0x64] sm:$0xf]
        %v2010 = vld [vmem:[%s6 + $0x68] sm:$0xf]
        %v2011 = vld [vmem:[%s6 + $0x6c] sm:$0xf]
        %v2012 = vld [vmem:[%s6 + $0x70] sm:$0xf]
        %v2013 = vld [vmem:[%s6 + $0x74] sm:$0xf]
        %v2014 = vld [vmem:[%s6 + $0x78] sm:$0xf]
        %v2015 = vld [vmem:[%s6 + $0x7c] sm:$0xf]
        %v2016 = vld [vmem:[%s6 + $0x80] sm:$0xf]
        %v2017 = vld [vmem:[%s6 + $0x84] sm:$0xf]
        %v2018 = vld [vmem:[%s6 + $0x88] sm:$0xf]
        %v2019 = vld [vmem:[%s6 + $0x8c] sm:$0xf]
        %v2020 = vld [vmem:[%s6 + $0x90] sm:$0xf]
        %v2021 = vld [vmem:[%s6 + $0x94] sm:$0xf]
        %v2022 = vld [vmem:[%s6 + $0x98] sm:$0xf]
        %v2023 = vld [vmem:[%s6 + $0x9c] sm:$0xf]
        %v2024 = vld [vmem:[%s6 + $0xa0] sm:$0xf]
        %v2025 = vld [vmem:[%s6 + $0xa4] sm:$0xf]
        %v2026 = vld [vmem:[%s6 + $0xa8] sm:$0xf]
        %v2027 = vld [vmem:[%s6 + $0xac] sm:$0xf]
        %v2028 = vld [vmem:[%s6 + $0xb0] sm:$0xf]
        %v2029 = vld [vmem:[%s6 + $0xb4] sm:$0xf]
        %v2030 = vld [vmem:[%s6 + $0xb8] sm:$0xf]
        %v2031 = vld [vmem:[%s6 + $0xbc] sm:$0xf]
        %v2032 = vld [vmem:[%s6 + $0xc0] sm:$0xf]
        %v2033 = vld [vmem:[%s6 + $0xc4] sm:$0xf]
        %v2034 = vld [vmem:[%s6 + $0xc8] sm:$0xf]
        %v2035 = vld [vmem:[%s6 + $0xcc] sm:$0xf]
        %v2036 = vld [vmem:[%s6 + $0xd0] sm:$0xf]
        %v2037 = vld [vmem:[%s6 + $0xd4] sm:$0xf]
        %v2038 = vld [vmem:[%s6 + $0xd8] sm:$0xf]
        %v2039 = vld [vmem:[%s6 + $0xdc] sm:$0xf]
        %v2040 = vld [vmem:[%s6 + $0xe0] sm:$0xf]
        %v2041 = vld [vmem:[%s6 + $0xe4] sm:$0xf]
        %v2042 = vld [vmem:[%s6 + $0xe8] sm:$0xf]
        %v2043 = vld [vmem:[%s6 + $0xec] sm:$0xf]
        %v2044 = vld [vmem:[%s6 + $0xf0] sm:$0xf]
        %v2045 = vld [vmem:[%s6 + $0xf4] sm:$0xf]
        %v2046 = vld [vmem:[%s6 + $0xf8] sm:$0xf]
        %v2047 = vld [vmem:[%s6 + $0xfc] sm:$0xf]
        %v2048 = vld [vmem:[%s6 + $0x100] sm:$0xf]
        %v2049 = vld [vmem:[%s6 + $0x104] sm:$0xf]
        %v2050 = vld [vmem:[%s6 + $0x108] sm:$0xf]
        %v2051 = vld [vmem:[%s6 + $0x10c] sm:$0xf]
        %v2052 = vld [vmem:[%s6 + $0x110] sm:$0xf]
        %v2053 = vld [vmem:[%s6 + $0x114] sm:$0xf]
        %v2054 = vld [vmem:[%s6 + $0x118] sm:$0xf]
        %v2055 = vld [vmem:[%s6 + $0x11c] sm:$0xf]
        %v2056 = vld [vmem:[%s6 + $0x120] sm:$0xf]
        %v2057 = vld [vmem:[%s6 + $0x124] sm:$0xf]
        %v2058 = vld [vmem:[%s6 + $0x128] sm:$0xf]
        %v2059 = vld [vmem:[%s6 + $0x12c] sm:$0xf]
        %v2060 = vld [vmem:[%s6 + $0x130] sm:$0xf]
        %v2061 = vld [vmem:[%s6 + $0x134] sm:$0xf]
        %v2062 = vld [vmem:[%s6 + $0x138] sm:$0xf]
        %v2063 = vld [vmem:[%s6 + $0x13c] sm:$0xf]
        %v2064 = vld [vmem:[%s6 + $0x140] sm:$0xf]
        %v2065 = vld [vmem:[%s6 + $0x144] sm:$0xf]
        %v2066 = vld [vmem:[%s6 + $0x148] sm:$0xf]
        %v2067 = vld [vmem:[%s6 + $0x14c] sm:$0xf]
        %v2068 = vld [vmem:[%s6 + $0x150] sm:$0xf]
        %v2069 = vld [vmem:[%s6 + $0x154] sm:$0xf]
        %v2070 = vld [vmem:[%s6 + $0x158] sm:$0xf]
        %v2071 = vld [vmem:[%s6 + $0x15c] sm:$0xf]
        %v2072 = vld [vmem:[%s6 + $0x160] sm:$0xf]
        %v2073 = vld [vmem:[%s6 + $0x164] sm:$0xf]
        %v2074 = vld [vmem:[%s6 + $0x168] sm:$0xf]
        %v2075 = vld [vmem:[%s6 + $0x16c] sm:$0xf]
        %v2076 = vld [vmem:[%s6 + $0x170] sm:$0xf]
        %v2077 = vld [vmem:[%s6 + $0x174] sm:$0xf]
        %v2078 = vld [vmem:[%s6 + $0x178] sm:$0xf]
        %v2079 = vld [vmem:[%s6 + $0x17c] sm:$0xf]
        %v2080 = vld [vmem:[%s6 + $0x180] sm:$0xf]
        %v2081 = vld [vmem:[%s6 + $0x184] sm:$0xf]
        %v2082 = vld [vmem:[%s6 + $0x188] sm:$0xf]
        %v2083 = vld [vmem:[%s6 + $0x18c] sm:$0xf]
        %v2084 = vld [vmem:[%s6 + $0x190] sm:$0xf]
        %v2085 = vld [vmem:[%s6 + $0x194] sm:$0xf]
        %v2086 = vld [vmem:[%s6 + $0x198] sm:$0xf]
        %v2087 = vld [vmem:[%s6 + $0x19c] sm:$0xf]
        %v2088 = vld [vmem:[%s6 + $0x1a0] sm:$0xf]
        %v2089 = vld [vmem:[%s6 + $0x1a4] sm:$0xf]
        %v2090 = vld [vmem:[%s6 + $0x1a8] sm:$0xf]
        %v2091 = vld [vmem:[%s6 + $0x1ac] sm:$0xf]
        %v2092 = vld [vmem:[%s6 + $0x1b0] sm:$0xf]
        %v2093 = vld [vmem:[%s6 + $0x1b4] sm:$0xf]
        %v2094 = vld [vmem:[%s6 + $0x1b8] sm:$0xf]
        %v2095 = vld [vmem:[%s6 + $0x1bc] sm:$0xf]
        %v2208 = vunpack.c.l.b16 %v1984
        %v2209 = vunpack.c.l.b16 %v1985
        %v2210 = vunpack.c.l.b16 %v1986
        %v2211 = vunpack.c.l.b16 %v1987
        %v2212 = vunpack.c.l.b16 %v1988
        %v2213 = vunpack.c.l.b16 %v1989
        %v2214 = vunpack.c.l.b16 %v1990
        %v2215 = vunpack.c.l.b16 %v1991
        %v2216 = vunpack.c.l.b16 %v1992
        %v2217 = vunpack.c.l.b16 %v1993
        %v2218 = vunpack.c.l.b16 %v1994
        %v2219 = vunpack.c.l.b16 %v1995
        %v2220 = vunpack.c.l.b16 %v1996
        %v2221 = vunpack.c.l.b16 %v1997
        %v2222 = vunpack.c.l.b16 %v1998
        %v2223 = vunpack.c.l.b16 %v1999
        %v2224 = vunpack.c.l.b16 %v2000
        %v2225 = vunpack.c.l.b16 %v2001
        %v2226 = vunpack.c.l.b16 %v2002
        %v2227 = vunpack.c.l.b16 %v2003
        %v2228 = vunpack.c.l.b16 %v2004
        %v2229 = vunpack.c.l.b16 %v2005
        %v2230 = vunpack.c.l.b16 %v2006
        %v2231 = vunpack.c.l.b16 %v2007
        %v2232 = vunpack.c.l.b16 %v2008
        %v2233 = vunpack.c.l.b16 %v2009
        %v2234 = vunpack.c.l.b16 %v2010
        %v2235 = vunpack.c.l.b16 %v2011
        %v2236 = vunpack.c.l.b16 %v2012
        %v2237 = vunpack.c.l.b16 %v2013
        %v2238 = vunpack.c.l.b16 %v2014
        %v2239 = vunpack.c.l.b16 %v2015
        %v2240 = vunpack.c.l.b16 %v2016
        %v2241 = vunpack.c.l.b16 %v2017
        %v2242 = vunpack.c.l.b16 %v2018
        %v2243 = vunpack.c.l.b16 %v2019
        %v2244 = vunpack.c.l.b16 %v2020
        %v2245 = vunpack.c.l.b16 %v2021
        %v2246 = vunpack.c.l.b16 %v2022
        %v2247 = vunpack.c.l.b16 %v2023
        %v2248 = vunpack.c.l.b16 %v2024
        %v2249 = vunpack.c.l.b16 %v2025
        %v2250 = vunpack.c.l.b16 %v2026
        %v2251 = vunpack.c.l.b16 %v2027
        %v2252 = vunpack.c.l.b16 %v2028
        %v2253 = vunpack.c.l.b16 %v2029
        %v2254 = vunpack.c.l.b16 %v2030
        %v2255 = vunpack.c.l.b16 %v2031
        %v2256 = vunpack.c.l.b16 %v2032
        %v2257 = vunpack.c.l.b16 %v2033
        %v2258 = vunpack.c.l.b16 %v2034
        %v2259 = vunpack.c.l.b16 %v2035
        %v2260 = vunpack.c.l.b16 %v2036
        %v2261 = vunpack.c.l.b16 %v2037
        %v2262 = vunpack.c.l.b16 %v2038
        %v2263 = vunpack.c.l.b16 %v2039
        %v2264 = vunpack.c.l.b16 %v2040
        %v2265 = vunpack.c.l.b16 %v2041
        %v2266 = vunpack.c.l.b16 %v2042
        %v2267 = vunpack.c.l.b16 %v2043
        %v2268 = vunpack.c.l.b16 %v2044
        %v2269 = vunpack.c.l.b16 %v2045
        %v2270 = vunpack.c.l.b16 %v2046
        %v2271 = vunpack.c.l.b16 %v2047
        %v2272 = vunpack.c.l.b16 %v2048
        %v2273 = vunpack.c.l.b16 %v2049
        %v2274 = vunpack.c.l.b16 %v2050
        %v2275 = vunpack.c.l.b16 %v2051
        %v2276 = vunpack.c.l.b16 %v2052
        %v2277 = vunpack.c.l.b16 %v2053
        %v2278 = vunpack.c.l.b16 %v2054
        %v2279 = vunpack.c.l.b16 %v2055
        %v2280 = vunpack.c.l.b16 %v2056
        %v2281 = vunpack.c.l.b16 %v2057
        %v2282 = vunpack.c.l.b16 %v2058
        %v2283 = vunpack.c.l.b16 %v2059
        %v2284 = vunpack.c.l.b16 %v2060
        %v2285 = vunpack.c.l.b16 %v2061
        %v2286 = vunpack.c.l.b16 %v2062
        %v2287 = vunpack.c.l.b16 %v2063
        %v2288 = vunpack.c.l.b16 %v2064
        %v2289 = vunpack.c.l.b16 %v2065
        %v2290 = vunpack.c.l.b16 %v2066
        %v2291 = vunpack.c.l.b16 %v2067
        %v2292 = vunpack.c.l.b16 %v2068
        %v2293 = vunpack.c.l.b16 %v2069
        %v2294 = vunpack.c.l.b16 %v2070
        %v2295 = vunpack.c.l.b16 %v2071
        %v2296 = vunpack.c.l.b16 %v2072
        %v2297 = vunpack.c.l.b16 %v2073
        %v2298 = vunpack.c.l.b16 %v2074
        %v2299 = vunpack.c.l.b16 %v2075
        %v2300 = vunpack.c.l.b16 %v2076
        %v2301 = vunpack.c.l.b16 %v2077
        %v2302 = vunpack.c.l.b16 %v2078
        %v2303 = vunpack.c.l.b16 %v2079
        %v2304 = vunpack.c.l.b16 %v2080
        %v2305 = vunpack.c.l.b16 %v2081
        %v2306 = vunpack.c.l.b16 %v2082
        %v2307 = vunpack.c.l.b16 %v2083
        %v2308 = vunpack.c.l.b16 %v2084
        %v2309 = vunpack.c.l.b16 %v2085
        %v2310 = vunpack.c.l.b16 %v2086
        %v2311 = vunpack.c.l.b16 %v2087
        %v2312 = vunpack.c.l.b16 %v2088
        %v2313 = vunpack.c.l.b16 %v2089
        %v2314 = vunpack.c.l.b16 %v2090
        %v2315 = vunpack.c.l.b16 %v2091
        %v2316 = vunpack.c.l.b16 %v2092
        %v2317 = vunpack.c.l.b16 %v2093
        %v2318 = vunpack.c.l.b16 %v2094
        %v2319 = vunpack.c.l.b16 %v2095
        %v2320 = vpack.c.b16 %v2209, %v2208
        %v2321 = vpack.c.b16 %v2211, %v2210
        %v2322 = vpack.c.b16 %v2213, %v2212
        %v2323 = vpack.c.b16 %v2215, %v2214
        %v2324 = vpack.c.b16 %v2217, %v2216
        %v2325 = vpack.c.b16 %v2219, %v2218
        %v2326 = vpack.c.b16 %v2221, %v2220
        %v2327 = vpack.c.b16 %v2223, %v2222
        %v2328 = vpack.c.b16 %v2225, %v2224
        %v2329 = vpack.c.b16 %v2227, %v2226
        %v2330 = vpack.c.b16 %v2229, %v2228
        %v2331 = vpack.c.b16 %v2231, %v2230
        %v2332 = vpack.c.b16 %v2233, %v2232
        %v2333 = vpack.c.b16 %v2235, %v2234
        %v2334 = vpack.c.b16 %v2237, %v2236
        %v2335 = vpack.c.b16 %v2239, %v2238
        %v2336 = vpack.c.b16 %v2241, %v2240
        %v2337 = vpack.c.b16 %v2243, %v2242
        %v2338 = vpack.c.b16 %v2245, %v2244
        %v2339 = vpack.c.b16 %v2247, %v2246
        %v2340 = vpack.c.b16 %v2249, %v2248
        %v2341 = vpack.c.b16 %v2251, %v2250
        %v2342 = vpack.c.b16 %v2253, %v2252
        %v2343 = vpack.c.b16 %v2255, %v2254
        %v2344 = vpack.c.b16 %v2257, %v2256
        %v2345 = vpack.c.b16 %v2259, %v2258
        %v2346 = vpack.c.b16 %v2261, %v2260
        %v2347 = vpack.c.b16 %v2263, %v2262
        %v2348 = vpack.c.b16 %v2265, %v2264
        %v2349 = vpack.c.b16 %v2267, %v2266
        %v2350 = vpack.c.b16 %v2269, %v2268
        %v2351 = vpack.c.b16 %v2271, %v2270
        %v2352 = vpack.c.b16 %v2273, %v2272
        %v2353 = vpack.c.b16 %v2275, %v2274
        %v2354 = vpack.c.b16 %v2277, %v2276
        %v2355 = vpack.c.b16 %v2279, %v2278
        %v2356 = vpack.c.b16 %v2281, %v2280
        %v2357 = vpack.c.b16 %v2283, %v2282
        %v2358 = vpack.c.b16 %v2285, %v2284
        %v2359 = vpack.c.b16 %v2287, %v2286
        %v2360 = vpack.c.b16 %v2289, %v2288
        %v2361 = vpack.c.b16 %v2291, %v2290
        %v2362 = vpack.c.b16 %v2293, %v2292
        %v2363 = vpack.c.b16 %v2295, %v2294
        %v2364 = vpack.c.b16 %v2297, %v2296
        %v2365 = vpack.c.b16 %v2299, %v2298
        %v2366 = vpack.c.b16 %v2301, %v2300
        %v2367 = vpack.c.b16 %v2303, %v2302
        %v2368 = vpack.c.b16 %v2305, %v2304
        %v2369 = vpack.c.b16 %v2307, %v2306
        %v2370 = vpack.c.b16 %v2309, %v2308
        %v2371 = vpack.c.b16 %v2311, %v2310
        %v2372 = vpack.c.b16 %v2313, %v2312
        %v2373 = vpack.c.b16 %v2315, %v2314
        %v2374 = vpack.c.b16 %v2317, %v2316
        %v2375 = vpack.c.b16 %v2319, %v2318
        %2432 = vmatprep.subr.bf16.mxu0 0
        %2433 = vmatpush1.bf16.msra.mxu0 %v2320
        %2434 = vmatprep.subr.bf16.mxu0 0
        %2435 = vmatpush1.bf16.msra.mxu0 %v2321
        %2436 = vmatprep.subr.bf16.mxu0 0
        %2437 = vmatpush1.bf16.msra.mxu0 %v2322
        %2438 = vmatprep.subr.bf16.mxu0 0
        %2439 = vmatpush1.bf16.msra.mxu0 %v2323
        %2440 = vmatprep.subr.bf16.mxu0 0
        %2441 = vmatpush1.bf16.msra.mxu0 %v2324
        %2442 = vmatprep.subr.bf16.mxu0 0
        %2443 = vmatpush1.bf16.msra.mxu0 %v2325
        %2444 = vmatprep.subr.bf16.mxu0 0
        %2445 = vmatpush1.bf16.msra.mxu0 %v2326
        %2446 = vmatprep.subr.bf16.mxu0 0
        %2447 = vmatpush1.bf16.msra.mxu0 %v2327
        %2448 = vmatprep.subr.bf16.mxu0 0
        %2449 = vmatpush1.bf16.msra.mxu0 %v2328
        %2450 = vmatprep.subr.bf16.mxu0 0
        %2451 = vmatpush1.bf16.msra.mxu0 %v2329
        %2452 = vmatprep.subr.bf16.mxu0 0
        %2453 = vmatpush1.bf16.msra.mxu0 %v2330
        %2454 = vmatprep.subr.bf16.mxu0 0
        %2455 = vmatpush1.bf16.msra.mxu0 %v2331
        %2456 = vmatprep.subr.bf16.mxu0 0
        %2457 = vmatpush1.bf16.msra.mxu0 %v2332
        %2458 = vmatprep.subr.bf16.mxu0 0
        %2459 = vmatpush1.bf16.msra.mxu0 %v2333
        %2460 = vmatprep.subr.bf16.mxu0 0
        %2461 = vmatpush1.bf16.msra.mxu0 %v2334
        %2462 = vmatprep.subr.bf16.mxu0 0
        %2463 = vmatpush1.bf16.msra.mxu0 %v2335
        %2464 = vmatprep.mubr.bf16.mxu0 %v1933
        %2465 = vmatmul.mubr.bf16.gmra.mrb[0].mxu0 %v1919
        %v2466 = vpop.f32.mrb[0].mxu0
        %v2467 = vadd.f32 0.0, %v2466
        %v2468 = vpop.f32.mrb[0].mxu0
        %v2469 = vpop.f32.mrb[0].mxu0
        %v2470 = vadd.f32 0.0, %v2469
        %v2471 = vpop.f32.mrb[0].mxu0
        %2472 = vmatprep.mubr.bf16.mxu0 %v1936
        %2473 = vmatmul.mubr.bf16.gmra.mrb[0].mxu0 %v1920
        %v2474 = vpop.f32.mrb[0].mxu0
        %v2475 = vadd.f32 0.0, %v2474
        %v2476 = vpop.f32.mrb[0].mxu0
        %v2477 = vpop.f32.mrb[0].mxu0
        %v2478 = vpop.f32.mrb[0].mxu0
        %2479 = vdwg.mxu0
        %2480 = vmatprep.subr.bf16.mxu0 0
        %2481 = vmatpush1.bf16.msra.mxu0 %v2336
        %2482 = vmatprep.subr.bf16.mxu0 0
        %2483 = vmatpush1.bf16.msra.mxu0 %v2337
        %2484 = vmatprep.subr.bf16.mxu0 0
        %2485 = vmatpush1.bf16.msra.mxu0 %v2338
        %2486 = vmatprep.subr.bf16.mxu0 0
        %2487 = vmatpush1.bf16.msra.mxu0 %v2339
        %2488 = vmatprep.subr.bf16.mxu0 0
        %2489 = vmatpush1.bf16.msra.mxu0 %v2340
        %2490 = vmatprep.subr.bf16.mxu0 0
        %2491 = vmatpush1.bf16.msra.mxu0 %v2341
        %2492 = vmatprep.subr.bf16.mxu0 0
        %2493 = vmatpush1.bf16.msra.mxu0 %v2342
        %2494 = vmatprep.subr.bf16.mxu0 0
        %2495 = vmatpush1.bf16.msra.mxu0 %v2343
        %2496 = vmatprep.subr.bf16.mxu0 0
        %2497 = vmatpush1.bf16.msra.mxu0 %v2344
        %2498 = vmatprep.subr.bf16.mxu0 0
        %2499 = vmatpush1.bf16.msra.mxu0 %v2345
        %2500 = vmatprep.subr.bf16.mxu0 0
        %2501 = vmatpush1.bf16.msra.mxu0 %v2346
        %2502 = vmatprep.subr.bf16.mxu0 0
        %2503 = vmatpush1.bf16.msra.mxu0 %v2347
        %2504 = vmatprep.subr.bf16.mxu0 0
        %2505 = vmatpush1.bf16.msra.mxu0 %v2348
        %2506 = vmatprep.subr.bf16.mxu0 0
        %2507 = vmatpush1.bf16.msra.mxu0 %v2349
        %2508 = vmatprep.subr.bf16.mxu0 0
        %2509 = vmatpush1.bf16.msra.mxu0 %v2350
        %2510 = vmatprep.subr.bf16.mxu0 0
        %2511 = vmatpush1.bf16.msra.mxu0 %v2351
        %2512 = vmatprep.mubr.bf16.mxu0 %v1952
        %2513 = vmatmul.mubr.bf16.gmra.mrb[0].mxu0 %v1943
        %v2514 = vpop.f32.mrb[0].mxu0
        %v2515 = vadd.f32 %v2467, %v2514
        %v2516 = vpop.f32.mrb[0].mxu0
        %v2517 = vpop.f32.mrb[0].mxu0
        %v2518 = vadd.f32 %v2470, %v2517
        %v2519 = vpop.f32.mrb[0].mxu0
        %2520 = vmatprep.mubr.bf16.mxu0 %v1951
        %2521 = vmatmul.mubr.bf16.gmra.mrb[0].mxu0 %v1942
        %v2522 = vpop.f32.mrb[0].mxu0
        %v2523 = vadd.f32 %v2475, %v2522
        %v2524 = vpop.f32.mrb[0].mxu0
        %v2525 = vpop.f32.mrb[0].mxu0
        %v2526 = vpop.f32.mrb[0].mxu0
        %2527 = vdwg.mxu0
        %2528 = vmatprep.subr.bf16.mxu0 0
        %2529 = vmatpush1.bf16.msra.mxu0 %v2352
        %2530 = vmatprep.subr.bf16.mxu0 0
        %2531 = vmatpush1.bf16.msra.mxu0 %v2353
        %2532 = vmatprep.subr.bf16.mxu0 0
        %2533 = vmatpush1.bf16.msra.mxu0 %v2354
        %2534 = vmatprep.subr.bf16.mxu0 0
        %2535 = vmatpush1.bf16.msra.mxu0 %v2355
        %2536 = vmatprep.subr.bf16.mxu0 0
        %2537 = vmatpush1.bf16.msra.mxu0 %v2356
        %2538 = vmatprep.subr.bf16.mxu0 0
        %2539 = vmatpush1.bf16.msra.mxu0 %v2357
        %2540 = vmatprep.subr.bf16.mxu0 0
        %2541 = vmatpush1.bf16.msra.mxu0 %v2358
        %2542 = vmatprep.subr.bf16.mxu0 0
        %2543 = vmatpush1.bf16.msra.mxu0 %v2359
        %2544 = vmatprep.subr.bf16.mxu0 0
        %2545 = vmatpush1.bf16.msra.mxu0 %v2360
        %2546 = vmatprep.subr.bf16.mxu0 0
        %2547 = vmatpush1.bf16.msra.mxu0 %v2361
        %2548 = vmatprep.subr.bf16.mxu0 0
        %2549 = vmatpush1.bf16.msra.mxu0 %v2362
        %2550 = vmatprep.subr.bf16.mxu0 0
        %2551 = vmatpush1.bf16.msra.mxu0 %v2363
        %2552 = vmatprep.subr.bf16.mxu0 0
        %2553 = vmatpush1.bf16.msra.mxu0 %v2364
        %2554 = vmatprep.subr.bf16.mxu0 0
        %2555 = vmatpush1.bf16.msra.mxu0 %v2365
        %2556 = vmatprep.subr.bf16.mxu0 0
        %2557 = vmatpush1.bf16.msra.mxu0 %v2366
        %2558 = vmatprep.subr.bf16.mxu0 0
        %2559 = vmatpush1.bf16.msra.mxu0 %v2367
        %2560 = vmatprep.mubr.bf16.mxu0 %v1967
        %2561 = vmatmul.mubr.bf16.gmra.mrb[0].mxu0 %v1958
        %v2562 = vpop.f32.mrb[0].mxu0
        %v2563 = vadd.f32 %v2515, %v2562
        %v2564 = vpop.f32.mrb[0].mxu0
        %v2565 = vpop.f32.mrb[0].mxu0
        %v2566 = vadd.f32 %v2518, %v2565
        %v2567 = vpop.f32.mrb[0].mxu0
        %2568 = vmatprep.mubr.bf16.mxu0 %v1972
        %2569 = vmatmul.mubr.bf16.gmra.mrb[0].mxu0 %v1957
        %v2570 = vpop.f32.mrb[0].mxu0
        %v2571 = vadd.f32 %v2523, %v2570
        %v2572 = vpop.f32.mrb[0].mxu0
        %v2573 = vpop.f32.mrb[0].mxu0
        %v2574 = vpop.f32.mrb[0].mxu0
        %2575 = vdwg.mxu0
        %2576 = vmatprep.subr.bf16.mxu0 0
        %2577 = vmatpush1.bf16.msra.mxu0 %v2368
        %2578 = vmatprep.subr.bf16.mxu0 0
        %2579 = vmatpush1.bf16.msra.mxu0 %v2369
        %2580 = vmatprep.subr.bf16.mxu0 0
        %2581 = vmatpush1.bf16.msra.mxu0 %v2370
        %2582 = vmatprep.subr.bf16.mxu0 0
        %2583 = vmatpush1.bf16.msra.mxu0 %v2371
        %2584 = vmatprep.subr.bf16.mxu0 0
        %2585 = vmatpush1.bf16.msra.mxu0 %v2372
        %2586 = vmatprep.subr.bf16.mxu0 0
        %2587 = vmatpush1.bf16.msra.mxu0 %v2373
        %2588 = vmatprep.subr.bf16.mxu0 0
        %2589 = vmatpush1.bf16.msra.mxu0 %v2374
        %2590 = vmatprep.subr.bf16.mxu0 0
        %2591 = vmatpush1.bf16.msra.mxu0 %v2375
        %2592 = vmatprep.subr.bf16.mxu0 0
        %2593 = vmatpush1.bf16.msra.mxu0 0
        %2594 = vmatprep.subr.bf16.mxu0 0
        %2595 = vmatpush1.bf16.msra.mxu0 0
        %2596 = vmatprep.subr.bf16.mxu0 0
        %2597 = vmatpush1.bf16.msra.mxu0 0
        %2598 = vmatprep.subr.bf16.mxu0 0
        %2599 = vmatpush1.bf16.msra.mxu0 0
        %2600 = vmatprep.subr.bf16.mxu0 0
        %2601 = vmatpush1.bf16.msra.mxu0 0
        %2602 = vmatprep.subr.bf16.mxu0 0
        %2603 = vmatpush1.bf16.msra.mxu0 0
        %2604 = vmatprep.subr.bf16.mxu0 0
        %2605 = vmatpush1.bf16.msra.mxu0 0
        %2606 = vmatprep.subr.bf16.mxu0 0
        %2607 = vmatpush1.bf16.msra.mxu0 0
        %2608 = vmatprep.mubr.bf16.mxu0 0
        %2609 = vmatmul.mubr.bf16.gmra.mrb[0].mxu0 %v1979
        %v2610 = vpop.f32.mrb[0].mxu0
        %v2611 = vadd.f32 %v2563, %v2610
        %v2612 = vpop.f32.mrb[0].mxu0
        %v2613 = vpop.f32.mrb[0].mxu0
        %v2614 = vadd.f32 %v2566, %v2613
        %v2615 = vpop.f32.mrb[0].mxu0
        %2616 = vmatprep.mubr.bf16.mxu0 0
        %2617 = vmatmul.mubr.bf16.gmra.mrb[0].mxu0 %v1981
        %v2618 = vpop.f32.mrb[0].mxu0
        %v2619 = vadd.f32 %v2571, %v2618
        %v2620 = vpop.f32.mrb[0].mxu0
        %v2621 = vpop.f32.mrb[0].mxu0
        %v2622 = vpop.f32.mrb[0].mxu0
        %2623 = vdwg.mxu0
        %v2624 = vld [vmem:[%s7] sm:$0x1]
        %v2626 = vlaneseq
        %v2627 = vshrl.u32 %v2626, 7
        %v2628 = vsub.s32 0, %v2627
        %v2629 = vrot.slane %v2624, %v2628
        %v2631 = vmul.f32 %v2611, %v2629
        %v2632 = vmul.f32 %v2614, %v2629
        %v2633 = vmul.f32 %v2619, %v2629
        %v2634 = vld [vmem:[%s8] sm:$0x1]
        %v2636 = vlaneseq
        %v2637 = vshrl.u32 %v2636, 7
        %v2638 = vsub.s32 0, %v2637
        %v2639 = vrot.slane %v2634, %v2638
        %v2641 = vadd.f32 %v2631, %v2639
        %v2642 = vadd.f32 %v2632, %v2639
        %v2643 = vadd.f32 %v2633, %v2639
        %v2644 = vmax.f32 %v2641, 0.0
        %v2645 = vmax.f32 %v2642, 0.0
        %v2646 = vmax.f32 %v2643, 0.0
        %2647 = vst [vmem:[%s596] sm:$0xff] %v2644
        %2648 = vst [vmem:[%s596 + $0x18] sm:$0xff] %v2645
        %2649 = vst [vmem:[%s596 + $0x30] sm:$0xff] %v2646
        %v2650 = vld [vmem:[%s9] sm:$0x1]
        %v2652 = vlaneseq
        %v2653 = vshrl.u32 %v2652, 7
        %v2654 = vsub.s32 0, %v2653
        %v2655 = vrot.slane %v2650, %v2654
        %v2657 = vmul.f32 %v1878, %v2655
        %v2658 = vmul.f32 %v1879, %v2655
        %v2659 = vmul.f32 %v1880, %v2655
        %v2660 = vmul.f32 %v1881, %v2655
        %v2661 = vld [vmem:[%s10] sm:$0x1]
        %v2663 = vlaneseq
        %v2664 = vshrl.u32 %v2663, 7
        %v2665 = vsub.s32 0, %v2664
        %v2666 = vrot.slane %v2661, %v2665
        %v2668 = vadd.f32 %v2657, %v2666
        %v2669 = vadd.f32 %v2658, %v2666
        %v2670 = vadd.f32 %v2659, %v2666
        %v2671 = vadd.f32 %v2660, %v2666
        %v2672 = vmax.f32 %v2668, 0.0
        %v2673 = vmax.f32 %v2669, 0.0
        %v2674 = vmax.f32 %v2670, 0.0
        %v2675 = vmax.f32 %v2671, 0.0
        %v2676 = vpack.c.bf16 %v2673, %v2672
        %v2677 = vpack.c.bf16 %v2675, %v2674
        %v2679 = vshrl.u32 %v2676, 16
        %v2681 = vshll.u32 %v2676, 16
        %v2683 = vrot.slane %v2681, 1
        %v2684 = vor.u32 %v2679, %v2683
        %v2686 = vshll.u32 %v2677, 16
        %v2688 = vrot.slane %v2686, 1
        %v2689 = vsel %vm625, %v2684, %v2688
        %v2690 = vshrl.u32 %v2677, 16
        %v2692 = vor.u32 %v2690, %v2688
        %v2697 = vrot.slane %v2676, 1
        %v2698 = vrot.slane %v2677, 1
        %v2699 = vsel %vm652, %v2697, %v2698
        %v2702 = vrot.slane %v2679, 1
        %v2703 = vrot.slane %v2681, 2
        %v2704 = vor.u32 %v2702, %v2703
        %v2705 = vrot.slane %v2690, 1
        %v2706 = vrot.slane %v2686, 2
        %v2707 = vor.u32 %v2705, %v2706
        %v2708 = vsel %vm1403, %v2704, %v2707
        %v2711 = vrot.slane %v2676, 2
        %v2712 = vrot.slane %v2677, 2
        %v2713 = vsel %vm1955, %v2711, %v2712
        %v2716 = vld [vmem:[%s11] sm:$0xf]
        %v2717 = vld [vmem:[%s11 + $0x4] sm:$0xf]
        %v2718 = vld [vmem:[%s11 + $0x8] sm:$0xf]
        %v2719 = vld [vmem:[%s11 + $0xc] sm:$0xf]
        %v2720 = vld [vmem:[%s11 + $0x10] sm:$0xf]
        %v2721 = vld [vmem:[%s11 + $0x14] sm:$0xf]
        %v2722 = vld [vmem:[%s11 + $0x18] sm:$0xf]
        %v2723 = vld [vmem:[%s11 + $0x1c] sm:$0xf]
        %v2724 = vld [vmem:[%s11 + $0x20] sm:$0xf]
        %v2725 = vld [vmem:[%s11 + $0x24] sm:$0xf]
        %v2726 = vld [vmem:[%s11 + $0x28] sm:$0xf]
        %v2727 = vld [vmem:[%s11 + $0x2c] sm:$0xf]
        %v2728 = vld [vmem:[%s11 + $0x30] sm:$0xf]
        %v2729 = vld [vmem:[%s11 + $0x34] sm:$0xf]
        %v2730 = vld [vmem:[%s11 + $0x38] sm:$0xf]
        %v2731 = vld [vmem:[%s11 + $0x3c] sm:$0xf]
        %v2732 = vld [vmem:[%s11 + $0x40] sm:$0xf]
        %v2733 = vld [vmem:[%s11 + $0x44] sm:$0xf]
        %v2734 = vld [vmem:[%s11 + $0x48] sm:$0xf]
        %v2735 = vld [vmem:[%s11 + $0x4c] sm:$0xf]
        %v2736 = vld [vmem:[%s11 + $0x50] sm:$0xf]
        %v2737 = vld [vmem:[%s11 + $0x54] sm:$0xf]
        %v2738 = vld [vmem:[%s11 + $0x58] sm:$0xf]
        %v2739 = vld [vmem:[%s11 + $0x5c] sm:$0xf]
        %v2740 = vld [vmem:[%s11 + $0x60] sm:$0xf]
        %v2741 = vld [vmem:[%s11 + $0x64] sm:$0xf]
        %v2742 = vld [vmem:[%s11 + $0x68] sm:$0xf]
        %v2743 = vld [vmem:[%s11 + $0x6c] sm:$0xf]
        %v2744 = vld [vmem:[%s11 + $0x70] sm:$0xf]
        %v2745 = vld [vmem:[%s11 + $0x74] sm:$0xf]
        %v2746 = vld [vmem:[%s11 + $0x78] sm:$0xf]
        %v2747 = vld [vmem:[%s11 + $0x7c] sm:$0xf]
        %v2748 = vld [vmem:[%s11 + $0x80] sm:$0xf]
        %v2749 = vld [vmem:[%s11 + $0x84] sm:$0xf]
        %v2750 = vld [vmem:[%s11 + $0x88] sm:$0xf]
        %v2751 = vld [vmem:[%s11 + $0x8c] sm:$0xf]
        %v2752 = vld [vmem:[%s11 + $0x90] sm:$0xf]
        %v2753 = vld [vmem:[%s11 + $0x94] sm:$0xf]
        %v2754 = vld [vmem:[%s11 + $0x98] sm:$0xf]
        %v2755 = vld [vmem:[%s11 + $0x9c] sm:$0xf]
        %v2756 = vld [vmem:[%s11 + $0xa0] sm:$0xf]
        %v2757 = vld [vmem:[%s11 + $0xa4] sm:$0xf]
        %v2758 = vld [vmem:[%s11 + $0xa8] sm:$0xf]
        %v2759 = vld [vmem:[%s11 + $0xac] sm:$0xf]
        %v2760 = vld [vmem:[%s11 + $0xb0] sm:$0xf]
        %v2761 = vld [vmem:[%s11 + $0xb4] sm:$0xf]
        %v2762 = vld [vmem:[%s11 + $0xb8] sm:$0xf]
        %v2763 = vld [vmem:[%s11 + $0xbc] sm:$0xf]
        %v2764 = vld [vmem:[%s11 + $0xc0] sm:$0xf]
        %v2765 = vld [vmem:[%s11 + $0xc4] sm:$0xf]
        %v2766 = vld [vmem:[%s11 + $0xc8] sm:$0xf]
        %v2767 = vld [vmem:[%s11 + $0xcc] sm:$0xf]
        %v2768 = vld [vmem:[%s11 + $0xd0] sm:$0xf]
        %v2769 = vld [vmem:[%s11 + $0xd4] sm:$0xf]
        %v2770 = vld [vmem:[%s11 + $0xd8] sm:$0xf]
        %v2771 = vld [vmem:[%s11 + $0xdc] sm:$0xf]
        %v2772 = vld [vmem:[%s11 + $0xe0] sm:$0xf]
        %v2773 = vld [vmem:[%s11 + $0xe4] sm:$0xf]
        %v2774 = vld [vmem:[%s11 + $0xe8] sm:$0xf]
        %v2775 = vld [vmem:[%s11 + $0xec] sm:$0xf]
        %v2776 = vld [vmem:[%s11 + $0xf0] sm:$0xf]
        %v2777 = vld [vmem:[%s11 + $0xf4] sm:$0xf]
        %v2778 = vld [vmem:[%s11 + $0xf8] sm:$0xf]
        %v2779 = vld [vmem:[%s11 + $0xfc] sm:$0xf]
        %v2780 = vld [vmem:[%s11 + $0x100] sm:$0xf]
        %v2781 = vld [vmem:[%s11 + $0x104] sm:$0xf]
        %v2782 = vld [vmem:[%s11 + $0x108] sm:$0xf]
        %v2783 = vld [vmem:[%s11 + $0x10c] sm:$0xf]
        %v2784 = vld [vmem:[%s11 + $0x110] sm:$0xf]
        %v2785 = vld [vmem:[%s11 + $0x114] sm:$0xf]
        %v2786 = vld [vmem:[%s11 + $0x118] sm:$0xf]
        %v2787 = vld [vmem:[%s11 + $0x11c] sm:$0xf]
        %v2788 = vld [vmem:[%s11 + $0x120] sm:$0xf]
        %v2789 = vld [vmem:[%s11 + $0x124] sm:$0xf]
        %v2790 = vld [vmem:[%s11 + $0x128] sm:$0xf]
        %v2791 = vld [vmem:[%s11 + $0x12c] sm:$0xf]
        %v2792 = vld [vmem:[%s11 + $0x130] sm:$0xf]
        %v2793 = vld [vmem:[%s11 + $0x134] sm:$0xf]
        %v2794 = vld [vmem:[%s11 + $0x138] sm:$0xf]
        %v2795 = vld [vmem:[%s11 + $0x13c] sm:$0xf]
        %v2876 = vunpack.c.l.b16 %v2716
        %v2877 = vunpack.c.l.b16 %v2717
        %v2878 = vunpack.c.l.b16 %v2718
        %v2879 = vunpack.c.l.b16 %v2719
        %v2880 = vunpack.c.l.b16 %v2720
        %v2881 = vunpack.c.l.b16 %v2721
        %v2882 = vunpack.c.l.b16 %v2722
        %v2883 = vunpack.c.l.b16 %v2723
        %v2884 = vunpack.c.l.b16 %v2724
        %v2885 = vunpack.c.l.b16 %v2725
        %v2886 = vunpack.c.l.b16 %v2726
        %v2887 = vunpack.c.l.b16 %v2727
        %v2888 = vunpack.c.l.b16 %v2728
        %v2889 = vunpack.c.l.b16 %v2729
        %v2890 = vunpack.c.l.b16 %v2730
        %v2891 = vunpack.c.l.b16 %v2731
        %v2892 = vunpack.c.l.b16 %v2732
        %v2893 = vunpack.c.l.b16 %v2733
        %v2894 = vunpack.c.l.b16 %v2734
        %v2895 = vunpack.c.l.b16 %v2735
        %v2896 = vunpack.c.l.b16 %v2736
        %v2897 = vunpack.c.l.b16 %v2737
        %v2898 = vunpack.c.l.b16 %v2738
        %v2899 = vunpack.c.l.b16 %v2739
        %v2900 = vunpack.c.l.b16 %v2740
        %v2901 = vunpack.c.l.b16 %v2741
        %v2902 = vunpack.c.l.b16 %v2742
        %v2903 = vunpack.c.l.b16 %v2743
        %v2904 = vunpack.c.l.b16 %v2744
        %v2905 = vunpack.c.l.b16 %v2745
        %v2906 = vunpack.c.l.b16 %v2746
        %v2907 = vunpack.c.l.b16 %v2747
        %v2908 = vunpack.c.l.b16 %v2748
        %v2909 = vunpack.c.l.b16 %v2749
        %v2910 = vunpack.c.l.b16 %v2750
        %v2911 = vunpack.c.l.b16 %v2751
        %v2912 = vunpack.c.l.b16 %v2752
        %v2913 = vunpack.c.l.b16 %v2753
        %v2914 = vunpack.c.l.b16 %v2754
        %v2915 = vunpack.c.l.b16 %v2755
        %v2916 = vunpack.c.l.b16 %v2756
        %v2917 = vunpack.c.l.b16 %v2757
        %v2918 = vunpack.c.l.b16 %v2758
        %v2919 = vunpack.c.l.b16 %v2759
        %v2920 = vunpack.c.l.b16 %v2760
        %v2921 = vunpack.c.l.b16 %v2761
        %v2922 = vunpack.c.l.b16 %v2762
        %v2923 = vunpack.c.l.b16 %v2763
        %v2924 = vunpack.c.l.b16 %v2764
        %v2925 = vunpack.c.l.b16 %v2765
        %v2926 = vunpack.c.l.b16 %v2766
        %v2927 = vunpack.c.l.b16 %v2767
        %v2928 = vunpack.c.l.b16 %v2768
        %v2929 = vunpack.c.l.b16 %v2769
        %v2930 = vunpack.c.l.b16 %v2770
        %v2931 = vunpack.c.l.b16 %v2771
        %v2932 = vunpack.c.l.b16 %v2772
        %v2933 = vunpack.c.l.b16 %v2773
        %v2934 = vunpack.c.l.b16 %v2774
        %v2935 = vunpack.c.l.b16 %v2775
        %v2936 = vunpack.c.l.b16 %v2776
        %v2937 = vunpack.c.l.b16 %v2777
        %v2938 = vunpack.c.l.b16 %v2778
        %v2939 = vunpack.c.l.b16 %v2779
        %v2940 = vunpack.c.l.b16 %v2780
        %v2941 = vunpack.c.l.b16 %v2781
        %v2942 = vunpack.c.l.b16 %v2782
        %v2943 = vunpack.c.l.b16 %v2783
        %v2944 = vunpack.c.l.b16 %v2784
        %v2945 = vunpack.c.l.b16 %v2785
        %v2946 = vunpack.c.l.b16 %v2786
        %v2947 = vunpack.c.l.b16 %v2787
        %v2948 = vunpack.c.l.b16 %v2788
        %v2949 = vunpack.c.l.b16 %v2789
        %v2950 = vunpack.c.l.b16 %v2790
        %v2951 = vunpack.c.l.b16 %v2791
        %v2952 = vunpack.c.l.b16 %v2792
        %v2953 = vunpack.c.l.b16 %v2793
        %v2954 = vunpack.c.l.b16 %v2794
        %v2955 = vunpack.c.l.b16 %v2795
        %v2956 = vpack.c.b16 %v2877, %v2876
        %v2957 = vpack.c.b16 %v2879, %v2878
        %v2958 = vpack.c.b16 %v2881, %v2880
        %v2959 = vpack.c.b16 %v2883, %v2882
        %v2960 = vpack.c.b16 %v2885, %v2884
        %v2961 = vpack.c.b16 %v2887, %v2886
        %v2962 = vpack.c.b16 %v2889, %v2888
        %v2963 = vpack.c.b16 %v2891, %v2890
        %v2964 = vpack.c.b16 %v2893, %v2892
        %v2965 = vpack.c.b16 %v2895, %v2894
        %v2966 = vpack.c.b16 %v2897, %v2896
        %v2967 = vpack.c.b16 %v2899, %v2898
        %v2968 = vpack.c.b16 %v2901, %v2900
        %v2969 = vpack.c.b16 %v2903, %v2902
        %v2970 = vpack.c.b16 %v2905, %v2904
        %v2971 = vpack.c.b16 %v2907, %v2906
        %v2972 = vpack.c.b16 %v2909, %v2908
        %v2973 = vpack.c.b16 %v2911, %v2910
        %v2974 = vpack.c.b16 %v2913, %v2912
        %v2975 = vpack.c.b16 %v2915, %v2914
        %v2976 = vpack.c.b16 %v2917, %v2916
        %v2977 = vpack.c.b16 %v2919, %v2918
        %v2978 = vpack.c.b16 %v2921, %v2920
        %v2979 = vpack.c.b16 %v2923, %v2922
        %v2980 = vpack.c.b16 %v2925, %v2924
        %v2981 = vpack.c.b16 %v2927, %v2926
        %v2982 = vpack.c.b16 %v2929, %v2928
        %v2983 = vpack.c.b16 %v2931, %v2930
        %v2984 = vpack.c.b16 %v2933, %v2932
        %v2985 = vpack.c.b16 %v2935, %v2934
        %v2986 = vpack.c.b16 %v2937, %v2936
        %v2987 = vpack.c.b16 %v2939, %v2938
        %v2988 = vpack.c.b16 %v2941, %v2940
        %v2989 = vpack.c.b16 %v2943, %v2942
        %v2990 = vpack.c.b16 %v2945, %v2944
        %v2991 = vpack.c.b16 %v2947, %v2946
        %v2992 = vpack.c.b16 %v2949, %v2948
        %v2993 = vpack.c.b16 %v2951, %v2950
        %v2994 = vpack.c.b16 %v2953, %v2952
        %v2995 = vpack.c.b16 %v2955, %v2954
        %3036 = vmatprep.subr.bf16.mxu0 0
        %3037 = vmatpush1.bf16.msra.mxu0 %v2956
        %3038 = vmatprep.subr.bf16.mxu0 0
        %3039 = vmatpush1.bf16.msra.mxu0 %v2957
        %3040 = vmatprep.subr.bf16.mxu0 0
        %3041 = vmatpush1.bf16.msra.mxu0 %v2958
        %3042 = vmatprep.subr.bf16.mxu0 0
        %3043 = vmatpush1.bf16.msra.mxu0 %v2959
        %3044 = vmatprep.subr.bf16.mxu0 0
        %3045 = vmatpush1.bf16.msra.mxu0 %v2960
        %3046 = vmatprep.subr.bf16.mxu0 0
        %3047 = vmatpush1.bf16.msra.mxu0 %v2961
        %3048 = vmatprep.subr.bf16.mxu0 0
        %3049 = vmatpush1.bf16.msra.mxu0 %v2962
        %3050 = vmatprep.subr.bf16.mxu0 0
        %3051 = vmatpush1.bf16.msra.mxu0 %v2963
        %3052 = vmatprep.subr.bf16.mxu0 0
        %3053 = vmatpush1.bf16.msra.mxu0 %v2964
        %3054 = vmatprep.subr.bf16.mxu0 0
        %3055 = vmatpush1.bf16.msra.mxu0 %v2965
        %3056 = vmatprep.subr.bf16.mxu0 0
        %3057 = vmatpush1.bf16.msra.mxu0 %v2966
        %3058 = vmatprep.subr.bf16.mxu0 0
        %3059 = vmatpush1.bf16.msra.mxu0 %v2967
        %3060 = vmatprep.subr.bf16.mxu0 0
        %3061 = vmatpush1.bf16.msra.mxu0 %v2968
        %3062 = vmatprep.subr.bf16.mxu0 0
        %3063 = vmatpush1.bf16.msra.mxu0 %v2969
        %3064 = vmatprep.subr.bf16.mxu0 0
        %3065 = vmatpush1.bf16.msra.mxu0 %v2970
        %3066 = vmatprep.subr.bf16.mxu0 0
        %3067 = vmatpush1.bf16.msra.mxu0 %v2971
        %3068 = vmatprep.mubr.bf16.mxu0 %v2689
        %3069 = vmatmul.mubr.bf16.gmra.mrb[0].mxu0 %v2676
        %v3070 = vpop.f32.mrb[0].mxu0
        %v3071 = vadd.f32 0.0, %v3070
        %v3072 = vpop.f32.mrb[0].mxu0
        %v3073 = vpop.f32.mrb[0].mxu0
        %v3074 = vadd.f32 0.0, %v3073
        %v3075 = vpop.f32.mrb[0].mxu0
        %3076 = vmatprep.mubr.bf16.mxu0 %v2692
        %3077 = vmatmul.mubr.bf16.gmra.mrb[0].mxu0 %v2677
        %v3078 = vpop.f32.mrb[0].mxu0
        %v3079 = vadd.f32 0.0, %v3078
        %v3080 = vpop.f32.mrb[0].mxu0
        %v3081 = vpop.f32.mrb[0].mxu0
        %v3082 = vpop.f32.mrb[0].mxu0
        %3083 = vdwg.mxu0
        %3084 = vmatprep.subr.bf16.mxu0 0
        %3085 = vmatpush1.bf16.msra.mxu0 %v2972
        %3086 = vmatprep.subr.bf16.mxu0 0
        %3087 = vmatpush1.bf16.msra.mxu0 %v2973
        %3088 = vmatprep.subr.bf16.mxu0 0
        %3089 = vmatpush1.bf16.msra.mxu0 %v2974
        %3090 = vmatprep.subr.bf16.mxu0 0
        %3091 = vmatpush1.bf16.msra.mxu0 %v2975
        %3092 = vmatprep.subr.bf16.mxu0 0
        %3093 = vmatpush1.bf16.msra.mxu0 %v2976
        %3094 = vmatprep.subr.bf16.mxu0 0
        %3095 = vmatpush1.bf16.msra.mxu0 %v2977
        %3096 = vmatprep.subr.bf16.mxu0 0
        %3097 = vmatpush1.bf16.msra.mxu0 %v2978
        %3098 = vmatprep.subr.bf16.mxu0 0
        %3099 = vmatpush1.bf16.msra.mxu0 %v2979
        %3100 = vmatprep.subr.bf16.mxu0 0
        %3101 = vmatpush1.bf16.msra.mxu0 %v2980
        %3102 = vmatprep.subr.bf16.mxu0 0
        %3103 = vmatpush1.bf16.msra.mxu0 %v2981
        %3104 = vmatprep.subr.bf16.mxu0 0
        %3105 = vmatpush1.bf16.msra.mxu0 %v2982
        %3106 = vmatprep.subr.bf16.mxu0 0
        %3107 = vmatpush1.bf16.msra.mxu0 %v2983
        %3108 = vmatprep.subr.bf16.mxu0 0
        %3109 = vmatpush1.bf16.msra.mxu0 %v2984
        %3110 = vmatprep.subr.bf16.mxu0 0
        %3111 = vmatpush1.bf16.msra.mxu0 %v2985
        %3112 = vmatprep.subr.bf16.mxu0 0
        %3113 = vmatpush1.bf16.msra.mxu0 %v2986
        %3114 = vmatprep.subr.bf16.mxu0 0
        %3115 = vmatpush1.bf16.msra.mxu0 %v2987
        %3116 = vmatprep.mubr.bf16.mxu0 %v2708
        %3117 = vmatmul.mubr.bf16.gmra.mrb[0].mxu0 %v2699
        %v3118 = vpop.f32.mrb[0].mxu0
        %v3119 = vadd.f32 %v3071, %v3118
        %v3120 = vpop.f32.mrb[0].mxu0
        %v3121 = vpop.f32.mrb[0].mxu0
        %v3122 = vadd.f32 %v3074, %v3121
        %v3123 = vpop.f32.mrb[0].mxu0
        %3124 = vmatprep.mubr.bf16.mxu0 %v2707
        %3125 = vmatmul.mubr.bf16.gmra.mrb[0].mxu0 %v2698
        %v3126 = vpop.f32.mrb[0].mxu0
        %v3127 = vadd.f32 %v3079, %v3126
        %v3128 = vpop.f32.mrb[0].mxu0
        %v3129 = vpop.f32.mrb[0].mxu0
        %v3130 = vpop.f32.mrb[0].mxu0
        %3131 = vdwg.mxu0
        %3132 = vmatprep.subr.bf16.mxu0 0
        %3133 = vmatpush1.bf16.msra.mxu0 %v2988
        %3134 = vmatprep.subr.bf16.mxu0 0
        %3135 = vmatpush1.bf16.msra.mxu0 %v2989
        %3136 = vmatprep.subr.bf16.mxu0 0
        %3137 = vmatpush1.bf16.msra.mxu0 %v2990
        %3138 = vmatprep.subr.bf16.mxu0 0
        %3139 = vmatpush1.bf16.msra.mxu0 %v2991
        %3140 = vmatprep.subr.bf16.mxu0 0
        %3141 = vmatpush1.bf16.msra.mxu0 %v2992
        %3142 = vmatprep.subr.bf16.mxu0 0
        %3143 = vmatpush1.bf16.msra.mxu0 %v2993
        %3144 = vmatprep.subr.bf16.mxu0 0
        %3145 = vmatpush1.bf16.msra.mxu0 %v2994
        %3146 = vmatprep.subr.bf16.mxu0 0
        %3147 = vmatpush1.bf16.msra.mxu0 %v2995
        %3148 = vmatprep.subr.bf16.mxu0 0
        %3149 = vmatpush1.bf16.msra.mxu0 0
        %3150 = vmatprep.subr.bf16.mxu0 0
        %3151 = vmatpush1.bf16.msra.mxu0 0
        %3152 = vmatprep.subr.bf16.mxu0 0
        %3153 = vmatpush1.bf16.msra.mxu0 0
        %3154 = vmatprep.subr.bf16.mxu0 0
        %3155 = vmatpush1.bf16.msra.mxu0 0
        %3156 = vmatprep.subr.bf16.mxu0 0
        %3157 = vmatpush1.bf16.msra.mxu0 0
        %3158 = vmatprep.subr.bf16.mxu0 0
        %3159 = vmatpush1.bf16.msra.mxu0 0
        %3160 = vmatprep.subr.bf16.mxu0 0
        %3161 = vmatpush1.bf16.msra.mxu0 0
        %3162 = vmatprep.subr.bf16.mxu0 0
        %3163 = vmatpush1.bf16.msra.mxu0 0
        %3164 = vmatprep.mubr.bf16.mxu0 0
        %3165 = vmatmul.mubr.bf16.gmra.mrb[0].mxu0 %v2713
        %v3166 = vpop.f32.mrb[0].mxu0
        %v3167 = vadd.f32 %v3119, %v3166
        %v3168 = vpop.f32.mrb[0].mxu0
        %v3169 = vpop.f32.mrb[0].mxu0
        %v3170 = vadd.f32 %v3122, %v3169
        %v3171 = vpop.f32.mrb[0].mxu0
        %3172 = vmatprep.mubr.bf16.mxu0 0
        %3173 = vmatmul.mubr.bf16.gmra.mrb[0].mxu0 %v2712
        %v3174 = vpop.f32.mrb[0].mxu0
        %v3175 = vadd.f32 %v3127, %v3174
        %v3176 = vpop.f32.mrb[0].mxu0
        %v3177 = vpop.f32.mrb[0].mxu0
        %v3178 = vpop.f32.mrb[0].mxu0
        %3179 = vdwg.mxu0
        %v3180 = vld [vmem:[%s12] sm:$0x1]
        %v3182 = vlaneseq
        %v3183 = vshrl.u32 %v3182, 7
        %v3184 = vsub.s32 0, %v3183
        %v3185 = vrot.slane %v3180, %v3184
        %v3187 = vmul.f32 %v3167, %v3185
        %v3188 = vmul.f32 %v3170, %v3185
        %v3189 = vmul.f32 %v3175, %v3185
        %v3190 = vld [vmem:[%s13] sm:$0x1]
        %v3192 = vlaneseq
        %v3193 = vshrl.u32 %v3192, 7
        %v3194 = vsub.s32 0, %v3193
        %v3195 = vrot.slane %v3190, %v3194
        %v3197 = vadd.f32 %v3187, %v3195
        %v3198 = vadd.f32 %v3188, %v3195
        %v3199 = vadd.f32 %v3189, %v3195
        %v3200 = vmax.f32 %v3197, 0.0
        %v3201 = vmax.f32 %v3198, 0.0
        %v3202 = vmax.f32 %v3199, 0.0
        %3203 = vst [vmem:[%s596 + $0x8] sm:$0xff] %v3200
        %3204 = vst [vmem:[%s596 + $0x20] sm:$0xff] %v3201
        %3205 = vst [vmem:[%s596 + $0x38] sm:$0xff] %v3202
        %v3206 = vld [vmem:[%s14] sm:$0x1]
        %v3208 = vlaneseq
        %v3209 = vshrl.u32 %v3208, 7
        %v3210 = vsub.s32 0, %v3209
        %v3211 = vrot.slane %v3206, %v3210
        %v3213 = vmul.f32 %v1886, %v3211
        %v3214 = vmul.f32 %v1887, %v3211
        %v3215 = vmul.f32 %v1888, %v3211
        %v3216 = vmul.f32 %v1889, %v3211
        %v3217 = vld [vmem:[%s15] sm:$0x1]
        %v3219 = vlaneseq
        %v3220 = vshrl.u32 %v3219, 7
        %v3221 = vsub.s32 0, %v3220
        %v3222 = vrot.slane %v3217, %v3221
        %v3224 = vadd.f32 %v3213, %v3222
        %v3225 = vadd.f32 %v3214, %v3222
        %v3226 = vadd.f32 %v3215, %v3222
        %v3227 = vadd.f32 %v3216, %v3222
        %v3228 = vmax.f32 %v3224, 0.0
        %v3229 = vmax.f32 %v3225, 0.0
        %v3230 = vmax.f32 %v3226, 0.0
        %v3231 = vmax.f32 %v3227, 0.0
        %v3232 = vpack.c.bf16 %v3229, %v3228
        %v3233 = vpack.c.bf16 %v3231, %v3230
        %v3235 = vshrl.u32 %v3232, 16
        %v3237 = vshll.u32 %v3232, 16
        %v3239 = vrot.slane %v3237, 1
        %v3240 = vor.u32 %v3235, %v3239
        %v3242 = vshll.u32 %v3233, 16
        %v3244 = vrot.slane %v3242, 1
        %v3245 = vsel %vm625, %v3240, %v3244
        %v3246 = vshrl.u32 %v3233, 16
        %v3248 = vor.u32 %v3246, %v3244
        %v3253 = vrot.slane %v3232, 1
        %v3254 = vrot.slane %v3233, 1
        %v3255 = vsel %vm652, %v3253, %v3254
        %v3258 = vld [vmem:[%s16] sm:$0xf]
        %v3259 = vld [vmem:[%s16 + $0x4] sm:$0xf]
        %v3260 = vld [vmem:[%s16 + $0x8] sm:$0xf]
        %v3261 = vld [vmem:[%s16 + $0xc] sm:$0xf]
        %v3262 = vld [vmem:[%s16 + $0x10] sm:$0xf]
        %v3263 = vld [vmem:[%s16 + $0x14] sm:$0xf]
        %v3264 = vld [vmem:[%s16 + $0x18] sm:$0xf]
        %v3265 = vld [vmem:[%s16 + $0x1c] sm:$0xf]
        %v3266 = vld [vmem:[%s16 + $0x20] sm:$0xf]
        %v3267 = vld [vmem:[%s16 + $0x24] sm:$0xf]
        %v3268 = vld [vmem:[%s16 + $0x28] sm:$0xf]
        %v3269 = vld [vmem:[%s16 + $0x2c] sm:$0xf]
        %v3270 = vld [vmem:[%s16 + $0x30] sm:$0xf]
        %v3271 = vld [vmem:[%s16 + $0x34] sm:$0xf]
        %v3272 = vld [vmem:[%s16 + $0x38] sm:$0xf]
        %v3273 = vld [vmem:[%s16 + $0x3c] sm:$0xf]
        %v3274 = vld [vmem:[%s16 + $0x40] sm:$0xf]
        %v3275 = vld [vmem:[%s16 + $0x44] sm:$0xf]
        %v3276 = vld [vmem:[%s16 + $0x48] sm:$0xf]
        %v3277 = vld [vmem:[%s16 + $0x4c] sm:$0xf]
        %v3278 = vld [vmem:[%s16 + $0x50] sm:$0xf]
        %v3279 = vld [vmem:[%s16 + $0x54] sm:$0xf]
        %v3280 = vld [vmem:[%s16 + $0x58] sm:$0xf]
        %v3281 = vld [vmem:[%s16 + $0x5c] sm:$0xf]
        %v3282 = vld [vmem:[%s16 + $0x60] sm:$0xf]
        %v3283 = vld [vmem:[%s16 + $0x64] sm:$0xf]
        %v3284 = vld [vmem:[%s16 + $0x68] sm:$0xf]
        %v3285 = vld [vmem:[%s16 + $0x6c] sm:$0xf]
        %v3286 = vld [vmem:[%s16 + $0x70] sm:$0xf]
        %v3287 = vld [vmem:[%s16 + $0x74] sm:$0xf]
        %v3288 = vld [vmem:[%s16 + $0x78] sm:$0xf]
        %v3289 = vld [vmem:[%s16 + $0x7c] sm:$0xf]
        %v3290 = vld [vmem:[%s16 + $0x80] sm:$0xf]
        %v3291 = vld [vmem:[%s16 + $0x84] sm:$0xf]
        %v3292 = vld [vmem:[%s16 + $0x88] sm:$0xf]
        %v3293 = vld [vmem:[%s16 + $0x8c] sm:$0xf]
        %v3294 = vld [vmem:[%s16 + $0x90] sm:$0xf]
        %v3295 = vld [vmem:[%s16 + $0x94] sm:$0xf]
        %v3296 = vld [vmem:[%s16 + $0x98] sm:$0xf]
        %v3297 = vld [vmem:[%s16 + $0x9c] sm:$0xf]
        %v3298 = vld [vmem:[%s16 + $0xa0] sm:$0xf]
        %v3299 = vld [vmem:[%s16 + $0xa4] sm:$0xf]
        %v3300 = vld [vmem:[%s16 + $0xa8] sm:$0xf]
        %v3301 = vld [vmem:[%s16 + $0xac] sm:$0xf]
        %v3302 = vld [vmem:[%s16 + $0xb0] sm:$0xf]
        %v3303 = vld [vmem:[%s16 + $0xb4] sm:$0xf]
        %v3304 = vld [vmem:[%s16 + $0xb8] sm:$0xf]
        %v3305 = vld [vmem:[%s16 + $0xbc] sm:$0xf]
        %v3354 = vunpack.c.l.b16 %v3258
        %v3355 = vunpack.c.l.b16 %v3259
        %v3356 = vunpack.c.l.b16 %v3260
        %v3357 = vunpack.c.l.b16 %v3261
        %v3358 = vunpack.c.l.b16 %v3262
        %v3359 = vunpack.c.l.b16 %v3263
        %v3360 = vunpack.c.l.b16 %v3264
        %v3361 = vunpack.c.l.b16 %v3265
        %v3362 = vunpack.c.l.b16 %v3266
        %v3363 = vunpack.c.l.b16 %v3267
        %v3364 = vunpack.c.l.b16 %v3268
        %v3365 = vunpack.c.l.b16 %v3269
        %v3366 = vunpack.c.l.b16 %v3270
        %v3367 = vunpack.c.l.b16 %v3271
        %v3368 = vunpack.c.l.b16 %v3272
        %v3369 = vunpack.c.l.b16 %v3273
        %v3370 = vunpack.c.l.b16 %v3274
        %v3371 = vunpack.c.l.b16 %v3275
        %v3372 = vunpack.c.l.b16 %v3276
        %v3373 = vunpack.c.l.b16 %v3277
        %v3374 = vunpack.c.l.b16 %v3278
        %v3375 = vunpack.c.l.b16 %v3279
        %v3376 = vunpack.c.l.b16 %v3280
        %v3377 = vunpack.c.l.b16 %v3281
        %v3378 = vunpack.c.l.b16 %v3282
        %v3379 = vunpack.c.l.b16 %v3283
        %v3380 = vunpack.c.l.b16 %v3284
        %v3381 = vunpack.c.l.b16 %v3285
        %v3382 = vunpack.c.l.b16 %v3286
        %v3383 = vunpack.c.l.b16 %v3287
        %v3384 = vunpack.c.l.b16 %v3288
        %v3385 = vunpack.c.l.b16 %v3289
        %v3386 = vunpack.c.l.b16 %v3290
        %v3387 = vunpack.c.l.b16 %v3291
        %v3388 = vunpack.c.l.b16 %v3292
        %v3389 = vunpack.c.l.b16 %v3293
        %v3390 = vunpack.c.l.b16 %v3294
        %v3391 = vunpack.c.l.b16 %v3295
        %v3392 = vunpack.c.l.b16 %v3296
        %v3393 = vunpack.c.l.b16 %v3297
        %v3394 = vunpack.c.l.b16 %v3298
        %v3395 = vunpack.c.l.b16 %v3299
        %v3396 = vunpack.c.l.b16 %v3300
        %v3397 = vunpack.c.l.b16 %v3301
        %v3398 = vunpack.c.l.b16 %v3302
        %v3399 = vunpack.c.l.b16 %v3303
        %v3400 = vunpack.c.l.b16 %v3304
        %v3401 = vunpack.c.l.b16 %v3305
        %v3402 = vpack.c.b16 %v3355, %v3354
        %v3403 = vpack.c.b16 %v3357, %v3356
        %v3404 = vpack.c.b16 %v3359, %v3358
        %v3405 = vpack.c.b16 %v3361, %v3360
        %v3406 = vpack.c.b16 %v3363, %v3362
        %v3407 = vpack.c.b16 %v3365, %v3364
        %v3408 = vpack.c.b16 %v3367, %v3366
        %v3409 = vpack.c.b16 %v3369, %v3368
        %v3410 = vpack.c.b16 %v3371, %v3370
        %v3411 = vpack.c.b16 %v3373, %v3372
        %v3412 = vpack.c.b16 %v3375, %v3374
        %v3413 = vpack.c.b16 %v3377, %v3376
        %v3414 = vpack.c.b16 %v3379, %v3378
        %v3415 = vpack.c.b16 %v3381, %v3380
        %v3416 = vpack.c.b16 %v3383, %v3382
        %v3417 = vpack.c.b16 %v3385, %v3384
        %v3418 = vpack.c.b16 %v3387, %v3386
        %v3419 = vpack.c.b16 %v3389, %v3388
        %v3420 = vpack.c.b16 %v3391, %v3390
        %v3421 = vpack.c.b16 %v3393, %v3392
        %v3422 = vpack.c.b16 %v3395, %v3394
        %v3423 = vpack.c.b16 %v3397, %v3396
        %v3424 = vpack.c.b16 %v3399, %v3398
        %v3425 = vpack.c.b16 %v3401, %v3400
        %3450 = vmatprep.subr.bf16.mxu0 0
        %3451 = vmatpush1.bf16.msra.mxu0 %v3402
        %3452 = vmatprep.subr.bf16.mxu0 0
        %3453 = vmatpush1.bf16.msra.mxu0 %v3403
        %3454 = vmatprep.subr.bf16.mxu0 0
        %3455 = vmatpush1.bf16.msra.mxu0 %v3404
        %3456 = vmatprep.subr.bf16.mxu0 0
        %3457 = vmatpush1.bf16.msra.mxu0 %v3405
        %3458 = vmatprep.subr.bf16.mxu0 0
        %3459 = vmatpush1.bf16.msra.mxu0 %v3406
        %3460 = vmatprep.subr.bf16.mxu0 0
        %3461 = vmatpush1.bf16.msra.mxu0 %v3407
        %3462 = vmatprep.subr.bf16.mxu0 0
        %3463 = vmatpush1.bf16.msra.mxu0 %v3408
        %3464 = vmatprep.subr.bf16.mxu0 0
        %3465 = vmatpush1.bf16.msra.mxu0 %v3409
        %3466 = vmatprep.subr.bf16.mxu0 0
        %3467 = vmatpush1.bf16.msra.mxu0 %v3410
        %3468 = vmatprep.subr.bf16.mxu0 0
        %3469 = vmatpush1.bf16.msra.mxu0 %v3411
        %3470 = vmatprep.subr.bf16.mxu0 0
        %3471 = vmatpush1.bf16.msra.mxu0 %v3412
        %3472 = vmatprep.subr.bf16.mxu0 0
        %3473 = vmatpush1.bf16.msra.mxu0 %v3413
        %3474 = vmatprep.subr.bf16.mxu0 0
        %3475 = vmatpush1.bf16.msra.mxu0 %v3414
        %3476 = vmatprep.subr.bf16.mxu0 0
        %3477 = vmatpush1.bf16.msra.mxu0 %v3415
        %3478 = vmatprep.subr.bf16.mxu0 0
        %3479 = vmatpush1.bf16.msra.mxu0 %v3416
        %3480 = vmatprep.subr.bf16.mxu0 0
        %3481 = vmatpush1.bf16.msra.mxu0 %v3417
        %3482 = vmatprep.mubr.bf16.mxu0 %v3245
        %3483 = vmatmul.mubr.bf16.gmra.mrb[0].mxu0 %v3232
        %v3484 = vpop.f32.mrb[0].mxu0
        %v3485 = vadd.f32 0.0, %v3484
        %v3486 = vpop.f32.mrb[0].mxu0
        %v3487 = vpop.f32.mrb[0].mxu0
        %v3488 = vadd.f32 0.0, %v3487
        %v3489 = vpop.f32.mrb[0].mxu0
        %3490 = vmatprep.mubr.bf16.mxu0 %v3248
        %3491 = vmatmul.mubr.bf16.gmra.mrb[0].mxu0 %v3233
        %v3492 = vpop.f32.mrb[0].mxu0
        %v3493 = vadd.f32 0.0, %v3492
        %v3494 = vpop.f32.mrb[0].mxu0
        %v3495 = vpop.f32.mrb[0].mxu0
        %v3496 = vpop.f32.mrb[0].mxu0
        %3497 = vdwg.mxu0
        %3498 = vmatprep.subr.bf16.mxu0 0
        %3499 = vmatpush1.bf16.msra.mxu0 %v3418
        %3500 = vmatprep.subr.bf16.mxu0 0
        %3501 = vmatpush1.bf16.msra.mxu0 %v3419
        %3502 = vmatprep.subr.bf16.mxu0 0
        %3503 = vmatpush1.bf16.msra.mxu0 %v3420
        %3504 = vmatprep.subr.bf16.mxu0 0
        %3505 = vmatpush1.bf16.msra.mxu0 %v3421
        %3506 = vmatprep.subr.bf16.mxu0 0
        %3507 = vmatpush1.bf16.msra.mxu0 %v3422
        %3508 = vmatprep.subr.bf16.mxu0 0
        %3509 = vmatpush1.bf16.msra.mxu0 %v3423
        %3510 = vmatprep.subr.bf16.mxu0 0
        %3511 = vmatpush1.bf16.msra.mxu0 %v3424
        %3512 = vmatprep.subr.bf16.mxu0 0
        %3513 = vmatpush1.bf16.msra.mxu0 %v3425
        %3514 = vmatprep.subr.bf16.mxu0 0
        %3515 = vmatpush1.bf16.msra.mxu0 0
        %3516 = vmatprep.subr.bf16.mxu0 0
        %3517 = vmatpush1.bf16.msra.mxu0 0
        %3518 = vmatprep.subr.bf16.mxu0 0
        %3519 = vmatpush1.bf16.msra.mxu0 0
        %3520 = vmatprep.subr.bf16.mxu0 0
        %3521 = vmatpush1.bf16.msra.mxu0 0
        %3522 = vmatprep.subr.bf16.mxu0 0
        %3523 = vmatpush1.bf16.msra.mxu0 0
        %3524 = vmatprep.subr.bf16.mxu0 0
        %3525 = vmatpush1.bf16.msra.mxu0 0
        %3526 = vmatprep.subr.bf16.mxu0 0
        %3527 = vmatpush1.bf16.msra.mxu0 0
        %3528 = vmatprep.subr.bf16.mxu0 0
        %3529 = vmatpush1.bf16.msra.mxu0 0
        %3530 = vmatprep.mubr.bf16.mxu0 0
        %3531 = vmatmul.mubr.bf16.gmra.mrb[0].mxu0 %v3255
        %v3532 = vpop.f32.mrb[0].mxu0
        %v3533 = vadd.f32 %v3485, %v3532
        %v3534 = vpop.f32.mrb[0].mxu0
        %v3535 = vpop.f32.mrb[0].mxu0
        %v3536 = vadd.f32 %v3488, %v3535
        %v3537 = vpop.f32.mrb[0].mxu0
        %3538 = vmatprep.mubr.bf16.mxu0 0
        %3539 = vmatmul.mubr.bf16.gmra.mrb[0].mxu0 %v3254
        %v3540 = vpop.f32.mrb[0].mxu0
        %v3541 = vadd.f32 %v3493, %v3540
        %v3542 = vpop.f32.mrb[0].mxu0
        %v3543 = vpop.f32.mrb[0].mxu0
        %v3544 = vpop.f32.mrb[0].mxu0
        %3545 = vdwg.mxu0
        %v3546 = vld [vmem:[%s17] sm:$0x1]
        %v3548 = vlaneseq
        %v3549 = vshrl.u32 %v3548, 7
        %v3550 = vsub.s32 0, %v3549
        %v3551 = vrot.slane %v3546, %v3550
        %v3553 = vmul.f32 %v3533, %v3551
        %v3554 = vmul.f32 %v3536, %v3551
        %v3555 = vmul.f32 %v3541, %v3551
        %v3556 = vld [vmem:[%s18] sm:$0x1]
        %v3558 = vlaneseq
        %v3559 = vshrl.u32 %v3558, 7
        %v3560 = vsub.s32 0, %v3559
        %v3561 = vrot.slane %v3556, %v3560
        %v3563 = vadd.f32 %v3553, %v3561
        %v3564 = vadd.f32 %v3554, %v3561
        %v3565 = vadd.f32 %v3555, %v3561
        %v3566 = vmax.f32 %v3563, 0.0
        %v3567 = vmax.f32 %v3564, 0.0
        %v3568 = vmax.f32 %v3565, 0.0
        %3569 = vst [vmem:[%s596 + $0x10] sm:$0xff] %v3566
        %3570 = vst [vmem:[%s596 + $0x28] sm:$0xff] %v3567
        %3571 = vst [vmem:[%s596 + $0x40] sm:$0xff] %v3568
        %s3572 = sand.u32 %s445, 1
        %s3573 = scalar_lea.sflag [#allocation3], %s3572
        %s3574 = sand.u32 %s445, 1
        %s3575 = smul.addr %s3574, 72
        %s3576 = scalar_lea.vmem [#allocation2], %s3575
        // Predicated region
        $region97: #{encoder2_forward.1} parent=95 // pred_check
          %p3577 = pneg %p455
        $region98: #{encoder2_forward.1} parent=95 // pred_check_branch
          %3579 = sbr.rel (%p3577) target = $region100
        $region99: #{encoder2_forward.1} parent=95 // pred_region
          %s3581 = ssub.s32 1152, 1152
          %3582 = vsyncadd %s3573, %s3581
          %s3583 = smul.addr %s33, 9
          %s3584 = smul.addr %s3583, 128
          %s3585 = scalar_lea.hbm %s19, %s3584
          %s3586 = sshll.u32 %s3576, 4
          %s3587 = int_to_ptr.vmem [resolvable:$true] %s3586
          %3592 = dma.vmem_to_hbm [thread:$0]  %s3587, 1152, %s3585, %s3573, 384, 384, 24
        $region100: #{encoder2_forward.1} parent=95 // pred_fallthru
          _
      $region96: #{encoder2_forward.1} parent=5 // pred_fallthru
        _
      %p3593 = scmp.le.s32.totalorder 2, %s28
      // Predicated region
      $region101: #{encoder2_forward.1} parent=5 // pred_check
        %p3594 = pneg %p3593
      $region102: #{encoder2_forward.1} parent=5 // pred_check_branch
        %3596 = sbr.rel (%p3594) target = $region104
      $region103: #{encoder2_forward.1} parent=5 // pred_region
        %s3597 = ssub.s32 %s28, 2
        // Predicated region
        $region105: #{encoder2_forward.1} parent=103 // pred_check
          %p3598 = pneg %p461
        $region106: #{encoder2_forward.1} parent=103 // pred_check_branch
          %3600 = sbr.rel (%p3598) target = $region108
        $region107: #{encoder2_forward.1} parent=103 // pred_region
          %s3601 = sand.u32 %s446, 1
          %s3602 = scalar_lea.sflag [#allocation3], %s3601
          %s3603 = sand.u32 %s446, 1
          %s3604 = smul.addr %s3603, 72
          %s3605 = scalar_lea.vmem [#allocation2], %s3604
          %3606 = dma.done %s3602, 1152
        $region108: #{encoder2_forward.1} parent=103 // pred_fallthru
          _
      $region104: #{encoder2_forward.1} parent=5 // pred_fallthru
        _
    $region6: #{encoder2_forward.1} parent=1 // loop_footer
      %s32 = sadd.s32 1, %s28
    $region7: #{encoder2_forward.1} parent=1 // loop_footer_branch
      %27 = sbr.rel target = $region3
    $region8: #{encoder2_forward.1} parent=1 // loop_exit
      _
    %3607 = vsyncpa [#allocation3], 1
    %s3608 = scalar_lea.sflag [#allocation3], 1
    %3609 = vsyncpa %s3608, 1

</llo_original>
